<compile_context>
chip_gen: v7x
topology: tpu7x:2x2x1
jax: 0.10.0
libtpu: 0.0.40
codegen_flags: <defaults>
</compile_context>

<pallas_src>
import jax
import jax.numpy as jnp
from jax import lax
from jax.experimental import pallas as pl
from jax.experimental.pallas import tpu as pltpu

EPS = 1e-5
EXPANSION = 4


# ----------------------------------------------------------------------------
# Helpers
# ----------------------------------------------------------------------------
def _fold_bn(gamma, beta, mean, var):
    scale = gamma / jnp.sqrt(var + EPS)
    bias = beta - mean * scale
    return scale.astype(jnp.float32), bias.astype(jnp.float32)


def _pick_tile_h(h_out, per_row_bytes, budget_bytes=4 << 20):
    """Largest divisor of h_out whose band working set fits the VMEM budget,
    while keeping >=2 bands per image when the image is tall enough."""
    cap = max(h_out // 2, 8)
    best = 1
    for d in range(1, h_out + 1):
        if h_out % d == 0 and d <= cap and d * per_row_bytes <= budget_bytes:
            best = d
    return best


# ----------------------------------------------------------------------------
# Fused kernel (one grid step == one (image, output-row-band))
# ----------------------------------------------------------------------------
def _make_bottleneck_kernel(*, H, W, W_out, TH, cin, ch, cout, stride, has_proj):
    s = stride
    rows_in = s * TH + 2          # input rows per band incl. 1-row halo each side
    n_rows = TH * W               # band pixels at full column width

    def kernel(xt_ref, xc_ref, xb_ref, w1_ref, b1_ref, w2_ref, b2_ref,
               w3_ref, b3_ref, *rest):
        rest = list(rest)
        if has_proj:
            ws_ref, bs_ref = rest[0], rest[1]
            rest = rest[2:]
        o_ref = rest[0]
        out_buf = rest[1] if s > 1 else None

        rb = pl.program_id(1)
        mdt = w2_ref.dtype                        # MXU operand dtype (f32 / bf16)
        core = xc_ref[0]                          # (s*TH, W, cin)

        # ---- conv1 (1x1) + bn1 + relu on the haloed band (stays in VMEM) ----
        xfull = jnp.concatenate([xt_ref[0], core, xb_ref[0]], axis=0)
        a1 = jnp.dot(xfull.reshape(rows_in * W, cin), w1_ref[...],
                     preferred_element_type=jnp.float32)
        a1 = jnp.maximum(a1 + b1_ref[...], 0.0).reshape(rows_in, W, ch)

        # Zero halo rows outside the image: conv2's zero padding lives in the
        # post-bn1-relu domain, where the pad value is exactly 0.
        row_id = lax.broadcasted_iota(jnp.int32, (rows_in, 1, 1), 0)
        top_ok = rb > 0
        bot_ok = (rb + 1) * TH * s < H
        valid = jnp.logical_and(jnp.logical_or(row_id > 0, top_ok),
                                jnp.logical_or(row_id < rows_in - 1, bot_ok))
        a1 = (a1 * valid.astype(a1.dtype)).astype(mdt)

        # ---- conv2 (3x3, pad=1, row-stride s) + bn2 + relu -------------------
        if s == 1:
            def rows_for(dh):                     # (TH, W, ch)
                return a1[dh:dh + TH]
        else:                                     # s == 2: rows_in = 2*TH + 2
            a1_eo = a1.reshape(TH + 1, 2, W, ch)
            even, odd = a1_eo[:, 0], a1_eo[:, 1]

            def rows_for(dh):
                if dh == 0:
                    return even[:TH]
                if dh == 1:
                    return odd[:TH]
                return even[1:TH + 1]

        col = lax.broadcasted_iota(jnp.int32, (n_rows, 1), 0) % W
        acc = jnp.zeros((n_rows, ch), jnp.float32)
        for dh in range(3):
            r2 = rows_for(dh).reshape(n_rows, ch)
            for dw in range(3):
                if dw == 1:
                    patch = r2
                else:
                    # Column shift on the XLU; the wrapped entries are exactly
                    # the out-of-image columns -> zero them (left/right pad).
                    rolled = pltpu.roll(r2, (1 - dw) % n_rows, axis=0)
                    edge = 0 if dw == 0 else W - 1
                    patch = jnp.where(col != edge, rolled, jnp.zeros_like(rolled))
                acc = acc + jnp.dot(patch, w2_ref[dh * 3 + dw],
                                    preferred_element_type=jnp.float32)
        a2 = jnp.maximum(acc + b2_ref[...], 0.0).astype(mdt)     # (TH*W, ch)

        # ---- conv3 (1x1) + bn3 + shortcut + final relu -----------------------
        out = jnp.dot(a2, w3_ref[...], preferred_element_type=jnp.float32)
        out = out + b3_ref[...]

        if has_proj:
            # Fused projection shortcut (row stride via a cheap major-dim
            # reshape; column stride applied together with the main path).
            xs = core if s == 1 else core.reshape(TH, s, W, cin)[:, 0]
            out = out + jnp.dot(xs.reshape(n_rows, cin), ws_ref[...],
                                preferred_element_type=jnp.float32) + bs_ref[...]
        else:
            out = out + core.reshape(n_rows, cin).astype(jnp.float32)

        out = jnp.maximum(out, 0.0)

        if s == 1:
            o_ref[...] = out.reshape(1, TH, W_out, cout).astype(o_ref.dtype)
        else:
            # Column stride: keep full-width rows in VMEM and emit only the
            # strided columns with one strided read (no extra HBM traffic).
            out_buf[...] = out
            sub = out_buf[pl.ds(0, TH * W_out, stride=s)]
            o_ref[...] = sub.reshape(1, TH, W_out, cout).astype(o_ref.dtype)

    return kernel


# ----------------------------------------------------------------------------
# Public forward (NCHW in / NCHW out)
# ----------------------------------------------------------------------------
def bottleneck_forward(x_nchw, p, *, mxu_dtype=None, tile_h=None):
    x = jnp.transpose(x_nchw, (0, 2, 3, 1))            # NHWC: channels -> lanes
    N, H, W, cin = x.shape
    stride = int(p["stride"])
    assert stride in (1, 2), "ResNet BottleNeck uses stride 1 or 2"
    assert H % stride == 0 and W % stride == 0
    ch = p["w1"].shape[1]
    cout = p["w3"].shape[1]
    has_proj = bool(p["has_shortcut"])
    if not has_proj:
        assert stride == 1 and cin == cout
    H_out, W_out = H // stride, W // stride
    io_dtype = x_nchw.dtype

    # Fold BN (inference form) into conv weights + per-channel bias.
    s1, b1 = _fold_bn(*p["bn1"])
    s2, b2 = _fold_bn(*p["bn2"])
    s3, b3 = _fold_bn(*p["bn3"])
    w1f = p["w1"] * s1[None, :]
    w2f = (p["w2"] * s2[None, None, None, :]).reshape(9, ch, ch)
    w3f = p["w3"] * s3[None, :]
    if has_proj:
        ss, bs = _fold_bn(*p["bns"])
        wsf = p["ws"] * ss[None, :]

    # Optional reduced-precision MXU operands (bf16 on v6e/v7x); accumulation
    # and the bias/relu epilogues stay in f32.
    if mxu_dtype is not None:
        x = x.astype(mxu_dtype)
        w1f = w1f.astype(mxu_dtype)
        w2f = w2f.astype(mxu_dtype)
        w3f = w3f.astype(mxu_dtype)
        if has_proj:
            wsf = wsf.astype(mxu_dtype)

    # Row-band height & VMEM budget (v7x only has 64 MiB physical VMEM).
    act_itm = x.dtype.itemsize
    per_row = int(stride * W * cin * act_itm * 2            # core block (x2 buffers)
                  + W * ch * (3 * 4 + act_itm)               # a1 / patches / acc
                  + W * ch * 4 + W * cout * 4                # a2, conv3 accum
                  + W_out * cout * io_dtype.itemsize * 2     # output block (x2)
                  + (W * cout * 4 if stride > 1 else 0))     # column-stride scratch
    if tile_h is None:
        tile_h = _pick_tile_h(H_out, per_row)
    TH = int(tile_h)
    assert H_out % TH == 0, "tile_h must divide the output height"
    n_bands = H_out // TH
    core_rows = TH * stride

    w_itm = w1f.dtype.itemsize
    fixed = int((cin * ch + 9 * ch * ch + ch * cout
                 + (cin * cout if has_proj else 0)) * w_itm * 2
                + (2 * ch + 2 * cout) * 4 * 2
                + 4 * W * cin * act_itm)                     # halo blocks
    vmem_limit = int(min(64 << 20, max(32 << 20, 2 * (TH * per_row + fixed))))

    kernel = _make_bottleneck_kernel(H=H, W=W, W_out=W_out, TH=TH, cin=cin,
                                     ch=ch, cout=cout, stride=stride,
                                     has_proj=has_proj)

    def top_map(n, rb):      # 1-row halo above the band (clamped; masked in-kernel)
        return (n, jnp.maximum(rb * core_rows - 1, 0), 0, 0)

    def bot_map(n, rb):      # 1-row halo below the band (clamped; masked in-kernel)
        return (n, jnp.minimum((rb + 1) * core_rows, H - 1), 0, 0)

    in_specs = [
        pl.BlockSpec((1, 1, W, cin), top_map),
        pl.BlockSpec((1, core_rows, W, cin), lambda n, rb: (n, rb, 0, 0)),
        pl.BlockSpec((1, 1, W, cin), bot_map),
        pl.BlockSpec((cin, ch), lambda n, rb: (0, 0)),            # w1 (bn1 folded)
        pl.BlockSpec((1, ch), lambda n, rb: (0, 0)),              # b1
        pl.BlockSpec((9, ch, ch), lambda n, rb: (0, 0, 0)),       # w2 (bn2 folded)
        pl.BlockSpec((1, ch), lambda n, rb: (0, 0)),              # b2
        pl.BlockSpec((ch, cout), lambda n, rb: (0, 0)),           # w3 (bn3 folded)
        pl.BlockSpec((1, cout), lambda n, rb: (0, 0)),            # b3
    ]
    args = [x, x, x, w1f, b1.reshape(1, ch), w2f, b2.reshape(1, ch),
            w3f, b3.reshape(1, cout)]
    if has_proj:
        in_specs += [pl.BlockSpec((cin, cout), lambda n, rb: (0, 0)),   # ws
                     pl.BlockSpec((1, cout), lambda n, rb: (0, 0))]     # bs
        args += [wsf, bs.reshape(1, cout)]

    scratch_shapes = []
    if stride > 1:
        scratch_shapes.append(pltpu.VMEM((TH * W, cout), jnp.float32))

    flops = 2 * N * (H * W * cin * ch + H_out * W * 9 * ch * ch
                     + H_out * W * ch * cout)
    if has_proj:
        flops += 2 * N * H_out * W * cin * cout
    bytes_accessed = int(x.size * act_itm
                         + N * H_out * W_out * cout * io_dtype.itemsize
                         + (w1f.size + w2f.size + w3f.size) * w_itm
                         + (int(wsf.size) * w_itm if has_proj else 0))

    out = pl.pallas_call(
        kernel,
        out_shape=jax.ShapeDtypeStruct((N, H_out, W_out, cout), io_dtype),
        grid=(N, n_bands),
        in_specs=in_specs,
        out_specs=pl.BlockSpec((1, TH, W_out, cout), lambda n, rb: (n, rb, 0, 0)),
        scratch_shapes=scratch_shapes,
        compiler_params=pltpu.CompilerParams(
            dimension_semantics=("parallel", "parallel"),
            vmem_limit_bytes=vmem_limit),
        cost_estimate=pl.CostEstimate(flops=int(flops), transcendentals=0,
                                      bytes_accessed=bytes_accessed),
    )(*args)
    return jnp.transpose(out, (0, 3, 1, 2))                  # back to NCHW


# ----------------------------------------------------------------------------
# Parameters (deterministic init) and a pure-JAX reference for verification
# ----------------------------------------------------------------------------
def init_bottleneck_params(key, in_ch, ch, stride=1):
    out_ch = EXPANSION * ch
    ks = jax.random.split(key, 16)

    def bn_params(k, c):
        k1, k2, k3, k4 = jax.random.split(k, 4)
        gamma = 0.5 + jax.random.uniform(k1, (c,), jnp.float32)
        beta = 0.1 * jax.random.normal(k2, (c,), jnp.float32)
        mean = 0.1 * jax.random.normal(k3, (c,), jnp.float32)
        var = 0.5 + jax.random.uniform(k4, (c,), jnp.float32)
        return gamma, beta, mean, var

    p = {
        "w1": 0.1 * jax.random.normal(ks[0], (in_ch, ch), jnp.float32),      # 1x1
        "bn1": bn_params(ks[1], ch),
        "w2": 0.1 * jax.random.normal(ks[2], (3, 3, ch, ch), jnp.float32),   # 3x3 HWIO
        "bn2": bn_params(ks[3], ch),
        "w3": 0.1 * jax.random.normal(ks[4], (ch, out_ch), jnp.float32),     # 1x1
        "bn3": bn_params(ks[5], out_ch),
        "stride": stride,
        "has_shortcut": (stride != 1 or in_ch != out_ch),
    }
    if p["has_shortcut"]:
        p["ws"] = 0.1 * jax.random.normal(ks[6], (in_ch, out_ch), jnp.float32)
        p["bns"] = bn_params(ks[7], out_ch)
    return p


def bottleneck_reference(x_nchw, p):
    x = jnp.transpose(x_nchw, (0, 2, 3, 1))
    stride = p["stride"]

    def conv(x, w_hwio, s, pad):
        return lax.conv_general_dilated(
            x, w_hwio, window_strides=(s, s), padding=pad,
            dimension_numbers=("NHWC", "HWIO", "NHWC"))

    def bn(x, params):
        g, b, m, v = params
        return (x - m) / jnp.sqrt(v + EPS) * g + b

    cin, ch = p["w1"].shape
    out = jax.nn.relu(bn(conv(x, p["w1"].reshape(1, 1, cin, ch), 1, "VALID"), p["bn1"]))
    out = jax.nn.relu(bn(conv(out, p["w2"], stride, [(1, 1), (1, 1)]), p["bn2"]))
    out = bn(conv(out, p["w3"].reshape(1, 1, ch, -1), 1, "VALID"), p["bn3"])
    if p["has_shortcut"]:
        sc = bn(conv(x, p["ws"].reshape(1, 1, cin, -1), stride, "VALID"), p["bns"])
    else:
        sc = x
    out = jax.nn.relu(out + sc)
    return jnp.transpose(out, (0, 3, 1, 2))


if __name__ == "__main__":
    key = jax.random.PRNGKey(0)
    configs = [
        # (N, in_ch, H, W, ch, stride, mxu_dtype, tol)
        (2, 16, 16, 16, 8, 1, None, 1e-3),           # projection shortcut, stride 1
        (2, 32, 16, 16, 8, 1, None, 1e-3),           # identity shortcut
        (2, 16, 16, 16, 8, 2, None, 1e-3),           # stride-2 downsampling block
        (2, 16, 16, 16, 8, 1, jnp.bfloat16, 5e-2),   # bf16 MXU operands (v6e/v7x)
    ]
    for i, (N, in_ch, H, W, ch, stride, mdt, tol) in enumerate(configs):
        kx, kp, key = jax.random.split(key, 3)
        x = jax.random.normal(kx, (N, in_ch, H, W), jnp.float32)   # NCHW (PyTorch)
        params = init_bottleneck_params(kp, in_ch, ch, stride=stride)

        out = jax.block_until_ready(bottleneck_forward(x, params, mxu_dtype=mdt))
        ref = jax.block_until_ready(bottleneck_reference(x, params))

        assert out.shape == (N, EXPANSION * ch, H // stride, W // stride), out.shape
        err = float(jnp.max(jnp.abs(out - ref)))
        assert err < tol, f"config {i}: max abs error {err} (tol {tol})"

    print("KERNEL_OK")
</pallas_src>

<mosaic_0001>
module attributes {stable_mosaic.version = 11 : i64} {
  func.func @kernel(%arg0: i32, %arg1: i32, %arg2: memref<1x1x16x16xf32, #tpu.memory_space<vmem>>, %arg3: memref<1x8x16x16xf32, #tpu.memory_space<vmem>>, %arg4: memref<1x1x16x16xf32, #tpu.memory_space<vmem>>, %arg5: memref<16x8xf32, #tpu.memory_space<vmem>>, %arg6: memref<1x8xf32, #tpu.memory_space<vmem>>, %arg7: memref<9x8x8xf32, #tpu.memory_space<vmem>>, %arg8: memref<1x8xf32, #tpu.memory_space<vmem>>, %arg9: memref<8x32xf32, #tpu.memory_space<vmem>>, %arg10: memref<1x32xf32, #tpu.memory_space<vmem>>, %arg11: memref<16x32xf32, #tpu.memory_space<vmem>>, %arg12: memref<1x32xf32, #tpu.memory_space<vmem>>, %arg13: memref<1x8x16x32xf32, #tpu.memory_space<vmem>>) attributes {dimension_semantics = [#tpu.dimension_semantics<parallel>, #tpu.dimension_semantics<parallel>], iteration_bounds = array<i64: 2, 2>, scalar_prefetch = 0 : i64, scratch_operands = 0 : i64, tpu.core_type = #tpu.core_type<tc>, window_params = [{transform_indices = @transform_0, window_bounds = array<i64: 1, 1, 16, 16>}, {transform_indices = @transform_1, window_bounds = array<i64: 1, 8, 16, 16>}, {transform_indices = @transform_2, window_bounds = array<i64: 1, 1, 16, 16>}, {pipeline_mode = #tpu.pipeline_mode<synchronous>, transform_indices = @transform_3, window_bounds = array<i64: 16, 8>}, {pipeline_mode = #tpu.pipeline_mode<synchronous>, transform_indices = @transform_4, window_bounds = array<i64: 1, 8>}, {pipeline_mode = #tpu.pipeline_mode<synchronous>, transform_indices = @transform_5, window_bounds = array<i64: 9, 8, 8>}, {pipeline_mode = #tpu.pipeline_mode<synchronous>, transform_indices = @transform_6, window_bounds = array<i64: 1, 8>}, {pipeline_mode = #tpu.pipeline_mode<synchronous>, transform_indices = @transform_7, window_bounds = array<i64: 8, 32>}, {pipeline_mode = #tpu.pipeline_mode<synchronous>, transform_indices = @transform_8, window_bounds = array<i64: 1, 32>}, {pipeline_mode = #tpu.pipeline_mode<synchronous>, transform_indices = @transform_9, window_bounds = array<i64: 16, 32>}, {pipeline_mode = #tpu.pipeline_mode<synchronous>, transform_indices = @transform_10, window_bounds = array<i64: 1, 32>}, {transform_indices = @transform_11, window_bounds = array<i64: 1, 8, 16, 32>}]} {
    %c0 = arith.constant 0 : index
    %c0_0 = arith.constant 0 : index
    %c0_1 = arith.constant 0 : index
    %c0_2 = arith.constant 0 : index
    %0 = vector.load %arg3[%c0, %c0_0, %c0_1, %c0_2] : memref<1x8x16x16xf32, #tpu.memory_space<vmem>>, vector<1x8x16x16xf32>
    %1 = vector.shape_cast %0 : vector<1x8x16x16xf32> to vector<8x16x16xf32>
    %c0_3 = arith.constant 0 : index
    %c0_4 = arith.constant 0 : index
    %c0_5 = arith.constant 0 : index
    %c0_6 = arith.constant 0 : index
    %2 = vector.load %arg2[%c0_3, %c0_4, %c0_5, %c0_6] : memref<1x1x16x16xf32, #tpu.memory_space<vmem>>, vector<1x1x16x16xf32>
    %3 = vector.shape_cast %2 : vector<1x1x16x16xf32> to vector<1x16x16xf32>
    %c0_7 = arith.constant 0 : index
    %c0_8 = arith.constant 0 : index
    %c0_9 = arith.constant 0 : index
    %c0_10 = arith.constant 0 : index
    %4 = vector.load %arg4[%c0_7, %c0_8, %c0_9, %c0_10] : memref<1x1x16x16xf32, #tpu.memory_space<vmem>>, vector<1x1x16x16xf32>
    %5 = vector.shape_cast %4 : vector<1x1x16x16xf32> to vector<1x16x16xf32>
    %6 = tpu.concatenate %3, %1, %5 in 0 : vector<1x16x16xf32>, vector<8x16x16xf32>, vector<1x16x16xf32> -> vector<10x16x16xf32>
    %7 = vector.shape_cast %6 : vector<10x16x16xf32> to vector<160x16xf32>
    %c0_11 = arith.constant 0 : index
    %c0_12 = arith.constant 0 : index
    %8 = vector.load %arg5[%c0_11, %c0_12] : memref<16x8xf32, #tpu.memory_space<vmem>>, vector<16x8xf32>
    %cst = arith.constant dense<0.000000e+00> : vector<160x8xf32>
    %9 = tpu.matmul %7, %8, %cst {dimension_numbers = #tpu.dot_dimension_numbers<[1], [0], [0], [1], [0, 0, 1, 1], [], []>} : vector<160x16xf32>, vector<16x8xf32>, vector<160x8xf32> -> vector<160x8xf32>
    %c0_13 = arith.constant 0 : index
    %c0_14 = arith.constant 0 : index
    %10 = vector.load %arg6[%c0_13, %c0_14] : memref<1x8xf32, #tpu.memory_space<vmem>>, vector<1x8xf32>
    %11 = vector.broadcast %10 : vector<1x8xf32> to vector<160x8xf32>
    %12 = arith.addf %9, %11 : vector<160x8xf32>
    %cst_15 = arith.constant 0.000000e+00 : f32
    %13 = vector.broadcast %cst_15 : f32 to vector<160x8xf32>
    %14 = arith.maximumf %12, %13 : vector<160x8xf32>
    %15 = vector.shape_cast %14 : vector<160x8xf32> to vector<10x16x8xf32>
    %16 = tpu.iota {dimensions = array<i32: 0>} : vector<10x1x1xi32>
    %c0_i32 = arith.constant 0 : i32
    %17 = arith.cmpi sgt, %arg1, %c0_i32 : i32
    %c1_i32 = arith.constant 1 : i32
    %18 = arith.addi %arg1, %c1_i32 : i32
    %c8_i32 = arith.constant 8 : i32
    %19 = arith.muli %18, %c8_i32 : i32
    %c1_i32_16 = arith.constant 1 : i32
    %20 = arith.muli %19, %c1_i32_16 : i32
    %c16_i32 = arith.constant 16 : i32
    %21 = arith.cmpi slt, %20, %c16_i32 : i32
    %c0_i32_17 = arith.constant 0 : i32
    %22 = vector.broadcast %c0_i32_17 : i32 to vector<10x1x1xi32>
    %23 = arith.cmpi sgt, %16, %22 : vector<10x1x1xi32>
    %24 = vector.broadcast %17 : i1 to vector<10x1x1xi1>
    %25 = arith.ori %23, %24 : vector<10x1x1xi1>
    %c9_i32 = arith.constant 9 : i32
    %26 = vector.broadcast %c9_i32 : i32 to vector<10x1x1xi32>
    %27 = arith.cmpi slt, %16, %26 : vector<10x1x1xi32>
    %28 = vector.broadcast %21 : i1 to vector<10x1x1xi1>
    %29 = arith.ori %27, %28 : vector<10x1x1xi1>
    %30 = arith.andi %25, %29 : vector<10x1x1xi1>
    %31 = arith.extui %30 : vector<10x1x1xi1> to vector<10x1x1xi32>
    %32 = arith.sitofp %31 : vector<10x1x1xi32> to vector<10x1x1xf32>
    %33 = vector.broadcast %32 : vector<10x1x1xf32> to vector<10x16x8xf32>
    %34 = arith.mulf %15, %33 : vector<10x16x8xf32>
    %35 = tpu.iota {dimensions = array<i32: 0>} : vector<128x1xi32>
    %c16_i32_18 = arith.constant 16 : i32
    %c0_i32_19 = arith.constant 0 : i32
    %36 = arith.cmpi eq, %c16_i32_18, %c0_i32_19 : i32
    %c1_i32_20 = arith.constant 1 : i32
    %37 = arith.select %36, %c1_i32_20, %c16_i32_18 : i32
    %38 = vector.broadcast %37 : i32 to vector<128x1xi32>
    %39 = arith.remsi %35, %38 : vector<128x1xi32>
    %c0_i32_21 = arith.constant 0 : i32
    %40 = vector.broadcast %c0_i32_21 : i32 to vector<128x1xi32>
    %41 = arith.cmpi ne, %39, %40 : vector<128x1xi32>
    %c0_i32_22 = arith.constant 0 : i32
    %42 = vector.broadcast %c0_i32_22 : i32 to vector<128x1xi32>
    %43 = arith.cmpi slt, %39, %42 : vector<128x1xi32>
    %c0_i32_23 = arith.constant 0 : i32
    %44 = arith.cmpi slt, %37, %c0_i32_23 : i32
    %45 = vector.broadcast %44 : i1 to vector<128x1xi1>
    %46 = vector.broadcast %45 : vector<128x1xi1> to vector<128x1xi1>
    %47 = arith.xori %43, %46 : vector<128x1xi1>
    %48 = arith.andi %47, %41 : vector<128x1xi1>
    %49 = vector.broadcast %37 : i32 to vector<128x1xi32>
    %50 = arith.addi %39, %49 : vector<128x1xi32>
    %51 = arith.select %48, %50, %39 : vector<128x1xi1>, vector<128x1xi32>
    %cst_24 = arith.constant 0.000000e+00 : f32
    %52 = vector.broadcast %cst_24 : f32 to vector<128x8xf32>
    %53 = vector.extract_strided_slice %34 {offsets = [0, 0, 0], sizes = [8, 16, 8], strides = [1, 1, 1]} : vector<10x16x8xf32> to vector<8x16x8xf32>
    %54 = vector.shape_cast %53 : vector<8x16x8xf32> to vector<128x8xf32>
    %c1_i32_25 = arith.constant 1 : i32
    %55 = tpu.dynamic_rotate %54 by %c1_i32_25 dim 0 : vector<128x8xf32>, i32 -> vector<128x8xf32>
    %c0_i32_26 = arith.constant 0 : i32
    %56 = vector.broadcast %c0_i32_26 : i32 to vector<128x1xi32>
    %57 = arith.cmpi ne, %51, %56 : vector<128x1xi32>
    %cst_27 = arith.constant 0.000000e+00 : f32
    %58 = vector.broadcast %cst_27 : f32 to vector<128x8xf32>
    %59 = vector.shape_cast %57 : vector<128x1xi1> to vector<128x1xi1>
    %60 = vector.broadcast %59 : vector<128x1xi1> to vector<128x8xi1>
    %61 = arith.select %60, %55, %58 : vector<128x8xi1>, vector<128x8xf32>
    %c0_28 = arith.constant 0 : index
    %c0_29 = arith.constant 0 : index
    %c0_30 = arith.constant 0 : index
    %62 = vector.load %arg7[%c0_28, %c0_29, %c0_30] : memref<9x8x8xf32, #tpu.memory_space<vmem>>, vector<1x8x8xf32>
    %63 = vector.shape_cast %62 : vector<1x8x8xf32> to vector<8x8xf32>
    %cst_31 = arith.constant dense<0.000000e+00> : vector<128x8xf32>
    %64 = tpu.matmul %61, %63, %cst_31 {dimension_numbers = #tpu.dot_dimension_numbers<[1], [0], [0], [1], [0, 0, 1, 1], [], []>} : vector<128x8xf32>, vector<8x8xf32>, vector<128x8xf32> -> vector<128x8xf32>
    %65 = arith.addf %52, %64 : vector<128x8xf32>
    %c1 = arith.constant 1 : index
    %c0_32 = arith.constant 0 : index
    %c0_33 = arith.constant 0 : index
    %66 = vector.load %arg7[%c1, %c0_32, %c0_33] : memref<9x8x8xf32, #tpu.memory_space<vmem>>, vector<1x8x8xf32>
    %67 = vector.shape_cast %66 : vector<1x8x8xf32> to vector<8x8xf32>
    %cst_34 = arith.constant dense<0.000000e+00> : vector<128x8xf32>
    %68 = tpu.matmul %54, %67, %cst_34 {dimension_numbers = #tpu.dot_dimension_numbers<[1], [0], [0], [1], [0, 0, 1, 1], [], []>} : vector<128x8xf32>, vector<8x8xf32>, vector<128x8xf32> -> vector<128x8xf32>
    %69 = arith.addf %65, %68 : vector<128x8xf32>
    %c127_i32 = arith.constant 127 : i32
    %70 = tpu.dynamic_rotate %54 by %c127_i32 dim 0 : vector<128x8xf32>, i32 -> vector<128x8xf32>
    %c15_i32 = arith.constant 15 : i32
    %71 = vector.broadcast %c15_i32 : i32 to vector<128x1xi32>
    %72 = arith.cmpi ne, %51, %71 : vector<128x1xi32>
    %cst_35 = arith.constant 0.000000e+00 : f32
    %73 = vector.broadcast %cst_35 : f32 to vector<128x8xf32>
    %74 = vector.shape_cast %72 : vector<128x1xi1> to vector<128x1xi1>
    %75 = vector.broadcast %74 : vector<128x1xi1> to vector<128x8xi1>
    %76 = arith.select %75, %70, %73 : vector<128x8xi1>, vector<128x8xf32>
    %c2 = arith.constant 2 : index
    %c0_36 = arith.constant 0 : index
    %c0_37 = arith.constant 0 : index
    %77 = vector.load %arg7[%c2, %c0_36, %c0_37] : memref<9x8x8xf32, #tpu.memory_space<vmem>>, vector<1x8x8xf32>
    %78 = vector.shape_cast %77 : vector<1x8x8xf32> to vector<8x8xf32>
    %cst_38 = arith.constant dense<0.000000e+00> : vector<128x8xf32>
    %79 = tpu.matmul %76, %78, %cst_38 {dimension_numbers = #tpu.dot_dimension_numbers<[1], [0], [0], [1], [0, 0, 1, 1], [], []>} : vector<128x8xf32>, vector<8x8xf32>, vector<128x8xf32> -> vector<128x8xf32>
    %80 = arith.addf %69, %79 : vector<128x8xf32>
    %81 = vector.extract_strided_slice %34 {offsets = [1, 0, 0], sizes = [8, 16, 8], strides = [1, 1, 1]} : vector<10x16x8xf32> to vector<8x16x8xf32>
    %82 = vector.shape_cast %81 : vector<8x16x8xf32> to vector<128x8xf32>
    %c1_i32_39 = arith.constant 1 : i32
    %83 = tpu.dynamic_rotate %82 by %c1_i32_39 dim 0 : vector<128x8xf32>, i32 -> vector<128x8xf32>
    %c0_i32_40 = arith.constant 0 : i32
    %84 = vector.broadcast %c0_i32_40 : i32 to vector<128x1xi32>
    %85 = arith.cmpi ne, %51, %84 : vector<128x1xi32>
    %cst_41 = arith.constant 0.000000e+00 : f32
    %86 = vector.broadcast %cst_41 : f32 to vector<128x8xf32>
    %87 = vector.shape_cast %85 : vector<128x1xi1> to vector<128x1xi1>
    %88 = vector.broadcast %87 : vector<128x1xi1> to vector<128x8xi1>
    %89 = arith.select %88, %83, %86 : vector<128x8xi1>, vector<128x8xf32>
    %c3 = arith.constant 3 : index
    %c0_42 = arith.constant 0 : index
    %c0_43 = arith.constant 0 : index
    %90 = vector.load %arg7[%c3, %c0_42, %c0_43] : memref<9x8x8xf32, #tpu.memory_space<vmem>>, vector<1x8x8xf32>
    %91 = vector.shape_cast %90 : vector<1x8x8xf32> to vector<8x8xf32>
    %cst_44 = arith.constant dense<0.000000e+00> : vector<128x8xf32>
    %92 = tpu.matmul %89, %91, %cst_44 {dimension_numbers = #tpu.dot_dimension_numbers<[1], [0], [0], [1], [0, 0, 1, 1], [], []>} : vector<128x8xf32>, vector<8x8xf32>, vector<128x8xf32> -> vector<128x8xf32>
    %93 = arith.addf %80, %92 : vector<128x8xf32>
    %c4 = arith.constant 4 : index
    %c0_45 = arith.constant 0 : index
    %c0_46 = arith.constant 0 : index
    %94 = vector.load %arg7[%c4, %c0_45, %c0_46] : memref<9x8x8xf32, #tpu.memory_space<vmem>>, vector<1x8x8xf32>
    %95 = vector.shape_cast %94 : vector<1x8x8xf32> to vector<8x8xf32>
    %cst_47 = arith.constant dense<0.000000e+00> : vector<128x8xf32>
    %96 = tpu.matmul %82, %95, %cst_47 {dimension_numbers = #tpu.dot_dimension_numbers<[1], [0], [0], [1], [0, 0, 1, 1], [], []>} : vector<128x8xf32>, vector<8x8xf32>, vector<128x8xf32> -> vector<128x8xf32>
    %97 = arith.addf %93, %96 : vector<128x8xf32>
    %c127_i32_48 = arith.constant 127 : i32
    %98 = tpu.dynamic_rotate %82 by %c127_i32_48 dim 0 : vector<128x8xf32>, i32 -> vector<128x8xf32>
    %c15_i32_49 = arith.constant 15 : i32
    %99 = vector.broadcast %c15_i32_49 : i32 to vector<128x1xi32>
    %100 = arith.cmpi ne, %51, %99 : vector<128x1xi32>
    %cst_50 = arith.constant 0.000000e+00 : f32
    %101 = vector.broadcast %cst_50 : f32 to vector<128x8xf32>
    %102 = vector.shape_cast %100 : vector<128x1xi1> to vector<128x1xi1>
    %103 = vector.broadcast %102 : vector<128x1xi1> to vector<128x8xi1>
    %104 = arith.select %103, %98, %101 : vector<128x8xi1>, vector<128x8xf32>
    %c5 = arith.constant 5 : index
    %c0_51 = arith.constant 0 : index
    %c0_52 = arith.constant 0 : index
    %105 = vector.load %arg7[%c5, %c0_51, %c0_52] : memref<9x8x8xf32, #tpu.memory_space<vmem>>, vector<1x8x8xf32>
    %106 = vector.shape_cast %105 : vector<1x8x8xf32> to vector<8x8xf32>
    %cst_53 = arith.constant dense<0.000000e+00> : vector<128x8xf32>
    %107 = tpu.matmul %104, %106, %cst_53 {dimension_numbers = #tpu.dot_dimension_numbers<[1], [0], [0], [1], [0, 0, 1, 1], [], []>} : vector<128x8xf32>, vector<8x8xf32>, vector<128x8xf32> -> vector<128x8xf32>
    %108 = arith.addf %97, %107 : vector<128x8xf32>
    %109 = vector.extract_strided_slice %34 {offsets = [2, 0, 0], sizes = [8, 16, 8], strides = [1, 1, 1]} : vector<10x16x8xf32> to vector<8x16x8xf32>
    %110 = vector.shape_cast %109 : vector<8x16x8xf32> to vector<128x8xf32>
    %c1_i32_54 = arith.constant 1 : i32
    %111 = tpu.dynamic_rotate %110 by %c1_i32_54 dim 0 : vector<128x8xf32>, i32 -> vector<128x8xf32>
    %c0_i32_55 = arith.constant 0 : i32
    %112 = vector.broadcast %c0_i32_55 : i32 to vector<128x1xi32>
    %113 = arith.cmpi ne, %51, %112 : vector<128x1xi32>
    %cst_56 = arith.constant 0.000000e+00 : f32
    %114 = vector.broadcast %cst_56 : f32 to vector<128x8xf32>
    %115 = vector.shape_cast %113 : vector<128x1xi1> to vector<128x1xi1>
    %116 = vector.broadcast %115 : vector<128x1xi1> to vector<128x8xi1>
    %117 = arith.select %116, %111, %114 : vector<128x8xi1>, vector<128x8xf32>
    %c6 = arith.constant 6 : index
    %c0_57 = arith.constant 0 : index
    %c0_58 = arith.constant 0 : index
    %118 = vector.load %arg7[%c6, %c0_57, %c0_58] : memref<9x8x8xf32, #tpu.memory_space<vmem>>, vector<1x8x8xf32>
    %119 = vector.shape_cast %118 : vector<1x8x8xf32> to vector<8x8xf32>
    %cst_59 = arith.constant dense<0.000000e+00> : vector<128x8xf32>
    %120 = tpu.matmul %117, %119, %cst_59 {dimension_numbers = #tpu.dot_dimension_numbers<[1], [0], [0], [1], [0, 0, 1, 1], [], []>} : vector<128x8xf32>, vector<8x8xf32>, vector<128x8xf32> -> vector<128x8xf32>
    %121 = arith.addf %108, %120 : vector<128x8xf32>
    %c7 = arith.constant 7 : index
    %c0_60 = arith.constant 0 : index
    %c0_61 = arith.constant 0 : index
    %122 = vector.load %arg7[%c7, %c0_60, %c0_61] : memref<9x8x8xf32, #tpu.memory_space<vmem>>, vector<1x8x8xf32>
    %123 = vector.shape_cast %122 : vector<1x8x8xf32> to vector<8x8xf32>
    %cst_62 = arith.constant dense<0.000000e+00> : vector<128x8xf32>
    %124 = tpu.matmul %110, %123, %cst_62 {dimension_numbers = #tpu.dot_dimension_numbers<[1], [0], [0], [1], [0, 0, 1, 1], [], []>} : vector<128x8xf32>, vector<8x8xf32>, vector<128x8xf32> -> vector<128x8xf32>
    %125 = arith.addf %121, %124 : vector<128x8xf32>
    %c127_i32_63 = arith.constant 127 : i32
    %126 = tpu.dynamic_rotate %110 by %c127_i32_63 dim 0 : vector<128x8xf32>, i32 -> vector<128x8xf32>
    %c15_i32_64 = arith.constant 15 : i32
    %127 = vector.broadcast %c15_i32_64 : i32 to vector<128x1xi32>
    %128 = arith.cmpi ne, %51, %127 : vector<128x1xi32>
    %cst_65 = arith.constant 0.000000e+00 : f32
    %129 = vector.broadcast %cst_65 : f32 to vector<128x8xf32>
    %130 = vector.shape_cast %128 : vector<128x1xi1> to vector<128x1xi1>
    %131 = vector.broadcast %130 : vector<128x1xi1> to vector<128x8xi1>
    %132 = arith.select %131, %126, %129 : vector<128x8xi1>, vector<128x8xf32>
    %c8 = arith.constant 8 : index
    %c0_66 = arith.constant 0 : index
    %c0_67 = arith.constant 0 : index
    %133 = vector.load %arg7[%c8, %c0_66, %c0_67] : memref<9x8x8xf32, #tpu.memory_space<vmem>>, vector<1x8x8xf32>
    %134 = vector.shape_cast %133 : vector<1x8x8xf32> to vector<8x8xf32>
    %cst_68 = arith.constant dense<0.000000e+00> : vector<128x8xf32>
    %135 = tpu.matmul %132, %134, %cst_68 {dimension_numbers = #tpu.dot_dimension_numbers<[1], [0], [0], [1], [0, 0, 1, 1], [], []>} : vector<128x8xf32>, vector<8x8xf32>, vector<128x8xf32> -> vector<128x8xf32>
    %136 = arith.addf %125, %135 : vector<128x8xf32>
    %c0_69 = arith.constant 0 : index
    %c0_70 = arith.constant 0 : index
    %137 = vector.load %arg8[%c0_69, %c0_70] : memref<1x8xf32, #tpu.memory_space<vmem>>, vector<1x8xf32>
    %138 = vector.broadcast %137 : vector<1x8xf32> to vector<128x8xf32>
    %139 = arith.addf %136, %138 : vector<128x8xf32>
    %cst_71 = arith.constant 0.000000e+00 : f32
    %140 = vector.broadcast %cst_71 : f32 to vector<128x8xf32>
    %141 = arith.maximumf %139, %140 : vector<128x8xf32>
    %c0_72 = arith.constant 0 : index
    %c0_73 = arith.constant 0 : index
    %142 = vector.load %arg9[%c0_72, %c0_73] : memref<8x32xf32, #tpu.memory_space<vmem>>, vector<8x32xf32>
    %cst_74 = arith.constant dense<0.000000e+00> : vector<128x32xf32>
    %143 = tpu.matmul %141, %142, %cst_74 {dimension_numbers = #tpu.dot_dimension_numbers<[1], [0], [0], [1], [0, 0, 1, 1], [], []>} : vector<128x8xf32>, vector<8x32xf32>, vector<128x32xf32> -> vector<128x32xf32>
    %c0_75 = arith.constant 0 : index
    %c0_76 = arith.constant 0 : index
    %144 = vector.load %arg10[%c0_75, %c0_76] : memref<1x32xf32, #tpu.memory_space<vmem>>, vector<1x32xf32>
    %145 = vector.broadcast %144 : vector<1x32xf32> to vector<128x32xf32>
    %146 = arith.addf %143, %145 : vector<128x32xf32>
    %147 = vector.shape_cast %1 : vector<8x16x16xf32> to vector<128x16xf32>
    %c0_77 = arith.constant 0 : index
    %c0_78 = arith.constant 0 : index
    %148 = vector.load %arg11[%c0_77, %c0_78] : memref<16x32xf32, #tpu.memory_space<vmem>>, vector<16x32xf32>
    %cst_79 = arith.constant dense<0.000000e+00> : vector<128x32xf32>
    %149 = tpu.matmul %147, %148, %cst_79 {dimension_numbers = #tpu.dot_dimension_numbers<[1], [0], [0], [1], [0, 0, 1, 1], [], []>} : vector<128x16xf32>, vector<16x32xf32>, vector<128x32xf32> -> vector<128x32xf32>
    %150 = arith.addf %146, %149 : vector<128x32xf32>
    %c0_80 = arith.constant 0 : index
    %c0_81 = arith.constant 0 : index
    %151 = vector.load %arg12[%c0_80, %c0_81] : memref<1x32xf32, #tpu.memory_space<vmem>>, vector<1x32xf32>
    %152 = vector.broadcast %151 : vector<1x32xf32> to vector<128x32xf32>
    %153 = arith.addf %150, %152 : vector<128x32xf32>
    %cst_82 = arith.constant 0.000000e+00 : f32
    %154 = vector.broadcast %cst_82 : f32 to vector<128x32xf32>
    %155 = arith.maximumf %153, %154 : vector<128x32xf32>
    %156 = vector.shape_cast %155 : vector<128x32xf32> to vector<1x8x16x32xf32>
    %c0_83 = arith.constant 0 : index
    %c0_84 = arith.constant 0 : index
    %c0_85 = arith.constant 0 : index
    %c0_86 = arith.constant 0 : index
    %157 = vector.load %arg13[%c0_83, %c0_84, %c0_85, %c0_86] : memref<1x8x16x32xf32, #tpu.memory_space<vmem>>, vector<1x8x16x32xf32>
    tpu.vector_store %arg13[%c0_83, %c0_84, %c0_85, %c0_86], %156 {strides = array<i32>} : memref<1x8x16x32xf32, #tpu.memory_space<vmem>>, vector<1x8x16x32xf32>,
    return
  }
  func.func @transform_0(%arg0: i32, %arg1: i32) -> (i32, i32, i32, i32) {
    %c8_i32 = arith.constant 8 : i32
    %0 = arith.muli %arg1, %c8_i32 : i32
    %c1_i32 = arith.constant 1 : i32
    %1 = arith.subi %0, %c1_i32 : i32
    %c0_i32 = arith.constant 0 : i32
    %2 = arith.maxsi %1, %c0_i32 : i32
    %c0_i32_0 = arith.constant 0 : i32
    %c0_i32_1 = arith.constant 0 : i32
    %c0_i32_2 = arith.constant 0 : i32
    return %arg0, %2, %c0_i32_0, %c0_i32_1 : i32, i32, i32, i32
  }
  func.func @transform_1(%arg0: i32, %arg1: i32) -> (i32, i32, i32, i32) {
    %c0_i32 = arith.constant 0 : i32
    %c0_i32_0 = arith.constant 0 : i32
    %c0_i32_1 = arith.constant 0 : i32
    return %arg0, %arg1, %c0_i32, %c0_i32_0 : i32, i32, i32, i32
  }
  func.func @transform_2(%arg0: i32, %arg1: i32) -> (i32, i32, i32, i32) {
    %c1_i32 = arith.constant 1 : i32
    %0 = arith.addi %arg1, %c1_i32 : i32
    %c8_i32 = arith.constant 8 : i32
    %1 = arith.muli %0, %c8_i32 : i32
    %c15_i32 = arith.constant 15 : i32
    %2 = arith.minsi %1, %c15_i32 : i32
    %c0_i32 = arith.constant 0 : i32
    %c0_i32_0 = arith.constant 0 : i32
    %c0_i32_1 = arith.constant 0 : i32
    return %arg0, %2, %c0_i32, %c0_i32_0 : i32, i32, i32, i32
  }
  func.func @transform_3(%arg0: i32, %arg1: i32) -> (i32, i32) {
    %c0_i32 = arith.constant 0 : i32
    %c0_i32_0 = arith.constant 0 : i32
    %c0_i32_1 = arith.constant 0 : i32
    return %c0_i32, %c0_i32_0 : i32, i32
  }
  func.func @transform_4(%arg0: i32, %arg1: i32) -> (i32, i32) {
    %c0_i32 = arith.constant 0 : i32
    %c0_i32_0 = arith.constant 0 : i32
    %c0_i32_1 = arith.constant 0 : i32
    return %c0_i32, %c0_i32_0 : i32, i32
  }
  func.func @transform_5(%arg0: i32, %arg1: i32) -> (i32, i32, i32) {
    %c0_i32 = arith.constant 0 : i32
    %c0_i32_0 = arith.constant 0 : i32
    %c0_i32_1 = arith.constant 0 : i32
    %c0_i32_2 = arith.constant 0 : i32
    return %c0_i32, %c0_i32_0, %c0_i32_1 : i32, i32, i32
  }
  func.func @transform_6(%arg0: i32, %arg1: i32) -> (i32, i32) {
    %c0_i32 = arith.constant 0 : i32
    %c0_i32_0 = arith.constant 0 : i32
    %c0_i32_1 = arith.constant 0 : i32
    return %c0_i32, %c0_i32_0 : i32, i32
  }
  func.func @transform_7(%arg0: i32, %arg1: i32) -> (i32, i32) {
    %c0_i32 = arith.constant 0 : i32
    %c0_i32_0 = arith.constant 0 : i32
    %c0_i32_1 = arith.constant 0 : i32
    return %c0_i32, %c0_i32_0 : i32, i32
  }
  func.func @transform_8(%arg0: i32, %arg1: i32) -> (i32, i32) {
    %c0_i32 = arith.constant 0 : i32
    %c0_i32_0 = arith.constant 0 : i32
    %c0_i32_1 = arith.constant 0 : i32
    return %c0_i32, %c0_i32_0 : i32, i32
  }
  func.func @transform_9(%arg0: i32, %arg1: i32) -> (i32, i32) {
    %c0_i32 = arith.constant 0 : i32
    %c0_i32_0 = arith.constant 0 : i32
    %c0_i32_1 = arith.constant 0 : i32
    return %c0_i32, %c0_i32_0 : i32, i32
  }
  func.func @transform_10(%arg0: i32, %arg1: i32) -> (i32, i32) {
    %c0_i32 = arith.constant 0 : i32
    %c0_i32_0 = arith.constant 0 : i32
    %c0_i32_1 = arith.constant 0 : i32
    return %c0_i32, %c0_i32_0 : i32, i32
  }
  func.func @transform_11(%arg0: i32, %arg1: i32) -> (i32, i32, i32, i32) {
    %c0_i32 = arith.constant 0 : i32
    %c0_i32_0 = arith.constant 0 : i32
    %c0_i32_1 = arith.constant 0 : i32
    return %arg0, %arg1, %c0_i32, %c0_i32_0 : i32, i32, i32, i32
  }
}

</mosaic_0001>

<llo_original>
// kernel: tpu_custom_call.1
$region0: #{tpu_custom_call.1}
  #allocation0 [shape = 'u32[]', space=smem, size = 0x4, offset = 0x4, fixed_abs, tag = 'smem constant byte address 0x4 - core index']
  #allocation1 [shape = 'u32[144,128]{1,0:T(1,128)}', space=vmem, size = 0x12000, scoped, tag = 'internal scratch']
  %s0 = inlined_call_operand.hbm [shape: f32[2,16,16,16], index: 0, kind: input, shape index: {}]
  %s1 = inlined_call_operand.hbm [shape: f32[2,16,16,16], index: 1, kind: input, shape index: {}]
  %s2 = inlined_call_operand.hbm [shape: f32[2,16,16,16], index: 2, kind: input, shape index: {}]
  %s3 = inlined_call_operand.vmem [shape: f32[16,8], index: 3, kind: input, shape index: {}]
  %s4 = inlined_call_operand.vmem [shape: f32[1,8], index: 4, kind: input, shape index: {}]
  %s5 = inlined_call_operand.vmem [shape: f32[9,8,8], index: 5, kind: input, shape index: {}]
  %s6 = inlined_call_operand.vmem [shape: f32[1,8], index: 6, kind: input, shape index: {}]
  %s7 = inlined_call_operand.vmem [shape: f32[8,32], index: 7, kind: input, shape index: {}]
  %s8 = inlined_call_operand.vmem [shape: f32[1,32], index: 8, kind: input, shape index: {}]
  %s9 = inlined_call_operand.vmem [shape: f32[16,32], index: 9, kind: input, shape index: {}]
  %s10 = inlined_call_operand.vmem [shape: f32[1,32], index: 10, kind: input, shape index: {}]
  %s11 = inlined_call_operand.hbm [shape: f32[2,16,16,32], index: 11, kind: output, shape index: {}]
  %s12 = sld [smem:[#allocation0]]
  $region89: #{tpu_custom_call.1} parent=0
    _
  %s14 = ssub.s32 1, %s12
  %s15 = scalar_select 0, %s14, %s12
  $region1: #{tpu_custom_call.1} parent=0
    #allocation2 [shape = 'u8[16384]{0}', space=vmem, size = 0x4000, scoped, tag = 'input window, operand 0']
    #allocation3 [shape = 's32[2]{0}', space=sflag, size = 0x8, scoped, tag = 'scoped memory for tpu_custom_call.1']
    #allocation4 [shape = 's32[2]{0}', space=sflag, size = 0x8, scoped, tag = 'scoped memory for tpu_custom_call.1']
    #allocation5 [shape = 'u8[131072]{0}', space=vmem, size = 0x20000, scoped, tag = 'input window, operand 1']
    #allocation6 [shape = 's32[2]{0}', space=sflag, size = 0x8, scoped, tag = 'scoped memory for tpu_custom_call.1']
    #allocation7 [shape = 'u8[16384]{0}', space=vmem, size = 0x4000, scoped, tag = 'input window, operand 2']
    #allocation8 [shape = 'u8[131072]{0}', space=vmem, size = 0x20000, scoped, tag = 'output window, operand 0']
    %16 = vsyncpa [#allocation3], 0
    %s17 = scalar_lea.sflag [#allocation3], 1
    %18 = vsyncpa %s17, 0
    %19 = vsyncpa [#allocation6], 0
    %s20 = scalar_lea.sflag [#allocation6], 1
    %21 = vsyncpa %s20, 0
    %22 = vsyncpa [#allocation4], 0
    %s23 = scalar_lea.sflag [#allocation4], 1
    %24 = vsyncpa %s23, 0
    loop: start=0, step=1, limit=6
    $region2: #{tpu_custom_call.1} parent=1 // loop_pre_header
      _
    $region3: #{tpu_custom_call.1} parent=1 // loop_header
      %s26 = sphi 0, %s30
      %p27 = scmp.ge.s32.totalorder %s26, 6
      %s33 = sphi 0, %s45
      %s34 = sphi 0, %s41
      %s35 = sphi 0, %s33
      %s36 = sphi 0, %s34
      %s37 = sphi 0, %s35
      %s38 = sphi 0, %s36
      %s58 = sphi 0, %s60
      %s61 = sphi 0, %s58
      %s62 = sphi 0, %s61
      %s78 = sphi 0, %s62
      %s86 = sphi 0, %s88
      %s89 = sphi 0, %s86
      %s90 = sphi 0, %s89
      %s106 = sphi 0, %s90
      %s122 = sphi 0, %s124
      %s125 = sphi 0, %s122
      %s126 = sphi 0, %s125
      %s142 = sphi 0, %s126
      %s146 = sphi 0, %s146
      %s148 = sphi 0, %s146
      %s149 = sphi 0, %s148
      %s163 = sphi 0, %s149
      %s167 = sphi 0, %s167
      %s169 = sphi 0, %s167
      %s170 = sphi 0, %s169
      %s184 = sphi 0, %s170
      %s188 = sphi 0, %s188
      %s190 = sphi 0, %s188
      %s191 = sphi 0, %s190
      %s205 = sphi 0, %s191
      %s209 = sphi 0, %s209
      %s211 = sphi 0, %s209
      %s212 = sphi 0, %s211
      %s226 = sphi 0, %s212
      %s230 = sphi 0, %s230
      %s232 = sphi 0, %s230
      %s233 = sphi 0, %s232
      %s247 = sphi 0, %s233
      %s251 = sphi 0, %s251
      %s253 = sphi 0, %s251
      %s254 = sphi 0, %s253
      %s268 = sphi 0, %s254
      %s272 = sphi 0, %s272
      %s274 = sphi 0, %s272
      %s275 = sphi 0, %s274
      %s289 = sphi 0, %s275
      %s293 = sphi 0, %s293
      %s295 = sphi 0, %s293
      %s296 = sphi 0, %s295
      %s310 = sphi 0, %s296
      %s318 = sphi 0, %s320
      %s321 = sphi 0, %s318
      %s322 = sphi 0, %s321
      %s338 = sphi 0, %s322
    $region4: #{tpu_custom_call.1} parent=1 // loop_header_branch
      %29 = sbr.rel (%p27) target = $region8
    $region5: #{tpu_custom_call.1} parent=1 // loop_body
      %s31 = ssub.s32 %s26, 1
      %s32 = ssub.s32 %s26, 2
      %s39 = sadd.s32 1, %s34
      %p40 = scmp.ge.s32.totalorder %s39, 2
      %s41 = scalar_select %p40, 0, %s39
      %s42 = sadd.s32 1, %s33
      %s43 = scalar_select %p40, %s42, %s33
      %p44 = scmp.ge.s32.totalorder %s43, 2
      %s45 = scalar_select %p44, 0, %s43
      %s46 = smul.u32 %s34, 8
      %s47 = ssub.s32 %s46, 1
      %p48 = scmp.gt.s32.totalorder %s47, 0
      %s49 = scalar_select %p48, %s47, 0
      %s50 = smul.u32 %s41, 8
      %s51 = ssub.s32 %s50, 1
      %p52 = scmp.gt.s32.totalorder %s51, 0
      %s53 = scalar_select %p52, %s51, 0
      %s54 = ssub.s32 %s33, %s45
      %s55 = ssub.s32 %s49, %s53
      %s56 = sor.u32 %s54, %s55
      %p57 = scmp.eq.s32.totalorder %s56, 0
      %s59 = sadd.s32 %s58, 1
      %s60 = scalar_select %p57, %s58, %s59
      %p63 = pneg %p57
      %p64 = scmp.eq.s32.totalorder %s26, 3
      %p65 = por %p63, %p64
      %p66 = scmp.ne.s32.totalorder %s58, %s61
      %p67 = scmp.eq.s32.totalorder %s26, 0
      %p68 = por %p66, %p67
      %p69 = scmp.ne.s32.totalorder %s58, %s61
      %p70 = scmp.eq.s32.totalorder %s31, 3
      %p71 = por %p69, %p70
      %p72 = scmp.ne.s32.totalorder %s61, %s62
      %p73 = scmp.eq.s32.totalorder %s31, 0
      %p74 = por %p72, %p73
      %p75 = scmp.ne.s32.totalorder %s61, %s62
      %p76 = scmp.eq.s32.totalorder %s32, 3
      %p77 = por %p75, %p76
      %p79 = scmp.ne.s32.totalorder %s62, %s78
      %p80 = scmp.eq.s32.totalorder %s32, 0
      %p81 = por %p79, %p80
      %s82 = ssub.s32 %s33, %s45
      %s83 = ssub.s32 %s34, %s41
      %s84 = sor.u32 %s82, %s83
      %p85 = scmp.eq.s32.totalorder %s84, 0
      %s87 = sadd.s32 %s86, 1
      %s88 = scalar_select %p85, %s86, %s87
      %p91 = pneg %p85
      %p92 = scmp.eq.s32.totalorder %s26, 3
      %p93 = por %p91, %p92
      %p94 = scmp.ne.s32.totalorder %s86, %s89
      %p95 = scmp.eq.s32.totalorder %s26, 0
      %p96 = por %p94, %p95
      %p97 = scmp.ne.s32.totalorder %s86, %s89
      %p98 = scmp.eq.s32.totalorder %s31, 3
      %p99 = por %p97, %p98
      %p100 = scmp.ne.s32.totalorder %s89, %s90
      %p101 = scmp.eq.s32.totalorder %s31, 0
      %p102 = por %p100, %p101
      %p103 = scmp.ne.s32.totalorder %s89, %s90
      %p104 = scmp.eq.s32.totalorder %s32, 3
      %p105 = por %p103, %p104
      %p107 = scmp.ne.s32.totalorder %s90, %s106
      %p108 = scmp.eq.s32.totalorder %s32, 0
      %p109 = por %p107, %p108
      %s110 = sadd.s32 %s34, 1
      %s111 = smul.u32 %s110, 8
      %p112 = scmp.lt.s32.totalorder %s111, 15
      %s113 = scalar_select %p112, %s111, 15
      %s114 = sadd.s32 %s41, 1
      %s115 = smul.u32 %s114, 8
      %p116 = scmp.lt.s32.totalorder %s115, 15
      %s117 = scalar_select %p116, %s115, 15
      %s118 = ssub.s32 %s33, %s45
      %s119 = ssub.s32 %s113, %s117
      %s120 = sor.u32 %s118, %s119
      %p121 = scmp.eq.s32.totalorder %s120, 0
      %s123 = sadd.s32 %s122, 1
      %s124 = scalar_select %p121, %s122, %s123
      %p127 = pneg %p121
      %p128 = scmp.eq.s32.totalorder %s26, 3
      %p129 = por %p127, %p128
      %p130 = scmp.ne.s32.totalorder %s122, %s125
      %p131 = scmp.eq.s32.totalorder %s26, 0
      %p132 = por %p130, %p131
      %p133 = scmp.ne.s32.totalorder %s122, %s125
      %p134 = scmp.eq.s32.totalorder %s31, 3
      %p135 = por %p133, %p134
      %p136 = scmp.ne.s32.totalorder %s125, %s126
      %p137 = scmp.eq.s32.totalorder %s31, 0
      %p138 = por %p136, %p137
      %p139 = scmp.ne.s32.totalorder %s125, %s126
      %p140 = scmp.eq.s32.totalorder %s32, 3
      %p141 = por %p139, %p140
      %p143 = scmp.ne.s32.totalorder %s126, %s142
      %p144 = scmp.eq.s32.totalorder %s32, 0
      %p145 = por %p143, %p144
      %s147 = sadd.s32 %s146, 1
      %p150 = scmp.eq.s32.totalorder %s26, 3
      %p151 = scmp.ne.s32.totalorder %s146, %s148
      %p152 = scmp.eq.s32.totalorder %s26, 0
      %p153 = por %p151, %p152
      %p154 = scmp.ne.s32.totalorder %s146, %s148
      %p155 = scmp.eq.s32.totalorder %s31, 3
      %p156 = por %p154, %p155
      %p157 = scmp.ne.s32.totalorder %s148, %s149
      %p158 = scmp.eq.s32.totalorder %s31, 0
      %p159 = por %p157, %p158
      %p160 = scmp.ne.s32.totalorder %s148, %s149
      %p161 = scmp.eq.s32.totalorder %s32, 3
      %p162 = por %p160, %p161
      %p164 = scmp.ne.s32.totalorder %s149, %s163
      %p165 = scmp.eq.s32.totalorder %s32, 0
      %p166 = por %p164, %p165
      %s168 = sadd.s32 %s167, 1
      %p171 = scmp.eq.s32.totalorder %s26, 3
      %p172 = scmp.ne.s32.totalorder %s167, %s169
      %p173 = scmp.eq.s32.totalorder %s26, 0
      %p174 = por %p172, %p173
      %p175 = scmp.ne.s32.totalorder %s167, %s169
      %p176 = scmp.eq.s32.totalorder %s31, 3
      %p177 = por %p175, %p176
      %p178 = scmp.ne.s32.totalorder %s169, %s170
      %p179 = scmp.eq.s32.totalorder %s31, 0
      %p180 = por %p178, %p179
      %p181 = scmp.ne.s32.totalorder %s169, %s170
      %p182 = scmp.eq.s32.totalorder %s32, 3
      %p183 = por %p181, %p182
      %p185 = scmp.ne.s32.totalorder %s170, %s184
      %p186 = scmp.eq.s32.totalorder %s32, 0
      %p187 = por %p185, %p186
      %s189 = sadd.s32 %s188, 1
      %p192 = scmp.eq.s32.totalorder %s26, 3
      %p193 = scmp.ne.s32.totalorder %s188, %s190
      %p194 = scmp.eq.s32.totalorder %s26, 0
      %p195 = por %p193, %p194
      %p196 = scmp.ne.s32.totalorder %s188, %s190
      %p197 = scmp.eq.s32.totalorder %s31, 3
      %p198 = por %p196, %p197
      %p199 = scmp.ne.s32.totalorder %s190, %s191
      %p200 = scmp.eq.s32.totalorder %s31, 0
      %p201 = por %p199, %p200
      %p202 = scmp.ne.s32.totalorder %s190, %s191
      %p203 = scmp.eq.s32.totalorder %s32, 3
      %p204 = por %p202, %p203
      %p206 = scmp.ne.s32.totalorder %s191, %s205
      %p207 = scmp.eq.s32.totalorder %s32, 0
      %p208 = por %p206, %p207
      %s210 = sadd.s32 %s209, 1
      %p213 = scmp.eq.s32.totalorder %s26, 3
      %p214 = scmp.ne.s32.totalorder %s209, %s211
      %p215 = scmp.eq.s32.totalorder %s26, 0
      %p216 = por %p214, %p215
      %p217 = scmp.ne.s32.totalorder %s209, %s211
      %p218 = scmp.eq.s32.totalorder %s31, 3
      %p219 = por %p217, %p218
      %p220 = scmp.ne.s32.totalorder %s211, %s212
      %p221 = scmp.eq.s32.totalorder %s31, 0
      %p222 = por %p220, %p221
      %p223 = scmp.ne.s32.totalorder %s211, %s212
      %p224 = scmp.eq.s32.totalorder %s32, 3
      %p225 = por %p223, %p224
      %p227 = scmp.ne.s32.totalorder %s212, %s226
      %p228 = scmp.eq.s32.totalorder %s32, 0
      %p229 = por %p227, %p228
      %s231 = sadd.s32 %s230, 1
      %p234 = scmp.eq.s32.totalorder %s26, 3
      %p235 = scmp.ne.s32.totalorder %s230, %s232
      %p236 = scmp.eq.s32.totalorder %s26, 0
      %p237 = por %p235, %p236
      %p238 = scmp.ne.s32.totalorder %s230, %s232
      %p239 = scmp.eq.s32.totalorder %s31, 3
      %p240 = por %p238, %p239
      %p241 = scmp.ne.s32.totalorder %s232, %s233
      %p242 = scmp.eq.s32.totalorder %s31, 0
      %p243 = por %p241, %p242
      %p244 = scmp.ne.s32.totalorder %s232, %s233
      %p245 = scmp.eq.s32.totalorder %s32, 3
      %p246 = por %p244, %p245
      %p248 = scmp.ne.s32.totalorder %s233, %s247
      %p249 = scmp.eq.s32.totalorder %s32, 0
      %p250 = por %p248, %p249
      %s252 = sadd.s32 %s251, 1
      %p255 = scmp.eq.s32.totalorder %s26, 3
      %p256 = scmp.ne.s32.totalorder %s251, %s253
      %p257 = scmp.eq.s32.totalorder %s26, 0
      %p258 = por %p256, %p257
      %p259 = scmp.ne.s32.totalorder %s251, %s253
      %p260 = scmp.eq.s32.totalorder %s31, 3
      %p261 = por %p259, %p260
      %p262 = scmp.ne.s32.totalorder %s253, %s254
      %p263 = scmp.eq.s32.totalorder %s31, 0
      %p264 = por %p262, %p263
      %p265 = scmp.ne.s32.totalorder %s253, %s254
      %p266 = scmp.eq.s32.totalorder %s32, 3
      %p267 = por %p265, %p266
      %p269 = scmp.ne.s32.totalorder %s254, %s268
      %p270 = scmp.eq.s32.totalorder %s32, 0
      %p271 = por %p269, %p270
      %s273 = sadd.s32 %s272, 1
      %p276 = scmp.eq.s32.totalorder %s26, 3
      %p277 = scmp.ne.s32.totalorder %s272, %s274
      %p278 = scmp.eq.s32.totalorder %s26, 0
      %p279 = por %p277, %p278
      %p280 = scmp.ne.s32.totalorder %s272, %s274
      %p281 = scmp.eq.s32.totalorder %s31, 3
      %p282 = por %p280, %p281
      %p283 = scmp.ne.s32.totalorder %s274, %s275
      %p284 = scmp.eq.s32.totalorder %s31, 0
      %p285 = por %p283, %p284
      %p286 = scmp.ne.s32.totalorder %s274, %s275
      %p287 = scmp.eq.s32.totalorder %s32, 3
      %p288 = por %p286, %p287
      %p290 = scmp.ne.s32.totalorder %s275, %s289
      %p291 = scmp.eq.s32.totalorder %s32, 0
      %p292 = por %p290, %p291
      %s294 = sadd.s32 %s293, 1
      %p297 = scmp.eq.s32.totalorder %s26, 3
      %p298 = scmp.ne.s32.totalorder %s293, %s295
      %p299 = scmp.eq.s32.totalorder %s26, 0
      %p300 = por %p298, %p299
      %p301 = scmp.ne.s32.totalorder %s293, %s295
      %p302 = scmp.eq.s32.totalorder %s31, 3
      %p303 = por %p301, %p302
      %p304 = scmp.ne.s32.totalorder %s295, %s296
      %p305 = scmp.eq.s32.totalorder %s31, 0
      %p306 = por %p304, %p305
      %p307 = scmp.ne.s32.totalorder %s295, %s296
      %p308 = scmp.eq.s32.totalorder %s32, 3
      %p309 = por %p307, %p308
      %p311 = scmp.ne.s32.totalorder %s296, %s310
      %p312 = scmp.eq.s32.totalorder %s32, 0
      %p313 = por %p311, %p312
      %s314 = ssub.s32 %s33, %s45
      %s315 = ssub.s32 %s34, %s41
      %s316 = sor.u32 %s314, %s315
      %p317 = scmp.eq.s32.totalorder %s316, 0
      %s319 = sadd.s32 %s318, 1
      %s320 = scalar_select %p317, %s318, %s319
      %p323 = pneg %p317
      %p324 = scmp.eq.s32.totalorder %s26, 3
      %p325 = por %p323, %p324
      %p326 = scmp.ne.s32.totalorder %s318, %s321
      %p327 = scmp.eq.s32.totalorder %s26, 0
      %p328 = por %p326, %p327
      %p329 = scmp.ne.s32.totalorder %s318, %s321
      %p330 = scmp.eq.s32.totalorder %s31, 3
      %p331 = por %p329, %p330
      %p332 = scmp.ne.s32.totalorder %s321, %s322
      %p333 = scmp.eq.s32.totalorder %s31, 0
      %p334 = por %p332, %p333
      %p335 = scmp.ne.s32.totalorder %s321, %s322
      %p336 = scmp.eq.s32.totalorder %s32, 3
      %p337 = por %p335, %p336
      %p339 = scmp.ne.s32.totalorder %s322, %s338
      %p340 = scmp.eq.s32.totalorder %s32, 0
      %p341 = por %p339, %p340
      %p342 = scmp.le.s32.totalorder 1, %s26
      %p343 = scmp.lt.s32.totalorder %s26, 5
      %p344 = pnand %p342, %p343
      %p345 = pneg %p344
      // Predicated region
      $region9: #{tpu_custom_call.1} parent=5 // pred_check
        _
      $region10: #{tpu_custom_call.1} parent=5 // pred_check_branch
        %347 = sbr.rel (%p344) target = $region12
      $region11: #{tpu_custom_call.1} parent=5 // pred_region
        %s348 = ssub.s32 %s26, 1
        // Predicated region
        $region13: #{tpu_custom_call.1} parent=11 // pred_check
          %p349 = pneg %p159
        $region14: #{tpu_custom_call.1} parent=11 // pred_check_branch
          %351 = sbr.rel (%p349) target = $region16
        $region15: #{tpu_custom_call.1} parent=11 // pred_region
          _
        $region16: #{tpu_custom_call.1} parent=11 // pred_fallthru
          _
        // Predicated region
        $region17: #{tpu_custom_call.1} parent=11 // pred_check
          %p352 = pneg %p180
        $region18: #{tpu_custom_call.1} parent=11 // pred_check_branch
          %354 = sbr.rel (%p352) target = $region20
        $region19: #{tpu_custom_call.1} parent=11 // pred_region
          _
        $region20: #{tpu_custom_call.1} parent=11 // pred_fallthru
          _
        // Predicated region
        $region21: #{tpu_custom_call.1} parent=11 // pred_check
          %p355 = pneg %p201
        $region22: #{tpu_custom_call.1} parent=11 // pred_check_branch
          %357 = sbr.rel (%p355) target = $region24
        $region23: #{tpu_custom_call.1} parent=11 // pred_region
          _
        $region24: #{tpu_custom_call.1} parent=11 // pred_fallthru
          _
        // Predicated region
        $region25: #{tpu_custom_call.1} parent=11 // pred_check
          %p358 = pneg %p222
        $region26: #{tpu_custom_call.1} parent=11 // pred_check_branch
          %360 = sbr.rel (%p358) target = $region28
        $region27: #{tpu_custom_call.1} parent=11 // pred_region
          _
        $region28: #{tpu_custom_call.1} parent=11 // pred_fallthru
          _
        // Predicated region
        $region29: #{tpu_custom_call.1} parent=11 // pred_check
          %p361 = pneg %p243
        $region30: #{tpu_custom_call.1} parent=11 // pred_check_branch
          %363 = sbr.rel (%p361) target = $region32
        $region31: #{tpu_custom_call.1} parent=11 // pred_region
          _
        $region32: #{tpu_custom_call.1} parent=11 // pred_fallthru
          _
        // Predicated region
        $region33: #{tpu_custom_call.1} parent=11 // pred_check
          %p364 = pneg %p264
        $region34: #{tpu_custom_call.1} parent=11 // pred_check_branch
          %366 = sbr.rel (%p364) target = $region36
        $region35: #{tpu_custom_call.1} parent=11 // pred_region
          _
        $region36: #{tpu_custom_call.1} parent=11 // pred_fallthru
          _
        // Predicated region
        $region37: #{tpu_custom_call.1} parent=11 // pred_check
          %p367 = pneg %p285
        $region38: #{tpu_custom_call.1} parent=11 // pred_check_branch
          %369 = sbr.rel (%p367) target = $region40
        $region39: #{tpu_custom_call.1} parent=11 // pred_region
          _
        $region40: #{tpu_custom_call.1} parent=11 // pred_fallthru
          _
        // Predicated region
        $region41: #{tpu_custom_call.1} parent=11 // pred_check
          %p370 = pneg %p306
        $region42: #{tpu_custom_call.1} parent=11 // pred_check_branch
          %372 = sbr.rel (%p370) target = $region44
        $region43: #{tpu_custom_call.1} parent=11 // pred_region
          _
        $region44: #{tpu_custom_call.1} parent=11 // pred_fallthru
          _
      $region12: #{tpu_custom_call.1} parent=5 // pred_fallthru
        _
      %p373 = scmp.lt.s32.totalorder %s26, 4
      // Predicated region
      $region45: #{tpu_custom_call.1} parent=5 // pred_check
        %p374 = pneg %p373
      $region46: #{tpu_custom_call.1} parent=5 // pred_check_branch
        %376 = sbr.rel (%p374) target = $region48
      $region47: #{tpu_custom_call.1} parent=5 // pred_region
        // Predicated region
        $region49: #{tpu_custom_call.1} parent=47 // pred_check
          %p377 = pneg %p68
        $region50: #{tpu_custom_call.1} parent=47 // pred_check_branch
          %379 = sbr.rel (%p377) target = $region52
        $region51: #{tpu_custom_call.1} parent=47 // pred_region
          %s380 = sand.u32 %s58, 1
          %s381 = scalar_lea.sflag [#allocation3], %s380
          %s382 = sand.u32 %s58, 1
          %s383 = smul.addr %s382, 16
          %s384 = scalar_lea.vmem [#allocation2], %s383
          %s385 = smul.u32 %s34, 8
          %s386 = ssub.s32 %s385, 1
          %p387 = scmp.gt.s32.totalorder %s386, 0
          %s388 = scalar_select %p387, %s386, 0
          %s390 = ssub.s32 256, 256
          %391 = vsyncadd %s381, %s390
          %s392 = smul.addr %s388, 2
          %s393 = smul.addr %s33, 32
          %s394 = sadd.s32 %s392, %s393
          %s395 = smul.addr %s394, 128
          %s396 = scalar_lea.hbm %s0, %s395
          %s397 = sshll.u32 %s384, 4
          %s398 = int_to_ptr.vmem [resolvable:$true] %s397
          %403 = dma.hbm_to_vmem [thread:$0]  %s396, 256, %s398, %s381, 128, 128, 8
        $region52: #{tpu_custom_call.1} parent=47 // pred_fallthru
          _
        // Predicated region
        $region53: #{tpu_custom_call.1} parent=47 // pred_check
          %p404 = pneg %p96
        $region54: #{tpu_custom_call.1} parent=47 // pred_check_branch
          %406 = sbr.rel (%p404) target = $region56
        $region55: #{tpu_custom_call.1} parent=47 // pred_region
          %s407 = sand.u32 %s26, 1
          %s408 = scalar_lea.sflag [#allocation6], %s407
          %s409 = sand.u32 %s86, 1
          %s410 = smul.addr %s409, 128
          %s411 = scalar_lea.vmem [#allocation5], %s410
          %s412 = smul.u32 8, %s34
          %s414 = ssub.s32 2048, 2048
          %415 = vsyncadd %s408, %s414
          %s416 = smul.addr %s412, 2
          %s417 = smul.addr %s33, 32
          %s418 = sadd.s32 %s416, %s417
          %s419 = smul.addr %s418, 128
          %s420 = scalar_lea.hbm %s1, %s419
          %s421 = sshll.u32 %s411, 4
          %s422 = int_to_ptr.vmem [resolvable:$true] %s421
          %427 = dma.hbm_to_vmem [thread:$0]  %s420, 2048, %s422, %s408, 128, 128, 8
        $region56: #{tpu_custom_call.1} parent=47 // pred_fallthru
          _
        // Predicated region
        $region57: #{tpu_custom_call.1} parent=47 // pred_check
          %p428 = pneg %p132
        $region58: #{tpu_custom_call.1} parent=47 // pred_check_branch
          %430 = sbr.rel (%p428) target = $region60
        $region59: #{tpu_custom_call.1} parent=47 // pred_region
          %s431 = sand.u32 %s26, 1
          %s432 = scalar_lea.sflag [#allocation6], %s431
          %s433 = sand.u32 %s122, 1
          %s434 = smul.addr %s433, 16
          %s435 = scalar_lea.vmem [#allocation7], %s434
          %s436 = sadd.s32 %s34, 1
          %s437 = smul.u32 %s436, 8
          %p438 = scmp.lt.s32.totalorder %s437, 15
          %s439 = scalar_select %p438, %s437, 15
          %s441 = ssub.s32 256, 256
          %442 = vsyncadd %s432, %s441
          %s443 = smul.addr %s439, 2
          %s444 = smul.addr %s33, 32
          %s445 = sadd.s32 %s443, %s444
          %s446 = smul.addr %s445, 128
          %s447 = scalar_lea.hbm %s2, %s446
          %s448 = sshll.u32 %s435, 4
          %s449 = int_to_ptr.vmem [resolvable:$true] %s448
          %454 = dma.hbm_to_vmem [thread:$0]  %s447, 256, %s449, %s432, 128, 128, 8
        $region60: #{tpu_custom_call.1} parent=47 // pred_fallthru
          _
      $region48: #{tpu_custom_call.1} parent=5 // pred_fallthru
        _
      %p455 = scmp.le.s32.totalorder 1, %s26
      %p456 = scmp.lt.s32.totalorder %s26, 5
      %p457 = pnand %p455, %p456
      %p458 = pneg %p457
      // Predicated region
      $region61: #{tpu_custom_call.1} parent=5 // pred_check
        _
      $region62: #{tpu_custom_call.1} parent=5 // pred_check_branch
        %460 = sbr.rel (%p457) target = $region64
      $region63: #{tpu_custom_call.1} parent=5 // pred_region
        %s461 = ssub.s32 %s26, 1
        %s462 = sand.u32 %s61, 1
        %s463 = scalar_lea.sflag [#allocation3], %s462
        %s464 = sand.u32 %s61, 1
        %s465 = smul.addr %s464, 16
        %s466 = scalar_lea.vmem [#allocation2], %s465
        // Predicated region
        $region65: #{tpu_custom_call.1} parent=63 // pred_check
          %p467 = pneg %p74
        $region66: #{tpu_custom_call.1} parent=63 // pred_check_branch
          %469 = sbr.rel (%p467) target = $region68
        $region67: #{tpu_custom_call.1} parent=63 // pred_region
          %470 = dma.done %s463, 256
        $region68: #{tpu_custom_call.1} parent=63 // pred_fallthru
          _
        %s471 = sand.u32 %s31, 1
        %s472 = scalar_lea.sflag [#allocation6], %s471
        %s473 = sand.u32 %s89, 1
        %s474 = smul.addr %s473, 128
        %s475 = scalar_lea.vmem [#allocation5], %s474
        // Predicated region
        $region69: #{tpu_custom_call.1} parent=63 // pred_check
          %p476 = pneg %p102
        $region70: #{tpu_custom_call.1} parent=63 // pred_check_branch
          %478 = sbr.rel (%p476) target = $region72
        $region71: #{tpu_custom_call.1} parent=63 // pred_region
          %479 = dma.done %s472, 2048
        $region72: #{tpu_custom_call.1} parent=63 // pred_fallthru
          _
        %s480 = sand.u32 %s31, 1
        %s481 = scalar_lea.sflag [#allocation6], %s480
        %s482 = sand.u32 %s125, 1
        %s483 = smul.addr %s482, 16
        %s484 = scalar_lea.vmem [#allocation7], %s483
        // Predicated region
        $region73: #{tpu_custom_call.1} parent=63 // pred_check
          %p485 = pneg %p138
        $region74: #{tpu_custom_call.1} parent=63 // pred_check_branch
          %487 = sbr.rel (%p485) target = $region76
        $region75: #{tpu_custom_call.1} parent=63 // pred_region
          %488 = dma.done %s481, 256
        $region76: #{tpu_custom_call.1} parent=63 // pred_fallthru
          _
        %s489 = sand.u32 %s61, 1
        %s490 = scalar_lea.sflag [#allocation3], %s489
        %s491 = sand.u32 %s61, 1
        %s492 = smul.addr %s491, 16
        %s493 = scalar_lea.vmem [#allocation2], %s492
        %p494 = pneg %p74
        %p495 = pneg %p71
        %s496 = sand.u32 %s31, 1
        %s497 = scalar_lea.sflag [#allocation6], %s496
        %s498 = sand.u32 %s89, 1
        %s499 = smul.addr %s498, 128
        %s500 = scalar_lea.vmem [#allocation5], %s499
        %p501 = pneg %p102
        %p502 = pneg %p99
        %s503 = sand.u32 %s31, 1
        %s504 = scalar_lea.sflag [#allocation6], %s503
        %s505 = sand.u32 %s125, 1
        %s506 = smul.addr %s505, 16
        %s507 = scalar_lea.vmem [#allocation7], %s506
        %p508 = pneg %p138
        %p509 = pneg %p135
        %p510 = pneg %p159
        %p511 = pneg %p156
        %p512 = pneg %p180
        %p513 = pneg %p177
        %p514 = pneg %p201
        %p515 = pneg %p198
        %p516 = pneg %p222
        %p517 = pneg %p219
        %p518 = pneg %p243
        %p519 = pneg %p240
        %p520 = pneg %p264
        %p521 = pneg %p261
        %p522 = pneg %p285
        %p523 = pneg %p282
        %p524 = pneg %p306
        %p525 = pneg %p303
        %p526 = pneg %p334
        %p527 = pneg %p331
        %s528 = sand.u32 %s321, 1
        %s529 = scalar_lea.sflag [#allocation4], %s528
        %s530 = sand.u32 %s321, 1
        %s531 = smul.addr %s530, 128
        %s532 = scalar_lea.vmem [#allocation8], %s531
        %s533 = smul.u32 %s36, 8
        %s534 = ssub.s32 %s533, 1
        %p535 = scmp.gt.s32.totalorder %s534, 0
        %s536 = scalar_select %p535, %s534, 0
        %s537 = smul.u32 8, %s36
        %s538 = sadd.s32 %s36, 1
        %s539 = smul.u32 %s538, 8
        %p540 = scmp.lt.s32.totalorder %s539, 15
        %s541 = scalar_select %p540, %s539, 15
        %s542 = smul.u32 8, %s36
        %v543 = vld [vmem:[%s475] sm:$0xff]
        %v544 = vld [vmem:[%s475 + $0x8] sm:$0xff]
        %v545 = vld [vmem:[%s475 + $0x10] sm:$0xff]
        %v546 = vld [vmem:[%s475 + $0x18] sm:$0xff]
        %v547 = vld [vmem:[%s475 + $0x20] sm:$0xff]
        %v548 = vld [vmem:[%s475 + $0x28] sm:$0xff]
        %v549 = vld [vmem:[%s475 + $0x30] sm:$0xff]
        %v550 = vld [vmem:[%s475 + $0x38] sm:$0xff]
        %v551 = vld [vmem:[%s475 + $0x40] sm:$0xff]
        %v552 = vld [vmem:[%s475 + $0x48] sm:$0xff]
        %v553 = vld [vmem:[%s475 + $0x50] sm:$0xff]
        %v554 = vld [vmem:[%s475 + $0x58] sm:$0xff]
        %v555 = vld [vmem:[%s475 + $0x60] sm:$0xff]
        %v556 = vld [vmem:[%s475 + $0x68] sm:$0xff]
        %v557 = vld [vmem:[%s475 + $0x70] sm:$0xff]
        %v558 = vld [vmem:[%s475 + $0x78] sm:$0xff]
        %v559 = vld [vmem:[%s466] sm:$0xff]
        %v560 = vld [vmem:[%s466 + $0x8] sm:$0xff]
        %v561 = vld [vmem:[%s484] sm:$0xff]
        %v562 = vld [vmem:[%s484 + $0x8] sm:$0xff]
        %v563 = vld [vmem:[%s3] sm:$0xff]
        %v564 = vld [vmem:[%s3 + $0x8] sm:$0xff]
        %v565 = vld [vmem:[%s4] sm:$0x1]
        %v567 = vlaneseq
        %v568 = vshrl.u32 %v567, 7
        %v569 = vsub.s32 0, %v568
        %v570 = vrot.slane %v565, %v569
        %vm572 = vcmask 130048
        %v574 = vsel %vm572, %v559, 0
        %v577 = vsel %vm572, %v560, 0
        %v580 = vsel %vm572, %v543, 0
        %v583 = vsel %vm572, %v544, 0
        %v586 = vsel %vm572, %v545, 0
        %v589 = vsel %vm572, %v546, 0
        %v592 = vsel %vm572, %v547, 0
        %v595 = vsel %vm572, %v548, 0
        %v598 = vsel %vm572, %v549, 0
        %v601 = vsel %vm572, %v550, 0
        %v604 = vsel %vm572, %v551, 0
        %v607 = vsel %vm572, %v552, 0
        %v610 = vsel %vm572, %v553, 0
        %v613 = vsel %vm572, %v554, 0
        %v616 = vsel %vm572, %v555, 0
        %v619 = vsel %vm572, %v556, 0
        %v622 = vsel %vm572, %v557, 0
        %v625 = vsel %vm572, %v558, 0
        %v628 = vsel %vm572, %v561, 0
        %v631 = vsel %vm572, %v562, 0
        %633 = vmatprep.subr.mxu0 0.0
        %634 = vmatpush1.msra.mxu0 %v563
        %635 = vmatprep.subr.mxu0 0.0
        %636 = vmatpush1.msra.mxu0 %v564
        %637 = vmatprep.subr.mxu0 0.0
        %638 = vmatpush1.msra.mxu0 0.0
        %639 = vmatprep.subr.mxu0 0.0
        %640 = vmatpush1.msra.mxu0 0.0
        %641 = vmatprep.subr.mxu0 0.0
        %642 = vmatpush1.msra.mxu0 0.0
        %643 = vmatprep.subr.mxu0 0.0
        %644 = vmatpush1.msra.mxu0 0.0
        %645 = vmatprep.subr.mxu0 0.0
        %646 = vmatpush1.msra.mxu0 0.0
        %647 = vmatprep.subr.mxu0 0.0
        %648 = vmatpush1.msra.mxu0 0.0
        %649 = vmatprep.subr.mxu0 0.0
        %650 = vmatpush1.msra.mxu0 0.0
        %651 = vmatprep.subr.mxu0 0.0
        %652 = vmatpush1.msra.mxu0 0.0
        %653 = vmatprep.subr.mxu0 0.0
        %654 = vmatpush1.msra.mxu0 0.0
        %655 = vmatprep.subr.mxu0 0.0
        %656 = vmatpush1.msra.mxu0 0.0
        %657 = vmatprep.subr.mxu0 0.0
        %658 = vmatpush1.msra.mxu0 0.0
        %659 = vmatprep.subr.mxu0 0.0
        %660 = vmatpush1.msra.mxu0 0.0
        %661 = vmatprep.subr.mxu0 0.0
        %662 = vmatpush1.msra.mxu0 0.0
        %663 = vmatprep.subr.mxu0 0.0
        %664 = vmatpush1.msra.mxu0 0.0
        %665 = vmatprep.subr.mxu0 0.0
        %666 = vmatpush1.msra.mxu0 0.0
        %667 = vmatprep.subr.mxu0 0.0
        %668 = vmatpush1.msra.mxu0 0.0
        %669 = vmatprep.subr.mxu0 0.0
        %670 = vmatpush1.msra.mxu0 0.0
        %671 = vmatprep.subr.mxu0 0.0
        %672 = vmatpush1.msra.mxu0 0.0
        %673 = vmatprep.subr.mxu0 0.0
        %674 = vmatpush1.msra.mxu0 0.0
        %675 = vmatprep.subr.mxu0 0.0
        %676 = vmatpush1.msra.mxu0 0.0
        %677 = vmatprep.subr.mxu0 0.0
        %678 = vmatpush1.msra.mxu0 0.0
        %679 = vmatprep.subr.mxu0 0.0
        %680 = vmatpush1.msra.mxu0 0.0
        %681 = vmatprep.subr.mxu0 0.0
        %682 = vmatpush1.msra.mxu0 0.0
        %683 = vmatprep.subr.mxu0 0.0
        %684 = vmatpush1.msra.mxu0 0.0
        %685 = vmatprep.subr.mxu0 0.0
        %686 = vmatpush1.msra.mxu0 0.0
        %687 = vmatprep.subr.mxu0 0.0
        %688 = vmatpush1.msra.mxu0 0.0
        %689 = vmatprep.subr.mxu0 0.0
        %690 = vmatpush1.msra.mxu0 0.0
        %691 = vmatprep.subr.mxu0 0.0
        %692 = vmatpush1.msra.mxu0 0.0
        %693 = vmatprep.subr.mxu0 0.0
        %694 = vmatpush1.msra.mxu0 0.0
        %695 = vmatprep.subr.mxu0 0.0
        %696 = vmatpush1.msra.mxu0 0.0
        %697 = vmatprep.mubr.f32.mxu0 0.0
        %698 = vmatmul.mubr.f32.gmra.mrb[0].mxu0 %v574
        %v699 = vpop.f32.mrb[0].mxu0
        %v700 = vadd.f32 %v570, %v699
        %v701 = vpop.f32.mrb[0].mxu0
        %702 = vmatprep.mubr.f32.mxu0 0.0
        %703 = vmatmul.mubr.f32.gmra.mrb[0].mxu0 %v577
        %v704 = vpop.f32.mrb[0].mxu0
        %v705 = vadd.f32 %v570, %v704
        %v706 = vpop.f32.mrb[0].mxu0
        %707 = vmatprep.mubr.f32.mxu0 0.0
        %708 = vmatmul.mubr.f32.gmra.mrb[0].mxu0 %v580
        %v709 = vpop.f32.mrb[0].mxu0
        %v710 = vadd.f32 %v570, %v709
        %v711 = vpop.f32.mrb[0].mxu0
        %712 = vmatprep.mubr.f32.mxu0 0.0
        %713 = vmatmul.mubr.f32.gmra.mrb[0].mxu0 %v583
        %v714 = vpop.f32.mrb[0].mxu0
        %v715 = vadd.f32 %v570, %v714
        %v716 = vpop.f32.mrb[0].mxu0
        %717 = vmatprep.mubr.f32.mxu0 0.0
        %718 = vmatmul.mubr.f32.gmra.mrb[0].mxu0 %v586
        %v719 = vpop.f32.mrb[0].mxu0
        %v720 = vadd.f32 %v570, %v719
        %v721 = vpop.f32.mrb[0].mxu0
        %722 = vmatprep.mubr.f32.mxu0 0.0
        %723 = vmatmul.mubr.f32.gmra.mrb[0].mxu0 %v589
        %v724 = vpop.f32.mrb[0].mxu0
        %v725 = vadd.f32 %v570, %v724
        %v726 = vpop.f32.mrb[0].mxu0
        %727 = vmatprep.mubr.f32.mxu0 0.0
        %728 = vmatmul.mubr.f32.gmra.mrb[0].mxu0 %v592
        %v729 = vpop.f32.mrb[0].mxu0
        %v730 = vadd.f32 %v570, %v729
        %v731 = vpop.f32.mrb[0].mxu0
        %732 = vmatprep.mubr.f32.mxu0 0.0
        %733 = vmatmul.mubr.f32.gmra.mrb[0].mxu0 %v595
        %v734 = vpop.f32.mrb[0].mxu0
        %v735 = vadd.f32 %v570, %v734
        %v736 = vpop.f32.mrb[0].mxu0
        %737 = vmatprep.mubr.f32.mxu0 0.0
        %738 = vmatmul.mubr.f32.gmra.mrb[0].mxu0 %v598
        %v739 = vpop.f32.mrb[0].mxu0
        %v740 = vadd.f32 %v570, %v739
        %v741 = vpop.f32.mrb[0].mxu0
        %742 = vmatprep.mubr.f32.mxu0 0.0
        %743 = vmatmul.mubr.f32.gmra.mrb[0].mxu0 %v601
        %v744 = vpop.f32.mrb[0].mxu0
        %v745 = vadd.f32 %v570, %v744
        %v746 = vpop.f32.mrb[0].mxu0
        %747 = vmatprep.mubr.f32.mxu0 0.0
        %748 = vmatmul.mubr.f32.gmra.mrb[0].mxu0 %v604
        %v749 = vpop.f32.mrb[0].mxu0
        %v750 = vadd.f32 %v570, %v749
        %v751 = vpop.f32.mrb[0].mxu0
        %752 = vmatprep.mubr.f32.mxu0 0.0
        %753 = vmatmul.mubr.f32.gmra.mrb[0].mxu0 %v607
        %v754 = vpop.f32.mrb[0].mxu0
        %v755 = vadd.f32 %v570, %v754
        %v756 = vpop.f32.mrb[0].mxu0
        %757 = vmatprep.mubr.f32.mxu0 0.0
        %758 = vmatmul.mubr.f32.gmra.mrb[0].mxu0 %v610
        %v759 = vpop.f32.mrb[0].mxu0
        %v760 = vadd.f32 %v570, %v759
        %v761 = vpop.f32.mrb[0].mxu0
        %762 = vmatprep.mubr.f32.mxu0 0.0
        %763 = vmatmul.mubr.f32.gmra.mrb[0].mxu0 %v613
        %v764 = vpop.f32.mrb[0].mxu0
        %v765 = vadd.f32 %v570, %v764
        %v766 = vpop.f32.mrb[0].mxu0
        %767 = vmatprep.mubr.f32.mxu0 0.0
        %768 = vmatmul.mubr.f32.gmra.mrb[0].mxu0 %v616
        %v769 = vpop.f32.mrb[0].mxu0
        %v770 = vadd.f32 %v570, %v769
        %v771 = vpop.f32.mrb[0].mxu0
        %772 = vmatprep.mubr.f32.mxu0 0.0
        %773 = vmatmul.mubr.f32.gmra.mrb[0].mxu0 %v619
        %v774 = vpop.f32.mrb[0].mxu0
        %v775 = vadd.f32 %v570, %v774
        %v776 = vpop.f32.mrb[0].mxu0
        %777 = vmatprep.mubr.f32.mxu0 0.0
        %778 = vmatmul.mubr.f32.gmra.mrb[0].mxu0 %v622
        %v779 = vpop.f32.mrb[0].mxu0
        %v780 = vadd.f32 %v570, %v779
        %v781 = vpop.f32.mrb[0].mxu0
        %782 = vmatprep.mubr.f32.mxu0 0.0
        %783 = vmatmul.mubr.f32.gmra.mrb[0].mxu0 %v625
        %v784 = vpop.f32.mrb[0].mxu0
        %v785 = vadd.f32 %v570, %v784
        %v786 = vpop.f32.mrb[0].mxu0
        %787 = vmatprep.mubr.f32.mxu0 0.0
        %788 = vmatmul.mubr.f32.gmra.mrb[0].mxu0 %v628
        %v789 = vpop.f32.mrb[0].mxu0
        %v790 = vadd.f32 %v570, %v789
        %v791 = vpop.f32.mrb[0].mxu0
        %792 = vmatprep.mubr.f32.mxu0 0.0
        %793 = vmatmul.mubr.f32.gmra.mrb[0].mxu0 %v631
        %v794 = vpop.f32.mrb[0].mxu0
        %v795 = vadd.f32 %v570, %v794
        %v796 = vpop.f32.mrb[0].mxu0
        %797 = vdwg.mxu0
        %v798 = vmax.f32 %v700, 0.0
        %v799 = vmax.f32 %v705, 0.0
        %v800 = vmax.f32 %v710, 0.0
        %v801 = vmax.f32 %v715, 0.0
        %v802 = vmax.f32 %v720, 0.0
        %v803 = vmax.f32 %v725, 0.0
        %v804 = vmax.f32 %v730, 0.0
        %v805 = vmax.f32 %v735, 0.0
        %v806 = vmax.f32 %v740, 0.0
        %v807 = vmax.f32 %v745, 0.0
        %v808 = vmax.f32 %v750, 0.0
        %v809 = vmax.f32 %v755, 0.0
        %v810 = vmax.f32 %v760, 0.0
        %v811 = vmax.f32 %v765, 0.0
        %v812 = vmax.f32 %v770, 0.0
        %v813 = vmax.f32 %v775, 0.0
        %v814 = vmax.f32 %v780, 0.0
        %v815 = vmax.f32 %v785, 0.0
        %v816 = vmax.f32 %v790, 0.0
        %v817 = vmax.f32 %v795, 0.0
        %p818 = scmp.gt.s32.totalorder %s36, 0
        %s819 = sadd.s32 %s36, 1
        %s820 = smul.u32 %s819, 8
        %p821 = scmp.lt.s32.totalorder %s820, 16
        %s822 = scalar_select %p818, 1, 0
        %v823 = vstv %s822
        %vm824 = vcmp.eq.s32.totalorder %v823, 1
        %s825 = scalar_select %p821, 1, 0
        %v826 = vstv %s825
        %vm827 = vcmp.eq.s32.totalorder %v826, 1
        %v828 = vsel %vm824, 1, 0
        %v829 = vsel %vm827, 1, 0
        %v830 = vcvt.s32.f32 %v828
        %v831 = vcvt.s32.f32 1
        %v832 = vcvt.s32.f32 %v829
        %v833 = vmul.f32 %v798, %v830
        %v834 = vmul.f32 %v799, %v830
        %v835 = vmul.f32 %v800, %v831
        %v836 = vmul.f32 %v801, %v831
        %v837 = vmul.f32 %v802, %v831
        %v838 = vmul.f32 %v803, %v831
        %v839 = vmul.f32 %v804, %v831
        %v840 = vmul.f32 %v805, %v831
        %v841 = vmul.f32 %v806, %v831
        %v842 = vmul.f32 %v807, %v831
        %v843 = vmul.f32 %v808, %v831
        %v844 = vmul.f32 %v809, %v831
        %v845 = vmul.f32 %v810, %v831
        %v846 = vmul.f32 %v811, %v831
        %v847 = vmul.f32 %v812, %v831
        %v848 = vmul.f32 %v813, %v831
        %v849 = vmul.f32 %v814, %v831
        %v850 = vmul.f32 %v815, %v831
        %v851 = vmul.f32 %v816, %v832
        %v852 = vmul.f32 %v817, %v832
        %v853 = vlaneseq
        %v854 = vshrl.u32 %v853, 7
        %v855 = vadd.s32 %v854, 8
        %v856 = vadd.s32 %v854, 16
        %v857 = vadd.s32 %v854, 24
        %v858 = vadd.s32 %v854, 32
        %v859 = vadd.s32 %v854, 40
        %v860 = vadd.s32 %v854, 48
        %v861 = vadd.s32 %v854, 56
        %v862 = vadd.s32 %v854, 64
        %v863 = vadd.s32 %v854, 72
        %v864 = vadd.s32 %v854, 80
        %v865 = vadd.s32 %v854, 88
        %v866 = vadd.s32 %v854, 96
        %v867 = vadd.s32 %v854, 104
        %v868 = vadd.s32 %v854, 112
        %v869 = vadd.s32 %v854, 120
        %vm870 = vcmp.lt.s32.totalorder %v854, 0
        %v871 = vsub.s32 0, %v854
        %v872 = vsel %vm870, %v871, %v854
        %v873 = vshrl.u32 %v872, 4
        %v874 = vand.u32 %v872, 15
        %v875 = vsub.s32 0, %v874
        %v876 = vsel %vm870, %v875, %v874
        %vm877 = vcmp.lt.s32.totalorder %v855, 0
        %v878 = vsub.s32 0, %v855
        %v879 = vsel %vm877, %v878, %v855
        %v880 = vshrl.u32 %v879, 4
        %v881 = vand.u32 %v879, 15
        %v882 = vsub.s32 0, %v881
        %v883 = vsel %vm877, %v882, %v881
        %vm884 = vcmp.lt.s32.totalorder %v856, 0
        %v885 = vsub.s32 0, %v856
        %v886 = vsel %vm884, %v885, %v856
        %v887 = vshrl.u32 %v886, 4
        %v888 = vand.u32 %v886, 15
        %v889 = vsub.s32 0, %v888
        %v890 = vsel %vm884, %v889, %v888
        %vm891 = vcmp.lt.s32.totalorder %v857, 0
        %v892 = vsub.s32 0, %v857
        %v893 = vsel %vm891, %v892, %v857
        %v894 = vshrl.u32 %v893, 4
        %v895 = vand.u32 %v893, 15
        %v896 = vsub.s32 0, %v895
        %v897 = vsel %vm891, %v896, %v895
        %vm898 = vcmp.lt.s32.totalorder %v858, 0
        %v899 = vsub.s32 0, %v858
        %v900 = vsel %vm898, %v899, %v858
        %v901 = vshrl.u32 %v900, 4
        %v902 = vand.u32 %v900, 15
        %v903 = vsub.s32 0, %v902
        %v904 = vsel %vm898, %v903, %v902
        %vm905 = vcmp.lt.s32.totalorder %v859, 0
        %v906 = vsub.s32 0, %v859
        %v907 = vsel %vm905, %v906, %v859
        %v908 = vshrl.u32 %v907, 4
        %v909 = vand.u32 %v907, 15
        %v910 = vsub.s32 0, %v909
        %v911 = vsel %vm905, %v910, %v909
        %vm912 = vcmp.lt.s32.totalorder %v860, 0
        %v913 = vsub.s32 0, %v860
        %v914 = vsel %vm912, %v913, %v860
        %v915 = vshrl.u32 %v914, 4
        %v916 = vand.u32 %v914, 15
        %v917 = vsub.s32 0, %v916
        %v918 = vsel %vm912, %v917, %v916
        %vm919 = vcmp.lt.s32.totalorder %v861, 0
        %v920 = vsub.s32 0, %v861
        %v921 = vsel %vm919, %v920, %v861
        %v922 = vshrl.u32 %v921, 4
        %v923 = vand.u32 %v921, 15
        %v924 = vsub.s32 0, %v923
        %v925 = vsel %vm919, %v924, %v923
        %vm926 = vcmp.lt.s32.totalorder %v862, 0
        %v927 = vsub.s32 0, %v862
        %v928 = vsel %vm926, %v927, %v862
        %v929 = vshrl.u32 %v928, 4
        %v930 = vand.u32 %v928, 15
        %v931 = vsub.s32 0, %v930
        %v932 = vsel %vm926, %v931, %v930
        %vm933 = vcmp.lt.s32.totalorder %v863, 0
        %v934 = vsub.s32 0, %v863
        %v935 = vsel %vm933, %v934, %v863
        %v936 = vshrl.u32 %v935, 4
        %v937 = vand.u32 %v935, 15
        %v938 = vsub.s32 0, %v937
        %v939 = vsel %vm933, %v938, %v937
        %vm940 = vcmp.lt.s32.totalorder %v864, 0
        %v941 = vsub.s32 0, %v864
        %v942 = vsel %vm940, %v941, %v864
        %v943 = vshrl.u32 %v942, 4
        %v944 = vand.u32 %v942, 15
        %v945 = vsub.s32 0, %v944
        %v946 = vsel %vm940, %v945, %v944
        %vm947 = vcmp.lt.s32.totalorder %v865, 0
        %v948 = vsub.s32 0, %v865
        %v949 = vsel %vm947, %v948, %v865
        %v950 = vshrl.u32 %v949, 4
        %v951 = vand.u32 %v949, 15
        %v952 = vsub.s32 0, %v951
        %v953 = vsel %vm947, %v952, %v951
        %vm954 = vcmp.lt.s32.totalorder %v866, 0
        %v955 = vsub.s32 0, %v866
        %v956 = vsel %vm954, %v955, %v866
        %v957 = vshrl.u32 %v956, 4
        %v958 = vand.u32 %v956, 15
        %v959 = vsub.s32 0, %v958
        %v960 = vsel %vm954, %v959, %v958
        %vm961 = vcmp.lt.s32.totalorder %v867, 0
        %v962 = vsub.s32 0, %v867
        %v963 = vsel %vm961, %v962, %v867
        %v964 = vshrl.u32 %v963, 4
        %v965 = vand.u32 %v963, 15
        %v966 = vsub.s32 0, %v965
        %v967 = vsel %vm961, %v966, %v965
        %vm968 = vcmp.lt.s32.totalorder %v868, 0
        %v969 = vsub.s32 0, %v868
        %v970 = vsel %vm968, %v969, %v868
        %v971 = vshrl.u32 %v970, 4
        %v972 = vand.u32 %v970, 15
        %v973 = vsub.s32 0, %v972
        %v974 = vsel %vm968, %v973, %v972
        %vm975 = vcmp.lt.s32.totalorder %v869, 0
        %v976 = vsub.s32 0, %v869
        %v977 = vsel %vm975, %v976, %v869
        %v978 = vshrl.u32 %v977, 4
        %v979 = vand.u32 %v977, 15
        %v980 = vsub.s32 0, %v979
        %v981 = vsel %vm975, %v980, %v979
        %vm982 = vcmp.ne.s32.totalorder %v876, 0
        %vm983 = vcmp.ne.s32.totalorder %v883, 0
        %vm984 = vcmp.ne.s32.totalorder %v890, 0
        %vm985 = vcmp.ne.s32.totalorder %v897, 0
        %vm986 = vcmp.ne.s32.totalorder %v904, 0
        %vm987 = vcmp.ne.s32.totalorder %v911, 0
        %vm988 = vcmp.ne.s32.totalorder %v918, 0
        %vm989 = vcmp.ne.s32.totalorder %v925, 0
        %vm990 = vcmp.ne.s32.totalorder %v932, 0
        %vm991 = vcmp.ne.s32.totalorder %v939, 0
        %vm992 = vcmp.ne.s32.totalorder %v946, 0
        %vm993 = vcmp.ne.s32.totalorder %v953, 0
        %vm994 = vcmp.ne.s32.totalorder %v960, 0
        %vm995 = vcmp.ne.s32.totalorder %v967, 0
        %vm996 = vcmp.ne.s32.totalorder %v974, 0
        %vm997 = vcmp.ne.s32.totalorder %v981, 0
        %vm998 = vcmp.lt.s32.totalorder %v876, 0
        %vm999 = vcmp.lt.s32.totalorder %v883, 0
        %vm1000 = vcmp.lt.s32.totalorder %v890, 0
        %vm1001 = vcmp.lt.s32.totalorder %v897, 0
        %vm1002 = vcmp.lt.s32.totalorder %v904, 0
        %vm1003 = vcmp.lt.s32.totalorder %v911, 0
        %vm1004 = vcmp.lt.s32.totalorder %v918, 0
        %vm1005 = vcmp.lt.s32.totalorder %v925, 0
        %vm1006 = vcmp.lt.s32.totalorder %v932, 0
        %vm1007 = vcmp.lt.s32.totalorder %v939, 0
        %vm1008 = vcmp.lt.s32.totalorder %v946, 0
        %vm1009 = vcmp.lt.s32.totalorder %v953, 0
        %vm1010 = vcmp.lt.s32.totalorder %v960, 0
        %vm1011 = vcmp.lt.s32.totalorder %v967, 0
        %vm1012 = vcmp.lt.s32.totalorder %v974, 0
        %vm1013 = vcmp.lt.s32.totalorder %v981, 0
        %vm1014 = vmand %vm998, %vm982
        %vm1015 = vmand %vm999, %vm983
        %vm1016 = vmand %vm1000, %vm984
        %vm1017 = vmand %vm1001, %vm985
        %vm1018 = vmand %vm1002, %vm986
        %vm1019 = vmand %vm1003, %vm987
        %vm1020 = vmand %vm1004, %vm988
        %vm1021 = vmand %vm1005, %vm989
        %vm1022 = vmand %vm1006, %vm990
        %vm1023 = vmand %vm1007, %vm991
        %vm1024 = vmand %vm1008, %vm992
        %vm1025 = vmand %vm1009, %vm993
        %vm1026 = vmand %vm1010, %vm994
        %vm1027 = vmand %vm1011, %vm995
        %vm1028 = vmand %vm1012, %vm996
        %vm1029 = vmand %vm1013, %vm997
        %v1030 = vadd.s32 %v876, 16
        %v1031 = vadd.s32 %v883, 16
        %v1032 = vadd.s32 %v890, 16
        %v1033 = vadd.s32 %v897, 16
        %v1034 = vadd.s32 %v904, 16
        %v1035 = vadd.s32 %v911, 16
        %v1036 = vadd.s32 %v918, 16
        %v1037 = vadd.s32 %v925, 16
        %v1038 = vadd.s32 %v932, 16
        %v1039 = vadd.s32 %v939, 16
        %v1040 = vadd.s32 %v946, 16
        %v1041 = vadd.s32 %v953, 16
        %v1042 = vadd.s32 %v960, 16
        %v1043 = vadd.s32 %v967, 16
        %v1044 = vadd.s32 %v974, 16
        %v1045 = vadd.s32 %v981, 16
        %v1046 = vsel %vm1014, %v1030, %v876
        %v1047 = vsel %vm1015, %v1031, %v883
        %v1048 = vsel %vm1016, %v1032, %v890
        %v1049 = vsel %vm1017, %v1033, %v897
        %v1050 = vsel %vm1018, %v1034, %v904
        %v1051 = vsel %vm1019, %v1035, %v911
        %v1052 = vsel %vm1020, %v1036, %v918
        %v1053 = vsel %vm1021, %v1037, %v925
        %v1054 = vsel %vm1022, %v1038, %v932
        %v1055 = vsel %vm1023, %v1039, %v939
        %v1056 = vsel %vm1024, %v1040, %v946
        %v1057 = vsel %vm1025, %v1041, %v953
        %v1058 = vsel %vm1026, %v1042, %v960
        %v1059 = vsel %vm1027, %v1043, %v967
        %v1060 = vsel %vm1028, %v1044, %v974
        %v1061 = vsel %vm1029, %v1045, %v981
        %v1062 = vrot.slane %v833, 7
        %v1063 = vrot.slane %v834, 7
        %v1064 = vrot.slane %v835, 7
        %v1065 = vrot.slane %v836, 7
        %v1066 = vrot.slane %v837, 7
        %v1067 = vrot.slane %v838, 7
        %v1068 = vrot.slane %v839, 7
        %v1069 = vrot.slane %v840, 7
        %v1070 = vrot.slane %v841, 7
        %v1071 = vrot.slane %v842, 7
        %v1072 = vrot.slane %v843, 7
        %v1073 = vrot.slane %v844, 7
        %v1074 = vrot.slane %v845, 7
        %v1075 = vrot.slane %v846, 7
        %v1076 = vrot.slane %v847, 7
        %v1077 = vrot.slane %v848, 7
        %vm1078 = vcmp.lt.s32.totalorder %v854, 1
        %v1079 = vsel %vm1078, %v1076, %v1077
        %v1080 = vsel %vm1078, %v1075, %v1076
        %v1081 = vsel %vm1078, %v1074, %v1075
        %v1082 = vsel %vm1078, %v1073, %v1074
        %v1083 = vsel %vm1078, %v1072, %v1073
        %v1084 = vsel %vm1078, %v1071, %v1072
        %v1085 = vsel %vm1078, %v1070, %v1071
        %v1086 = vsel %vm1078, %v1069, %v1070
        %v1087 = vsel %vm1078, %v1068, %v1069
        %v1088 = vsel %vm1078, %v1067, %v1068
        %v1089 = vsel %vm1078, %v1066, %v1067
        %v1090 = vsel %vm1078, %v1065, %v1066
        %v1091 = vsel %vm1078, %v1064, %v1065
        %v1092 = vsel %vm1078, %v1063, %v1064
        %v1093 = vsel %vm1078, %v1062, %v1063
        %v1094 = vsel %vm1078, %v1077, %v1062
        %vm1095 = vcmp.ne.s32.totalorder %v1046, 0
        %vm1096 = vcmp.ne.s32.totalorder %v1047, 0
        %vm1097 = vcmp.ne.s32.totalorder %v1048, 0
        %vm1098 = vcmp.ne.s32.totalorder %v1049, 0
        %vm1099 = vcmp.ne.s32.totalorder %v1050, 0
        %vm1100 = vcmp.ne.s32.totalorder %v1051, 0
        %vm1101 = vcmp.ne.s32.totalorder %v1052, 0
        %vm1102 = vcmp.ne.s32.totalorder %v1053, 0
        %vm1103 = vcmp.ne.s32.totalorder %v1054, 0
        %vm1104 = vcmp.ne.s32.totalorder %v1055, 0
        %vm1105 = vcmp.ne.s32.totalorder %v1056, 0
        %vm1106 = vcmp.ne.s32.totalorder %v1057, 0
        %vm1107 = vcmp.ne.s32.totalorder %v1058, 0
        %vm1108 = vcmp.ne.s32.totalorder %v1059, 0
        %vm1109 = vcmp.ne.s32.totalorder %v1060, 0
        %vm1110 = vcmp.ne.s32.totalorder %v1061, 0
        %v1111 = vsel %vm1095, 1, 0
        %v1112 = vsel %vm1096, 1, 0
        %v1113 = vsel %vm1097, 1, 0
        %v1114 = vsel %vm1098, 1, 0
        %v1115 = vsel %vm1099, 1, 0
        %v1116 = vsel %vm1100, 1, 0
        %v1117 = vsel %vm1101, 1, 0
        %v1118 = vsel %vm1102, 1, 0
        %v1119 = vsel %vm1103, 1, 0
        %v1120 = vsel %vm1104, 1, 0
        %v1121 = vsel %vm1105, 1, 0
        %v1122 = vsel %vm1106, 1, 0
        %v1123 = vsel %vm1107, 1, 0
        %v1124 = vsel %vm1108, 1, 0
        %v1125 = vsel %vm1109, 1, 0
        %v1126 = vsel %vm1110, 1, 0
        %vm1127 = vcmp.eq.s32.totalorder %v1111, 1
        %vm1128 = vcmp.eq.s32.totalorder %v1112, 1
        %vm1129 = vcmp.eq.s32.totalorder %v1113, 1
        %vm1130 = vcmp.eq.s32.totalorder %v1114, 1
        %vm1131 = vcmp.eq.s32.totalorder %v1115, 1
        %vm1132 = vcmp.eq.s32.totalorder %v1116, 1
        %vm1133 = vcmp.eq.s32.totalorder %v1117, 1
        %vm1134 = vcmp.eq.s32.totalorder %v1118, 1
        %vm1135 = vcmp.eq.s32.totalorder %v1119, 1
        %vm1136 = vcmp.eq.s32.totalorder %v1120, 1
        %vm1137 = vcmp.eq.s32.totalorder %v1121, 1
        %vm1138 = vcmp.eq.s32.totalorder %v1122, 1
        %vm1139 = vcmp.eq.s32.totalorder %v1123, 1
        %vm1140 = vcmp.eq.s32.totalorder %v1124, 1
        %vm1141 = vcmp.eq.s32.totalorder %v1125, 1
        %vm1142 = vcmp.eq.s32.totalorder %v1126, 1
        %v1143 = vsel %vm1127, %v1094, 0.0
        %v1144 = vsel %vm1128, %v1093, 0.0
        %v1145 = vsel %vm1129, %v1092, 0.0
        %v1146 = vsel %vm1130, %v1091, 0.0
        %v1147 = vsel %vm1131, %v1090, 0.0
        %v1148 = vsel %vm1132, %v1089, 0.0
        %v1149 = vsel %vm1133, %v1088, 0.0
        %v1150 = vsel %vm1134, %v1087, 0.0
        %v1151 = vsel %vm1135, %v1086, 0.0
        %v1152 = vsel %vm1136, %v1085, 0.0
        %v1153 = vsel %vm1137, %v1084, 0.0
        %v1154 = vsel %vm1138, %v1083, 0.0
        %v1155 = vsel %vm1139, %v1082, 0.0
        %v1156 = vsel %vm1140, %v1081, 0.0
        %v1157 = vsel %vm1141, %v1080, 0.0
        %v1158 = vsel %vm1142, %v1079, 0.0
        %v1159 = vld [vmem:[%s5] sm:$0xff]
        %s1160 = scalar_lea.vmem %s5, 8
        %v1161 = vld [vmem:[%s1160] sm:$0xff]
        %vm1162 = vcmask 64512
        %v1164 = vsel %vm1162, %v833, 0
        %v1167 = vsel %vm1162, %v834, 0
        %v1170 = vsel %vm1162, %v835, 0
        %v1173 = vsel %vm1162, %v836, 0
        %v1176 = vsel %vm1162, %v837, 0
        %v1179 = vsel %vm1162, %v838, 0
        %v1182 = vsel %vm1162, %v839, 0
        %v1185 = vsel %vm1162, %v840, 0
        %v1188 = vsel %vm1162, %v841, 0
        %v1191 = vsel %vm1162, %v842, 0
        %v1194 = vsel %vm1162, %v843, 0
        %v1197 = vsel %vm1162, %v844, 0
        %v1200 = vsel %vm1162, %v845, 0
        %v1203 = vsel %vm1162, %v846, 0
        %v1206 = vsel %vm1162, %v847, 0
        %v1209 = vsel %vm1162, %v848, 0
        %1211 = vmatprep.subr.mxu0 0.0
        %1212 = vmatpush1.msra.mxu0 %v1161
        %1213 = vmatprep.subr.mxu0 0.0
        %1214 = vmatpush1.msra.mxu0 0.0
        %1215 = vmatprep.subr.mxu0 0.0
        %1216 = vmatpush1.msra.mxu0 0.0
        %1217 = vmatprep.subr.mxu0 0.0
        %1218 = vmatpush1.msra.mxu0 0.0
        %1219 = vmatprep.subr.mxu0 0.0
        %1220 = vmatpush1.msra.mxu0 0.0
        %1221 = vmatprep.subr.mxu0 0.0
        %1222 = vmatpush1.msra.mxu0 0.0
        %1223 = vmatprep.subr.mxu0 0.0
        %1224 = vmatpush1.msra.mxu0 0.0
        %1225 = vmatprep.subr.mxu0 0.0
        %1226 = vmatpush1.msra.mxu0 0.0
        %1227 = vmatprep.subr.mxu0 0.0
        %1228 = vmatpush1.msra.mxu0 0.0
        %1229 = vmatprep.subr.mxu0 0.0
        %1230 = vmatpush1.msra.mxu0 0.0
        %1231 = vmatprep.subr.mxu0 0.0
        %1232 = vmatpush1.msra.mxu0 0.0
        %1233 = vmatprep.subr.mxu0 0.0
        %1234 = vmatpush1.msra.mxu0 0.0
        %1235 = vmatprep.subr.mxu0 0.0
        %1236 = vmatpush1.msra.mxu0 0.0
        %1237 = vmatprep.subr.mxu0 0.0
        %1238 = vmatpush1.msra.mxu0 0.0
        %1239 = vmatprep.subr.mxu0 0.0
        %1240 = vmatpush1.msra.mxu0 0.0
        %1241 = vmatprep.subr.mxu0 0.0
        %1242 = vmatpush1.msra.mxu0 0.0
        %1243 = vmatprep.subr.mxu0 0.0
        %1244 = vmatpush1.msra.mxu0 0.0
        %1245 = vmatprep.subr.mxu0 0.0
        %1246 = vmatpush1.msra.mxu0 0.0
        %1247 = vmatprep.subr.mxu0 0.0
        %1248 = vmatpush1.msra.mxu0 0.0
        %1249 = vmatprep.subr.mxu0 0.0
        %1250 = vmatpush1.msra.mxu0 0.0
        %1251 = vmatprep.subr.mxu0 0.0
        %1252 = vmatpush1.msra.mxu0 0.0
        %1253 = vmatprep.subr.mxu0 0.0
        %1254 = vmatpush1.msra.mxu0 0.0
        %1255 = vmatprep.subr.mxu0 0.0
        %1256 = vmatpush1.msra.mxu0 0.0
        %1257 = vmatprep.subr.mxu0 0.0
        %1258 = vmatpush1.msra.mxu0 0.0
        %1259 = vmatprep.subr.mxu0 0.0
        %1260 = vmatpush1.msra.mxu0 0.0
        %1261 = vmatprep.subr.mxu0 0.0
        %1262 = vmatpush1.msra.mxu0 0.0
        %1263 = vmatprep.subr.mxu0 0.0
        %1264 = vmatpush1.msra.mxu0 0.0
        %1265 = vmatprep.subr.mxu0 0.0
        %1266 = vmatpush1.msra.mxu0 0.0
        %1267 = vmatprep.subr.mxu0 0.0
        %1268 = vmatpush1.msra.mxu0 0.0
        %1269 = vmatprep.subr.mxu0 0.0
        %1270 = vmatpush1.msra.mxu0 0.0
        %1271 = vmatprep.subr.mxu0 0.0
        %1272 = vmatpush1.msra.mxu0 0.0
        %1273 = vmatprep.subr.mxu0 0.0
        %1274 = vmatpush1.msra.mxu0 0.0
        %1275 = vmatprep.mubr.f32.mxu0 0.0
        %1276 = vmatmul.mubr.f32.gmra.mrb[0].mxu0 %v1164
        %v1277 = vpop.f32.mrb[0].mxu0
        %v1278 = vadd.f32 0.0, %v1277
        %v1279 = vpop.f32.mrb[0].mxu0
        %1280 = vmatprep.mubr.f32.mxu0 0.0
        %1281 = vmatmul.mubr.f32.gmra.mrb[0].mxu0 %v1167
        %v1282 = vpop.f32.mrb[0].mxu0
        %v1283 = vadd.f32 0.0, %v1282
        %v1284 = vpop.f32.mrb[0].mxu0
        %1285 = vmatprep.mubr.f32.mxu0 0.0
        %1286 = vmatmul.mubr.f32.gmra.mrb[0].mxu0 %v1170
        %v1287 = vpop.f32.mrb[0].mxu0
        %v1288 = vadd.f32 0.0, %v1287
        %v1289 = vpop.f32.mrb[0].mxu0
        %1290 = vmatprep.mubr.f32.mxu0 0.0
        %1291 = vmatmul.mubr.f32.gmra.mrb[0].mxu0 %v1173
        %v1292 = vpop.f32.mrb[0].mxu0
        %v1293 = vadd.f32 0.0, %v1292
        %v1294 = vpop.f32.mrb[0].mxu0
        %1295 = vmatprep.mubr.f32.mxu0 0.0
        %1296 = vmatmul.mubr.f32.gmra.mrb[0].mxu0 %v1176
        %v1297 = vpop.f32.mrb[0].mxu0
        %v1298 = vadd.f32 0.0, %v1297
        %v1299 = vpop.f32.mrb[0].mxu0
        %1300 = vmatprep.mubr.f32.mxu0 0.0
        %1301 = vmatmul.mubr.f32.gmra.mrb[0].mxu0 %v1179
        %v1302 = vpop.f32.mrb[0].mxu0
        %v1303 = vadd.f32 0.0, %v1302
        %v1304 = vpop.f32.mrb[0].mxu0
        %1305 = vmatprep.mubr.f32.mxu0 0.0
        %1306 = vmatmul.mubr.f32.gmra.mrb[0].mxu0 %v1182
        %v1307 = vpop.f32.mrb[0].mxu0
        %v1308 = vadd.f32 0.0, %v1307
        %v1309 = vpop.f32.mrb[0].mxu0
        %1310 = vmatprep.mubr.f32.mxu0 0.0
        %1311 = vmatmul.mubr.f32.gmra.mrb[0].mxu0 %v1185
        %v1312 = vpop.f32.mrb[0].mxu0
        %v1313 = vadd.f32 0.0, %v1312
        %v1314 = vpop.f32.mrb[0].mxu0
        %1315 = vmatprep.mubr.f32.mxu0 0.0
        %1316 = vmatmul.mubr.f32.gmra.mrb[0].mxu0 %v1188
        %v1317 = vpop.f32.mrb[0].mxu0
        %v1318 = vadd.f32 0.0, %v1317
        %v1319 = vpop.f32.mrb[0].mxu0
        %1320 = vmatprep.mubr.f32.mxu0 0.0
        %1321 = vmatmul.mubr.f32.gmra.mrb[0].mxu0 %v1191
        %v1322 = vpop.f32.mrb[0].mxu0
        %v1323 = vadd.f32 0.0, %v1322
        %v1324 = vpop.f32.mrb[0].mxu0
        %1325 = vmatprep.mubr.f32.mxu0 0.0
        %1326 = vmatmul.mubr.f32.gmra.mrb[0].mxu0 %v1194
        %v1327 = vpop.f32.mrb[0].mxu0
        %v1328 = vadd.f32 0.0, %v1327
        %v1329 = vpop.f32.mrb[0].mxu0
        %1330 = vmatprep.mubr.f32.mxu0 0.0
        %1331 = vmatmul.mubr.f32.gmra.mrb[0].mxu0 %v1197
        %v1332 = vpop.f32.mrb[0].mxu0
        %v1333 = vadd.f32 0.0, %v1332
        %v1334 = vpop.f32.mrb[0].mxu0
        %1335 = vmatprep.mubr.f32.mxu0 0.0
        %1336 = vmatmul.mubr.f32.gmra.mrb[0].mxu0 %v1200
        %v1337 = vpop.f32.mrb[0].mxu0
        %v1338 = vadd.f32 0.0, %v1337
        %v1339 = vpop.f32.mrb[0].mxu0
        %1340 = vmatprep.mubr.f32.mxu0 0.0
        %1341 = vmatmul.mubr.f32.gmra.mrb[0].mxu0 %v1203
        %v1342 = vpop.f32.mrb[0].mxu0
        %v1343 = vadd.f32 0.0, %v1342
        %v1344 = vpop.f32.mrb[0].mxu0
        %1345 = vmatprep.mubr.f32.mxu0 0.0
        %1346 = vmatmul.mubr.f32.gmra.mrb[0].mxu0 %v1206
        %v1347 = vpop.f32.mrb[0].mxu0
        %v1348 = vadd.f32 0.0, %v1347
        %v1349 = vpop.f32.mrb[0].mxu0
        %1350 = vmatprep.mubr.f32.mxu0 0.0
        %1351 = vmatmul.mubr.f32.gmra.mrb[0].mxu0 %v1209
        %v1352 = vpop.f32.mrb[0].mxu0
        %v1353 = vadd.f32 0.0, %v1352
        %v1354 = vpop.f32.mrb[0].mxu0
        %1355 = vdwg.mxu0
        %v1357 = vsel %vm1162, %v1143, 0
        %v1360 = vsel %vm1162, %v1144, 0
        %v1363 = vsel %vm1162, %v1145, 0
        %v1366 = vsel %vm1162, %v1146, 0
        %v1369 = vsel %vm1162, %v1147, 0
        %v1372 = vsel %vm1162, %v1148, 0
        %v1375 = vsel %vm1162, %v1149, 0
        %v1378 = vsel %vm1162, %v1150, 0
        %v1381 = vsel %vm1162, %v1151, 0
        %v1384 = vsel %vm1162, %v1152, 0
        %v1387 = vsel %vm1162, %v1153, 0
        %v1390 = vsel %vm1162, %v1154, 0
        %v1393 = vsel %vm1162, %v1155, 0
        %v1396 = vsel %vm1162, %v1156, 0
        %v1399 = vsel %vm1162, %v1157, 0
        %v1402 = vsel %vm1162, %v1158, 0
        %1404 = vmatprep.subr.mxu0 0.0
        %1405 = vmatpush1.msra.mxu0 %v1159
        %1406 = vmatprep.subr.mxu0 0.0
        %1407 = vmatpush1.msra.mxu0 0.0
        %1408 = vmatprep.subr.mxu0 0.0
        %1409 = vmatpush1.msra.mxu0 0.0
        %1410 = vmatprep.subr.mxu0 0.0
        %1411 = vmatpush1.msra.mxu0 0.0
        %1412 = vmatprep.subr.mxu0 0.0
        %1413 = vmatpush1.msra.mxu0 0.0
        %1414 = vmatprep.subr.mxu0 0.0
        %1415 = vmatpush1.msra.mxu0 0.0
        %1416 = vmatprep.subr.mxu0 0.0
        %1417 = vmatpush1.msra.mxu0 0.0
        %1418 = vmatprep.subr.mxu0 0.0
        %1419 = vmatpush1.msra.mxu0 0.0
        %1420 = vmatprep.subr.mxu0 0.0
        %1421 = vmatpush1.msra.mxu0 0.0
        %1422 = vmatprep.subr.mxu0 0.0
        %1423 = vmatpush1.msra.mxu0 0.0
        %1424 = vmatprep.subr.mxu0 0.0
        %1425 = vmatpush1.msra.mxu0 0.0
        %1426 = vmatprep.subr.mxu0 0.0
        %1427 = vmatpush1.msra.mxu0 0.0
        %1428 = vmatprep.subr.mxu0 0.0
        %1429 = vmatpush1.msra.mxu0 0.0
        %1430 = vmatprep.subr.mxu0 0.0
        %1431 = vmatpush1.msra.mxu0 0.0
        %1432 = vmatprep.subr.mxu0 0.0
        %1433 = vmatpush1.msra.mxu0 0.0
        %1434 = vmatprep.subr.mxu0 0.0
        %1435 = vmatpush1.msra.mxu0 0.0
        %1436 = vmatprep.subr.mxu0 0.0
        %1437 = vmatpush1.msra.mxu0 0.0
        %1438 = vmatprep.subr.mxu0 0.0
        %1439 = vmatpush1.msra.mxu0 0.0
        %1440 = vmatprep.subr.mxu0 0.0
        %1441 = vmatpush1.msra.mxu0 0.0
        %1442 = vmatprep.subr.mxu0 0.0
        %1443 = vmatpush1.msra.mxu0 0.0
        %1444 = vmatprep.subr.mxu0 0.0
        %1445 = vmatpush1.msra.mxu0 0.0
        %1446 = vmatprep.subr.mxu0 0.0
        %1447 = vmatpush1.msra.mxu0 0.0
        %1448 = vmatprep.subr.mxu0 0.0
        %1449 = vmatpush1.msra.mxu0 0.0
        %1450 = vmatprep.subr.mxu0 0.0
        %1451 = vmatpush1.msra.mxu0 0.0
        %1452 = vmatprep.subr.mxu0 0.0
        %1453 = vmatpush1.msra.mxu0 0.0
        %1454 = vmatprep.subr.mxu0 0.0
        %1455 = vmatpush1.msra.mxu0 0.0
        %1456 = vmatprep.subr.mxu0 0.0
        %1457 = vmatpush1.msra.mxu0 0.0
        %1458 = vmatprep.subr.mxu0 0.0
        %1459 = vmatpush1.msra.mxu0 0.0
        %1460 = vmatprep.subr.mxu0 0.0
        %1461 = vmatpush1.msra.mxu0 0.0
        %1462 = vmatprep.subr.mxu0 0.0
        %1463 = vmatpush1.msra.mxu0 0.0
        %1464 = vmatprep.subr.mxu0 0.0
        %1465 = vmatpush1.msra.mxu0 0.0
        %1466 = vmatprep.subr.mxu0 0.0
        %1467 = vmatpush1.msra.mxu0 0.0
        %1468 = vmatprep.mubr.f32.mxu0 0.0
        %1469 = vmatmul.mubr.f32.gmra.mrb[0].mxu0 %v1357
        %v1470 = vpop.f32.mrb[0].mxu0
        %v1471 = vadd.f32 %v1278, %v1470
        %v1472 = vpop.f32.mrb[0].mxu0
        %1473 = vmatprep.mubr.f32.mxu0 0.0
        %1474 = vmatmul.mubr.f32.gmra.mrb[0].mxu0 %v1360
        %v1475 = vpop.f32.mrb[0].mxu0
        %v1476 = vadd.f32 %v1283, %v1475
        %v1477 = vpop.f32.mrb[0].mxu0
        %1478 = vmatprep.mubr.f32.mxu0 0.0
        %1479 = vmatmul.mubr.f32.gmra.mrb[0].mxu0 %v1363
        %v1480 = vpop.f32.mrb[0].mxu0
        %v1481 = vadd.f32 %v1288, %v1480
        %v1482 = vpop.f32.mrb[0].mxu0
        %1483 = vmatprep.mubr.f32.mxu0 0.0
        %1484 = vmatmul.mubr.f32.gmra.mrb[0].mxu0 %v1366
        %v1485 = vpop.f32.mrb[0].mxu0
        %v1486 = vadd.f32 %v1293, %v1485
        %v1487 = vpop.f32.mrb[0].mxu0
        %1488 = vmatprep.mubr.f32.mxu0 0.0
        %1489 = vmatmul.mubr.f32.gmra.mrb[0].mxu0 %v1369
        %v1490 = vpop.f32.mrb[0].mxu0
        %v1491 = vadd.f32 %v1298, %v1490
        %v1492 = vpop.f32.mrb[0].mxu0
        %1493 = vmatprep.mubr.f32.mxu0 0.0
        %1494 = vmatmul.mubr.f32.gmra.mrb[0].mxu0 %v1372
        %v1495 = vpop.f32.mrb[0].mxu0
        %v1496 = vadd.f32 %v1303, %v1495
        %v1497 = vpop.f32.mrb[0].mxu0
        %1498 = vmatprep.mubr.f32.mxu0 0.0
        %1499 = vmatmul.mubr.f32.gmra.mrb[0].mxu0 %v1375
        %v1500 = vpop.f32.mrb[0].mxu0
        %v1501 = vadd.f32 %v1308, %v1500
        %v1502 = vpop.f32.mrb[0].mxu0
        %1503 = vmatprep.mubr.f32.mxu0 0.0
        %1504 = vmatmul.mubr.f32.gmra.mrb[0].mxu0 %v1378
        %v1505 = vpop.f32.mrb[0].mxu0
        %v1506 = vadd.f32 %v1313, %v1505
        %v1507 = vpop.f32.mrb[0].mxu0
        %1508 = vmatprep.mubr.f32.mxu0 0.0
        %1509 = vmatmul.mubr.f32.gmra.mrb[0].mxu0 %v1381
        %v1510 = vpop.f32.mrb[0].mxu0
        %v1511 = vadd.f32 %v1318, %v1510
        %v1512 = vpop.f32.mrb[0].mxu0
        %1513 = vmatprep.mubr.f32.mxu0 0.0
        %1514 = vmatmul.mubr.f32.gmra.mrb[0].mxu0 %v1384
        %v1515 = vpop.f32.mrb[0].mxu0
        %v1516 = vadd.f32 %v1323, %v1515
        %v1517 = vpop.f32.mrb[0].mxu0
        %1518 = vmatprep.mubr.f32.mxu0 0.0
        %1519 = vmatmul.mubr.f32.gmra.mrb[0].mxu0 %v1387
        %v1520 = vpop.f32.mrb[0].mxu0
        %v1521 = vadd.f32 %v1328, %v1520
        %v1522 = vpop.f32.mrb[0].mxu0
        %1523 = vmatprep.mubr.f32.mxu0 0.0
        %1524 = vmatmul.mubr.f32.gmra.mrb[0].mxu0 %v1390
        %v1525 = vpop.f32.mrb[0].mxu0
        %v1526 = vadd.f32 %v1333, %v1525
        %v1527 = vpop.f32.mrb[0].mxu0
        %1528 = vmatprep.mubr.f32.mxu0 0.0
        %1529 = vmatmul.mubr.f32.gmra.mrb[0].mxu0 %v1393
        %v1530 = vpop.f32.mrb[0].mxu0
        %v1531 = vadd.f32 %v1338, %v1530
        %v1532 = vpop.f32.mrb[0].mxu0
        %1533 = vmatprep.mubr.f32.mxu0 0.0
        %1534 = vmatmul.mubr.f32.gmra.mrb[0].mxu0 %v1396
        %v1535 = vpop.f32.mrb[0].mxu0
        %v1536 = vadd.f32 %v1343, %v1535
        %v1537 = vpop.f32.mrb[0].mxu0
        %1538 = vmatprep.mubr.f32.mxu0 0.0
        %1539 = vmatmul.mubr.f32.gmra.mrb[0].mxu0 %v1399
        %v1540 = vpop.f32.mrb[0].mxu0
        %v1541 = vadd.f32 %v1348, %v1540
        %v1542 = vpop.f32.mrb[0].mxu0
        %1543 = vmatprep.mubr.f32.mxu0 0.0
        %1544 = vmatmul.mubr.f32.gmra.mrb[0].mxu0 %v1402
        %v1545 = vpop.f32.mrb[0].mxu0
        %v1546 = vadd.f32 %v1353, %v1545
        %v1547 = vpop.f32.mrb[0].mxu0
        %1548 = vdwg.mxu0
        %v1549 = vrot.slane %v833, 1
        %v1550 = vrot.slane %v834, 1
        %v1551 = vrot.slane %v835, 1
        %v1552 = vrot.slane %v836, 1
        %v1553 = vrot.slane %v837, 1
        %v1554 = vrot.slane %v838, 1
        %v1555 = vrot.slane %v839, 1
        %v1556 = vrot.slane %v840, 1
        %v1557 = vrot.slane %v841, 1
        %v1558 = vrot.slane %v842, 1
        %v1559 = vrot.slane %v843, 1
        %v1560 = vrot.slane %v844, 1
        %v1561 = vrot.slane %v845, 1
        %v1562 = vrot.slane %v846, 1
        %v1563 = vrot.slane %v847, 1
        %v1564 = vrot.slane %v848, 1
        %vm1565 = vcmp.lt.s32.totalorder %v854, 7
        %v1566 = vsel %vm1565, %v1563, %v1564
        %v1567 = vsel %vm1565, %v1562, %v1563
        %v1568 = vsel %vm1565, %v1561, %v1562
        %v1569 = vsel %vm1565, %v1560, %v1561
        %v1570 = vsel %vm1565, %v1559, %v1560
        %v1571 = vsel %vm1565, %v1558, %v1559
        %v1572 = vsel %vm1565, %v1557, %v1558
        %v1573 = vsel %vm1565, %v1556, %v1557
        %v1574 = vsel %vm1565, %v1555, %v1556
        %v1575 = vsel %vm1565, %v1554, %v1555
        %v1576 = vsel %vm1565, %v1553, %v1554
        %v1577 = vsel %vm1565, %v1552, %v1553
        %v1578 = vsel %vm1565, %v1551, %v1552
        %v1579 = vsel %vm1565, %v1550, %v1551
        %v1580 = vsel %vm1565, %v1549, %v1550
        %v1581 = vsel %vm1565, %v1564, %v1549
        %vm1582 = vcmp.ne.s32.totalorder %v1046, 15
        %vm1583 = vcmp.ne.s32.totalorder %v1047, 15
        %vm1584 = vcmp.ne.s32.totalorder %v1048, 15
        %vm1585 = vcmp.ne.s32.totalorder %v1049, 15
        %vm1586 = vcmp.ne.s32.totalorder %v1050, 15
        %vm1587 = vcmp.ne.s32.totalorder %v1051, 15
        %vm1588 = vcmp.ne.s32.totalorder %v1052, 15
        %vm1589 = vcmp.ne.s32.totalorder %v1053, 15
        %vm1590 = vcmp.ne.s32.totalorder %v1054, 15
        %vm1591 = vcmp.ne.s32.totalorder %v1055, 15
        %vm1592 = vcmp.ne.s32.totalorder %v1056, 15
        %vm1593 = vcmp.ne.s32.totalorder %v1057, 15
        %vm1594 = vcmp.ne.s32.totalorder %v1058, 15
        %vm1595 = vcmp.ne.s32.totalorder %v1059, 15
        %vm1596 = vcmp.ne.s32.totalorder %v1060, 15
        %vm1597 = vcmp.ne.s32.totalorder %v1061, 15
        %v1598 = vsel %vm1582, 1, 0
        %v1599 = vsel %vm1583, 1, 0
        %v1600 = vsel %vm1584, 1, 0
        %v1601 = vsel %vm1585, 1, 0
        %v1602 = vsel %vm1586, 1, 0
        %v1603 = vsel %vm1587, 1, 0
        %v1604 = vsel %vm1588, 1, 0
        %v1605 = vsel %vm1589, 1, 0
        %v1606 = vsel %vm1590, 1, 0
        %v1607 = vsel %vm1591, 1, 0
        %v1608 = vsel %vm1592, 1, 0
        %v1609 = vsel %vm1593, 1, 0
        %v1610 = vsel %vm1594, 1, 0
        %v1611 = vsel %vm1595, 1, 0
        %v1612 = vsel %vm1596, 1, 0
        %v1613 = vsel %vm1597, 1, 0
        %vm1614 = vcmp.eq.s32.totalorder %v1598, 1
        %vm1615 = vcmp.eq.s32.totalorder %v1599, 1
        %vm1616 = vcmp.eq.s32.totalorder %v1600, 1
        %vm1617 = vcmp.eq.s32.totalorder %v1601, 1
        %vm1618 = vcmp.eq.s32.totalorder %v1602, 1
        %vm1619 = vcmp.eq.s32.totalorder %v1603, 1
        %vm1620 = vcmp.eq.s32.totalorder %v1604, 1
        %vm1621 = vcmp.eq.s32.totalorder %v1605, 1
        %vm1622 = vcmp.eq.s32.totalorder %v1606, 1
        %vm1623 = vcmp.eq.s32.totalorder %v1607, 1
        %vm1624 = vcmp.eq.s32.totalorder %v1608, 1
        %vm1625 = vcmp.eq.s32.totalorder %v1609, 1
        %vm1626 = vcmp.eq.s32.totalorder %v1610, 1
        %vm1627 = vcmp.eq.s32.totalorder %v1611, 1
        %vm1628 = vcmp.eq.s32.totalorder %v1612, 1
        %vm1629 = vcmp.eq.s32.totalorder %v1613, 1
        %v1630 = vsel %vm1614, %v1580, 0.0
        %v1631 = vsel %vm1615, %v1579, 0.0
        %v1632 = vsel %vm1616, %v1578, 0.0
        %v1633 = vsel %vm1617, %v1577, 0.0
        %v1634 = vsel %vm1618, %v1576, 0.0
        %v1635 = vsel %vm1619, %v1575, 0.0
        %v1636 = vsel %vm1620, %v1574, 0.0
        %v1637 = vsel %vm1621, %v1573, 0.0
        %v1638 = vsel %vm1622, %v1572, 0.0
        %v1639 = vsel %vm1623, %v1571, 0.0
        %v1640 = vsel %vm1624, %v1570, 0.0
        %v1641 = vsel %vm1625, %v1569, 0.0
        %v1642 = vsel %vm1626, %v1568, 0.0
        %v1643 = vsel %vm1627, %v1567, 0.0
        %v1644 = vsel %vm1628, %v1566, 0.0
        %v1645 = vsel %vm1629, %v1581, 0.0
        %s1646 = scalar_lea.vmem %s5, 16
        %v1647 = vld [vmem:[%s1646] sm:$0xff]
        %v1649 = vsel %vm1162, %v1630, 0
        %v1652 = vsel %vm1162, %v1631, 0
        %v1655 = vsel %vm1162, %v1632, 0
        %v1658 = vsel %vm1162, %v1633, 0
        %v1661 = vsel %vm1162, %v1634, 0
        %v1664 = vsel %vm1162, %v1635, 0
        %v1667 = vsel %vm1162, %v1636, 0
        %v1670 = vsel %vm1162, %v1637, 0
        %v1673 = vsel %vm1162, %v1638, 0
        %v1676 = vsel %vm1162, %v1639, 0
        %v1679 = vsel %vm1162, %v1640, 0
        %v1682 = vsel %vm1162, %v1641, 0
        %v1685 = vsel %vm1162, %v1642, 0
        %v1688 = vsel %vm1162, %v1643, 0
        %v1691 = vsel %vm1162, %v1644, 0
        %v1694 = vsel %vm1162, %v1645, 0
        %1696 = vmatprep.subr.mxu0 0.0
        %1697 = vmatpush1.msra.mxu0 %v1647
        %1698 = vmatprep.subr.mxu0 0.0
        %1699 = vmatpush1.msra.mxu0 0.0
        %1700 = vmatprep.subr.mxu0 0.0
        %1701 = vmatpush1.msra.mxu0 0.0
        %1702 = vmatprep.subr.mxu0 0.0
        %1703 = vmatpush1.msra.mxu0 0.0
        %1704 = vmatprep.subr.mxu0 0.0
        %1705 = vmatpush1.msra.mxu0 0.0
        %1706 = vmatprep.subr.mxu0 0.0
        %1707 = vmatpush1.msra.mxu0 0.0
        %1708 = vmatprep.subr.mxu0 0.0
        %1709 = vmatpush1.msra.mxu0 0.0
        %1710 = vmatprep.subr.mxu0 0.0
        %1711 = vmatpush1.msra.mxu0 0.0
        %1712 = vmatprep.subr.mxu0 0.0
        %1713 = vmatpush1.msra.mxu0 0.0
        %1714 = vmatprep.subr.mxu0 0.0
        %1715 = vmatpush1.msra.mxu0 0.0
        %1716 = vmatprep.subr.mxu0 0.0
        %1717 = vmatpush1.msra.mxu0 0.0
        %1718 = vmatprep.subr.mxu0 0.0
        %1719 = vmatpush1.msra.mxu0 0.0
        %1720 = vmatprep.subr.mxu0 0.0
        %1721 = vmatpush1.msra.mxu0 0.0
        %1722 = vmatprep.subr.mxu0 0.0
        %1723 = vmatpush1.msra.mxu0 0.0
        %1724 = vmatprep.subr.mxu0 0.0
        %1725 = vmatpush1.msra.mxu0 0.0
        %1726 = vmatprep.subr.mxu0 0.0
        %1727 = vmatpush1.msra.mxu0 0.0
        %1728 = vmatprep.subr.mxu0 0.0
        %1729 = vmatpush1.msra.mxu0 0.0
        %1730 = vmatprep.subr.mxu0 0.0
        %1731 = vmatpush1.msra.mxu0 0.0
        %1732 = vmatprep.subr.mxu0 0.0
        %1733 = vmatpush1.msra.mxu0 0.0
        %1734 = vmatprep.subr.mxu0 0.0
        %1735 = vmatpush1.msra.mxu0 0.0
        %1736 = vmatprep.subr.mxu0 0.0
        %1737 = vmatpush1.msra.mxu0 0.0
        %1738 = vmatprep.subr.mxu0 0.0
        %1739 = vmatpush1.msra.mxu0 0.0
        %1740 = vmatprep.subr.mxu0 0.0
        %1741 = vmatpush1.msra.mxu0 0.0
        %1742 = vmatprep.subr.mxu0 0.0
        %1743 = vmatpush1.msra.mxu0 0.0
        %1744 = vmatprep.subr.mxu0 0.0
        %1745 = vmatpush1.msra.mxu0 0.0
        %1746 = vmatprep.subr.mxu0 0.0
        %1747 = vmatpush1.msra.mxu0 0.0
        %1748 = vmatprep.subr.mxu0 0.0
        %1749 = vmatpush1.msra.mxu0 0.0
        %1750 = vmatprep.subr.mxu0 0.0
        %1751 = vmatpush1.msra.mxu0 0.0
        %1752 = vmatprep.subr.mxu0 0.0
        %1753 = vmatpush1.msra.mxu0 0.0
        %1754 = vmatprep.subr.mxu0 0.0
        %1755 = vmatpush1.msra.mxu0 0.0
        %1756 = vmatprep.subr.mxu0 0.0
        %1757 = vmatpush1.msra.mxu0 0.0
        %1758 = vmatprep.subr.mxu0 0.0
        %1759 = vmatpush1.msra.mxu0 0.0
        %1760 = vmatprep.mubr.f32.mxu0 0.0
        %1761 = vmatmul.mubr.f32.gmra.mrb[0].mxu0 %v1649
        %v1762 = vpop.f32.mrb[0].mxu0
        %v1763 = vadd.f32 0.0, %v1762
        %v1764 = vpop.f32.mrb[0].mxu0
        %1765 = vmatprep.mubr.f32.mxu0 0.0
        %1766 = vmatmul.mubr.f32.gmra.mrb[0].mxu0 %v1652
        %v1767 = vpop.f32.mrb[0].mxu0
        %v1768 = vadd.f32 0.0, %v1767
        %v1769 = vpop.f32.mrb[0].mxu0
        %1770 = vmatprep.mubr.f32.mxu0 0.0
        %1771 = vmatmul.mubr.f32.gmra.mrb[0].mxu0 %v1655
        %v1772 = vpop.f32.mrb[0].mxu0
        %v1773 = vadd.f32 0.0, %v1772
        %v1774 = vpop.f32.mrb[0].mxu0
        %1775 = vmatprep.mubr.f32.mxu0 0.0
        %1776 = vmatmul.mubr.f32.gmra.mrb[0].mxu0 %v1658
        %v1777 = vpop.f32.mrb[0].mxu0
        %v1778 = vadd.f32 0.0, %v1777
        %v1779 = vpop.f32.mrb[0].mxu0
        %1780 = vmatprep.mubr.f32.mxu0 0.0
        %1781 = vmatmul.mubr.f32.gmra.mrb[0].mxu0 %v1661
        %v1782 = vpop.f32.mrb[0].mxu0
        %v1783 = vadd.f32 0.0, %v1782
        %v1784 = vpop.f32.mrb[0].mxu0
        %1785 = vmatprep.mubr.f32.mxu0 0.0
        %1786 = vmatmul.mubr.f32.gmra.mrb[0].mxu0 %v1664
        %v1787 = vpop.f32.mrb[0].mxu0
        %v1788 = vadd.f32 0.0, %v1787
        %v1789 = vpop.f32.mrb[0].mxu0
        %1790 = vmatprep.mubr.f32.mxu0 0.0
        %1791 = vmatmul.mubr.f32.gmra.mrb[0].mxu0 %v1667
        %v1792 = vpop.f32.mrb[0].mxu0
        %v1793 = vadd.f32 0.0, %v1792
        %v1794 = vpop.f32.mrb[0].mxu0
        %1795 = vmatprep.mubr.f32.mxu0 0.0
        %1796 = vmatmul.mubr.f32.gmra.mrb[0].mxu0 %v1670
        %v1797 = vpop.f32.mrb[0].mxu0
        %v1798 = vadd.f32 0.0, %v1797
        %v1799 = vpop.f32.mrb[0].mxu0
        %1800 = vmatprep.mubr.f32.mxu0 0.0
        %1801 = vmatmul.mubr.f32.gmra.mrb[0].mxu0 %v1673
        %v1802 = vpop.f32.mrb[0].mxu0
        %v1803 = vadd.f32 0.0, %v1802
        %v1804 = vpop.f32.mrb[0].mxu0
        %1805 = vmatprep.mubr.f32.mxu0 0.0
        %1806 = vmatmul.mubr.f32.gmra.mrb[0].mxu0 %v1676
        %v1807 = vpop.f32.mrb[0].mxu0
        %v1808 = vadd.f32 0.0, %v1807
        %v1809 = vpop.f32.mrb[0].mxu0
        %1810 = vmatprep.mubr.f32.mxu0 0.0
        %1811 = vmatmul.mubr.f32.gmra.mrb[0].mxu0 %v1679
        %v1812 = vpop.f32.mrb[0].mxu0
        %v1813 = vadd.f32 0.0, %v1812
        %v1814 = vpop.f32.mrb[0].mxu0
        %1815 = vmatprep.mubr.f32.mxu0 0.0
        %1816 = vmatmul.mubr.f32.gmra.mrb[0].mxu0 %v1682
        %v1817 = vpop.f32.mrb[0].mxu0
        %v1818 = vadd.f32 0.0, %v1817
        %v1819 = vpop.f32.mrb[0].mxu0
        %1820 = vmatprep.mubr.f32.mxu0 0.0
        %1821 = vmatmul.mubr.f32.gmra.mrb[0].mxu0 %v1685
        %v1822 = vpop.f32.mrb[0].mxu0
        %v1823 = vadd.f32 0.0, %v1822
        %v1824 = vpop.f32.mrb[0].mxu0
        %1825 = vmatprep.mubr.f32.mxu0 0.0
        %1826 = vmatmul.mubr.f32.gmra.mrb[0].mxu0 %v1688
        %v1827 = vpop.f32.mrb[0].mxu0
        %v1828 = vadd.f32 0.0, %v1827
        %v1829 = vpop.f32.mrb[0].mxu0
        %1830 = vmatprep.mubr.f32.mxu0 0.0
        %1831 = vmatmul.mubr.f32.gmra.mrb[0].mxu0 %v1691
        %v1832 = vpop.f32.mrb[0].mxu0
        %v1833 = vadd.f32 0.0, %v1832
        %v1834 = vpop.f32.mrb[0].mxu0
        %1835 = vmatprep.mubr.f32.mxu0 0.0
        %1836 = vmatmul.mubr.f32.gmra.mrb[0].mxu0 %v1694
        %v1837 = vpop.f32.mrb[0].mxu0
        %v1838 = vadd.f32 0.0, %v1837
        %v1839 = vpop.f32.mrb[0].mxu0
        %1840 = vdwg.mxu0
        %v1841 = vadd.f32 %v1471, %v1763
        %v1842 = vadd.f32 %v1476, %v1768
        %v1843 = vadd.f32 %v1481, %v1773
        %v1844 = vadd.f32 %v1486, %v1778
        %v1845 = vadd.f32 %v1491, %v1783
        %v1846 = vadd.f32 %v1496, %v1788
        %v1847 = vadd.f32 %v1501, %v1793
        %v1848 = vadd.f32 %v1506, %v1798
        %v1849 = vadd.f32 %v1511, %v1803
        %v1850 = vadd.f32 %v1516, %v1808
        %v1851 = vadd.f32 %v1521, %v1813
        %v1852 = vadd.f32 %v1526, %v1818
        %v1853 = vadd.f32 %v1531, %v1823
        %v1854 = vadd.f32 %v1536, %v1828
        %v1855 = vadd.f32 %v1541, %v1833
        %v1856 = vadd.f32 %v1546, %v1838
        %v1857 = vrot.slane %v849, 7
        %v1858 = vrot.slane %v850, 7
        %v1859 = vsel %vm1078, %v1857, %v1858
        %v1860 = vsel %vm1078, %v1077, %v1857
        %v1861 = vsel %vm1078, %v1858, %v1064
        %v1862 = vsel %vm1127, %v1861, 0.0
        %v1863 = vsel %vm1128, %v1091, 0.0
        %v1864 = vsel %vm1129, %v1090, 0.0
        %v1865 = vsel %vm1130, %v1089, 0.0
        %v1866 = vsel %vm1131, %v1088, 0.0
        %v1867 = vsel %vm1132, %v1087, 0.0
        %v1868 = vsel %vm1133, %v1086, 0.0
        %v1869 = vsel %vm1134, %v1085, 0.0
        %v1870 = vsel %vm1135, %v1084, 0.0
        %v1871 = vsel %vm1136, %v1083, 0.0
        %v1872 = vsel %vm1137, %v1082, 0.0
        %v1873 = vsel %vm1138, %v1081, 0.0
        %v1874 = vsel %vm1139, %v1080, 0.0
        %v1875 = vsel %vm1140, %v1079, 0.0
        %v1876 = vsel %vm1141, %v1860, 0.0
        %v1877 = vsel %vm1142, %v1859, 0.0
        %s1878 = scalar_lea.vmem %s5, 24
        %v1879 = vld [vmem:[%s1878] sm:$0xff]
        %v1881 = vsel %vm1162, %v1862, 0
        %v1884 = vsel %vm1162, %v1863, 0
        %v1887 = vsel %vm1162, %v1864, 0
        %v1890 = vsel %vm1162, %v1865, 0
        %v1893 = vsel %vm1162, %v1866, 0
        %v1896 = vsel %vm1162, %v1867, 0
        %v1899 = vsel %vm1162, %v1868, 0
        %v1902 = vsel %vm1162, %v1869, 0
        %v1905 = vsel %vm1162, %v1870, 0
        %v1908 = vsel %vm1162, %v1871, 0
        %v1911 = vsel %vm1162, %v1872, 0
        %v1914 = vsel %vm1162, %v1873, 0
        %v1917 = vsel %vm1162, %v1874, 0
        %v1920 = vsel %vm1162, %v1875, 0
        %v1923 = vsel %vm1162, %v1876, 0
        %v1926 = vsel %vm1162, %v1877, 0
        %1928 = vmatprep.subr.mxu0 0.0
        %1929 = vmatpush1.msra.mxu0 %v1879
        %1930 = vmatprep.subr.mxu0 0.0
        %1931 = vmatpush1.msra.mxu0 0.0
        %1932 = vmatprep.subr.mxu0 0.0
        %1933 = vmatpush1.msra.mxu0 0.0
        %1934 = vmatprep.subr.mxu0 0.0
        %1935 = vmatpush1.msra.mxu0 0.0
        %1936 = vmatprep.subr.mxu0 0.0
        %1937 = vmatpush1.msra.mxu0 0.0
        %1938 = vmatprep.subr.mxu0 0.0
        %1939 = vmatpush1.msra.mxu0 0.0
        %1940 = vmatprep.subr.mxu0 0.0
        %1941 = vmatpush1.msra.mxu0 0.0
        %1942 = vmatprep.subr.mxu0 0.0
        %1943 = vmatpush1.msra.mxu0 0.0
        %1944 = vmatprep.subr.mxu0 0.0
        %1945 = vmatpush1.msra.mxu0 0.0
        %1946 = vmatprep.subr.mxu0 0.0
        %1947 = vmatpush1.msra.mxu0 0.0
        %1948 = vmatprep.subr.mxu0 0.0
        %1949 = vmatpush1.msra.mxu0 0.0
        %1950 = vmatprep.subr.mxu0 0.0
        %1951 = vmatpush1.msra.mxu0 0.0
        %1952 = vmatprep.subr.mxu0 0.0
        %1953 = vmatpush1.msra.mxu0 0.0
        %1954 = vmatprep.subr.mxu0 0.0
        %1955 = vmatpush1.msra.mxu0 0.0
        %1956 = vmatprep.subr.mxu0 0.0
        %1957 = vmatpush1.msra.mxu0 0.0
        %1958 = vmatprep.subr.mxu0 0.0
        %1959 = vmatpush1.msra.mxu0 0.0
        %1960 = vmatprep.subr.mxu0 0.0
        %1961 = vmatpush1.msra.mxu0 0.0
        %1962 = vmatprep.subr.mxu0 0.0
        %1963 = vmatpush1.msra.mxu0 0.0
        %1964 = vmatprep.subr.mxu0 0.0
        %1965 = vmatpush1.msra.mxu0 0.0
        %1966 = vmatprep.subr.mxu0 0.0
        %1967 = vmatpush1.msra.mxu0 0.0
        %1968 = vmatprep.subr.mxu0 0.0
        %1969 = vmatpush1.msra.mxu0 0.0
        %1970 = vmatprep.subr.mxu0 0.0
        %1971 = vmatpush1.msra.mxu0 0.0
        %1972 = vmatprep.subr.mxu0 0.0
        %1973 = vmatpush1.msra.mxu0 0.0
        %1974 = vmatprep.subr.mxu0 0.0
        %1975 = vmatpush1.msra.mxu0 0.0
        %1976 = vmatprep.subr.mxu0 0.0
        %1977 = vmatpush1.msra.mxu0 0.0
        %1978 = vmatprep.subr.mxu0 0.0
        %1979 = vmatpush1.msra.mxu0 0.0
        %1980 = vmatprep.subr.mxu0 0.0
        %1981 = vmatpush1.msra.mxu0 0.0
        %1982 = vmatprep.subr.mxu0 0.0
        %1983 = vmatpush1.msra.mxu0 0.0
        %1984 = vmatprep.subr.mxu0 0.0
        %1985 = vmatpush1.msra.mxu0 0.0
        %1986 = vmatprep.subr.mxu0 0.0
        %1987 = vmatpush1.msra.mxu0 0.0
        %1988 = vmatprep.subr.mxu0 0.0
        %1989 = vmatpush1.msra.mxu0 0.0
        %1990 = vmatprep.subr.mxu0 0.0
        %1991 = vmatpush1.msra.mxu0 0.0
        %1992 = vmatprep.mubr.f32.mxu0 0.0
        %1993 = vmatmul.mubr.f32.gmra.mrb[0].mxu0 %v1881
        %v1994 = vpop.f32.mrb[0].mxu0
        %v1995 = vadd.f32 0.0, %v1994
        %v1996 = vpop.f32.mrb[0].mxu0
        %1997 = vmatprep.mubr.f32.mxu0 0.0
        %1998 = vmatmul.mubr.f32.gmra.mrb[0].mxu0 %v1884
        %v1999 = vpop.f32.mrb[0].mxu0
        %v2000 = vadd.f32 0.0, %v1999
        %v2001 = vpop.f32.mrb[0].mxu0
        %2002 = vmatprep.mubr.f32.mxu0 0.0
        %2003 = vmatmul.mubr.f32.gmra.mrb[0].mxu0 %v1887
        %v2004 = vpop.f32.mrb[0].mxu0
        %v2005 = vadd.f32 0.0, %v2004
        %v2006 = vpop.f32.mrb[0].mxu0
        %2007 = vmatprep.mubr.f32.mxu0 0.0
        %2008 = vmatmul.mubr.f32.gmra.mrb[0].mxu0 %v1890
        %v2009 = vpop.f32.mrb[0].mxu0
        %v2010 = vadd.f32 0.0, %v2009
        %v2011 = vpop.f32.mrb[0].mxu0
        %2012 = vmatprep.mubr.f32.mxu0 0.0
        %2013 = vmatmul.mubr.f32.gmra.mrb[0].mxu0 %v1893
        %v2014 = vpop.f32.mrb[0].mxu0
        %v2015 = vadd.f32 0.0, %v2014
        %v2016 = vpop.f32.mrb[0].mxu0
        %2017 = vmatprep.mubr.f32.mxu0 0.0
        %2018 = vmatmul.mubr.f32.gmra.mrb[0].mxu0 %v1896
        %v2019 = vpop.f32.mrb[0].mxu0
        %v2020 = vadd.f32 0.0, %v2019
        %v2021 = vpop.f32.mrb[0].mxu0
        %2022 = vmatprep.mubr.f32.mxu0 0.0
        %2023 = vmatmul.mubr.f32.gmra.mrb[0].mxu0 %v1899
        %v2024 = vpop.f32.mrb[0].mxu0
        %v2025 = vadd.f32 0.0, %v2024
        %v2026 = vpop.f32.mrb[0].mxu0
        %2027 = vmatprep.mubr.f32.mxu0 0.0
        %2028 = vmatmul.mubr.f32.gmra.mrb[0].mxu0 %v1902
        %v2029 = vpop.f32.mrb[0].mxu0
        %v2030 = vadd.f32 0.0, %v2029
        %v2031 = vpop.f32.mrb[0].mxu0
        %2032 = vmatprep.mubr.f32.mxu0 0.0
        %2033 = vmatmul.mubr.f32.gmra.mrb[0].mxu0 %v1905
        %v2034 = vpop.f32.mrb[0].mxu0
        %v2035 = vadd.f32 0.0, %v2034
        %v2036 = vpop.f32.mrb[0].mxu0
        %2037 = vmatprep.mubr.f32.mxu0 0.0
        %2038 = vmatmul.mubr.f32.gmra.mrb[0].mxu0 %v1908
        %v2039 = vpop.f32.mrb[0].mxu0
        %v2040 = vadd.f32 0.0, %v2039
        %v2041 = vpop.f32.mrb[0].mxu0
        %2042 = vmatprep.mubr.f32.mxu0 0.0
        %2043 = vmatmul.mubr.f32.gmra.mrb[0].mxu0 %v1911
        %v2044 = vpop.f32.mrb[0].mxu0
        %v2045 = vadd.f32 0.0, %v2044
        %v2046 = vpop.f32.mrb[0].mxu0
        %2047 = vmatprep.mubr.f32.mxu0 0.0
        %2048 = vmatmul.mubr.f32.gmra.mrb[0].mxu0 %v1914
        %v2049 = vpop.f32.mrb[0].mxu0
        %v2050 = vadd.f32 0.0, %v2049
        %v2051 = vpop.f32.mrb[0].mxu0
        %2052 = vmatprep.mubr.f32.mxu0 0.0
        %2053 = vmatmul.mubr.f32.gmra.mrb[0].mxu0 %v1917
        %v2054 = vpop.f32.mrb[0].mxu0
        %v2055 = vadd.f32 0.0, %v2054
        %v2056 = vpop.f32.mrb[0].mxu0
        %2057 = vmatprep.mubr.f32.mxu0 0.0
        %2058 = vmatmul.mubr.f32.gmra.mrb[0].mxu0 %v1920
        %v2059 = vpop.f32.mrb[0].mxu0
        %v2060 = vadd.f32 0.0, %v2059
        %v2061 = vpop.f32.mrb[0].mxu0
        %2062 = vmatprep.mubr.f32.mxu0 0.0
        %2063 = vmatmul.mubr.f32.gmra.mrb[0].mxu0 %v1923
        %v2064 = vpop.f32.mrb[0].mxu0
        %v2065 = vadd.f32 0.0, %v2064
        %v2066 = vpop.f32.mrb[0].mxu0
        %2067 = vmatprep.mubr.f32.mxu0 0.0
        %2068 = vmatmul.mubr.f32.gmra.mrb[0].mxu0 %v1926
        %v2069 = vpop.f32.mrb[0].mxu0
        %v2070 = vadd.f32 0.0, %v2069
        %v2071 = vpop.f32.mrb[0].mxu0
        %2072 = vdwg.mxu0
        %v2073 = vadd.f32 %v1841, %v1995
        %v2074 = vadd.f32 %v1842, %v2000
        %v2075 = vadd.f32 %v1843, %v2005
        %v2076 = vadd.f32 %v1844, %v2010
        %v2077 = vadd.f32 %v1845, %v2015
        %v2078 = vadd.f32 %v1846, %v2020
        %v2079 = vadd.f32 %v1847, %v2025
        %v2080 = vadd.f32 %v1848, %v2030
        %v2081 = vadd.f32 %v1849, %v2035
        %v2082 = vadd.f32 %v1850, %v2040
        %v2083 = vadd.f32 %v1851, %v2045
        %v2084 = vadd.f32 %v1852, %v2050
        %v2085 = vadd.f32 %v1853, %v2055
        %v2086 = vadd.f32 %v1854, %v2060
        %v2087 = vadd.f32 %v1855, %v2065
        %v2088 = vadd.f32 %v1856, %v2070
        %s2089 = scalar_lea.vmem %s5, 32
        %v2090 = vld [vmem:[%s2089] sm:$0xff]
        %v2092 = vsel %vm1162, %v849, 0
        %v2095 = vsel %vm1162, %v850, 0
        %2097 = vmatprep.subr.mxu0 0.0
        %2098 = vmatpush1.msra.mxu0 %v2090
        %2099 = vmatprep.subr.mxu0 0.0
        %2100 = vmatpush1.msra.mxu0 0.0
        %2101 = vmatprep.subr.mxu0 0.0
        %2102 = vmatpush1.msra.mxu0 0.0
        %2103 = vmatprep.subr.mxu0 0.0
        %2104 = vmatpush1.msra.mxu0 0.0
        %2105 = vmatprep.subr.mxu0 0.0
        %2106 = vmatpush1.msra.mxu0 0.0
        %2107 = vmatprep.subr.mxu0 0.0
        %2108 = vmatpush1.msra.mxu0 0.0
        %2109 = vmatprep.subr.mxu0 0.0
        %2110 = vmatpush1.msra.mxu0 0.0
        %2111 = vmatprep.subr.mxu0 0.0
        %2112 = vmatpush1.msra.mxu0 0.0
        %2113 = vmatprep.subr.mxu0 0.0
        %2114 = vmatpush1.msra.mxu0 0.0
        %2115 = vmatprep.subr.mxu0 0.0
        %2116 = vmatpush1.msra.mxu0 0.0
        %2117 = vmatprep.subr.mxu0 0.0
        %2118 = vmatpush1.msra.mxu0 0.0
        %2119 = vmatprep.subr.mxu0 0.0
        %2120 = vmatpush1.msra.mxu0 0.0
        %2121 = vmatprep.subr.mxu0 0.0
        %2122 = vmatpush1.msra.mxu0 0.0
        %2123 = vmatprep.subr.mxu0 0.0
        %2124 = vmatpush1.msra.mxu0 0.0
        %2125 = vmatprep.subr.mxu0 0.0
        %2126 = vmatpush1.msra.mxu0 0.0
        %2127 = vmatprep.subr.mxu0 0.0
        %2128 = vmatpush1.msra.mxu0 0.0
        %2129 = vmatprep.subr.mxu0 0.0
        %2130 = vmatpush1.msra.mxu0 0.0
        %2131 = vmatprep.subr.mxu0 0.0
        %2132 = vmatpush1.msra.mxu0 0.0
        %2133 = vmatprep.subr.mxu0 0.0
        %2134 = vmatpush1.msra.mxu0 0.0
        %2135 = vmatprep.subr.mxu0 0.0
        %2136 = vmatpush1.msra.mxu0 0.0
        %2137 = vmatprep.subr.mxu0 0.0
        %2138 = vmatpush1.msra.mxu0 0.0
        %2139 = vmatprep.subr.mxu0 0.0
        %2140 = vmatpush1.msra.mxu0 0.0
        %2141 = vmatprep.subr.mxu0 0.0
        %2142 = vmatpush1.msra.mxu0 0.0
        %2143 = vmatprep.subr.mxu0 0.0
        %2144 = vmatpush1.msra.mxu0 0.0
        %2145 = vmatprep.subr.mxu0 0.0
        %2146 = vmatpush1.msra.mxu0 0.0
        %2147 = vmatprep.subr.mxu0 0.0
        %2148 = vmatpush1.msra.mxu0 0.0
        %2149 = vmatprep.subr.mxu0 0.0
        %2150 = vmatpush1.msra.mxu0 0.0
        %2151 = vmatprep.subr.mxu0 0.0
        %2152 = vmatpush1.msra.mxu0 0.0
        %2153 = vmatprep.subr.mxu0 0.0
        %2154 = vmatpush1.msra.mxu0 0.0
        %2155 = vmatprep.subr.mxu0 0.0
        %2156 = vmatpush1.msra.mxu0 0.0
        %2157 = vmatprep.subr.mxu0 0.0
        %2158 = vmatpush1.msra.mxu0 0.0
        %2159 = vmatprep.subr.mxu0 0.0
        %2160 = vmatpush1.msra.mxu0 0.0
        %2161 = vmatprep.mubr.f32.mxu0 0.0
        %2162 = vmatmul.mubr.f32.gmra.mrb[0].mxu0 %v1170
        %v2163 = vpop.f32.mrb[0].mxu0
        %v2164 = vadd.f32 0.0, %v2163
        %v2165 = vpop.f32.mrb[0].mxu0
        %2166 = vmatprep.mubr.f32.mxu0 0.0
        %2167 = vmatmul.mubr.f32.gmra.mrb[0].mxu0 %v1173
        %v2168 = vpop.f32.mrb[0].mxu0
        %v2169 = vadd.f32 0.0, %v2168
        %v2170 = vpop.f32.mrb[0].mxu0
        %2171 = vmatprep.mubr.f32.mxu0 0.0
        %2172 = vmatmul.mubr.f32.gmra.mrb[0].mxu0 %v1176
        %v2173 = vpop.f32.mrb[0].mxu0
        %v2174 = vadd.f32 0.0, %v2173
        %v2175 = vpop.f32.mrb[0].mxu0
        %2176 = vmatprep.mubr.f32.mxu0 0.0
        %2177 = vmatmul.mubr.f32.gmra.mrb[0].mxu0 %v1179
        %v2178 = vpop.f32.mrb[0].mxu0
        %v2179 = vadd.f32 0.0, %v2178
        %v2180 = vpop.f32.mrb[0].mxu0
        %2181 = vmatprep.mubr.f32.mxu0 0.0
        %2182 = vmatmul.mubr.f32.gmra.mrb[0].mxu0 %v1182
        %v2183 = vpop.f32.mrb[0].mxu0
        %v2184 = vadd.f32 0.0, %v2183
        %v2185 = vpop.f32.mrb[0].mxu0
        %2186 = vmatprep.mubr.f32.mxu0 0.0
        %2187 = vmatmul.mubr.f32.gmra.mrb[0].mxu0 %v1185
        %v2188 = vpop.f32.mrb[0].mxu0
        %v2189 = vadd.f32 0.0, %v2188
        %v2190 = vpop.f32.mrb[0].mxu0
        %2191 = vmatprep.mubr.f32.mxu0 0.0
        %2192 = vmatmul.mubr.f32.gmra.mrb[0].mxu0 %v1188
        %v2193 = vpop.f32.mrb[0].mxu0
        %v2194 = vadd.f32 0.0, %v2193
        %v2195 = vpop.f32.mrb[0].mxu0
        %2196 = vmatprep.mubr.f32.mxu0 0.0
        %2197 = vmatmul.mubr.f32.gmra.mrb[0].mxu0 %v1191
        %v2198 = vpop.f32.mrb[0].mxu0
        %v2199 = vadd.f32 0.0, %v2198
        %v2200 = vpop.f32.mrb[0].mxu0
        %2201 = vmatprep.mubr.f32.mxu0 0.0
        %2202 = vmatmul.mubr.f32.gmra.mrb[0].mxu0 %v1194
        %v2203 = vpop.f32.mrb[0].mxu0
        %v2204 = vadd.f32 0.0, %v2203
        %v2205 = vpop.f32.mrb[0].mxu0
        %2206 = vmatprep.mubr.f32.mxu0 0.0
        %2207 = vmatmul.mubr.f32.gmra.mrb[0].mxu0 %v1197
        %v2208 = vpop.f32.mrb[0].mxu0
        %v2209 = vadd.f32 0.0, %v2208
        %v2210 = vpop.f32.mrb[0].mxu0
        %2211 = vmatprep.mubr.f32.mxu0 0.0
        %2212 = vmatmul.mubr.f32.gmra.mrb[0].mxu0 %v1200
        %v2213 = vpop.f32.mrb[0].mxu0
        %v2214 = vadd.f32 0.0, %v2213
        %v2215 = vpop.f32.mrb[0].mxu0
        %2216 = vmatprep.mubr.f32.mxu0 0.0
        %2217 = vmatmul.mubr.f32.gmra.mrb[0].mxu0 %v1203
        %v2218 = vpop.f32.mrb[0].mxu0
        %v2219 = vadd.f32 0.0, %v2218
        %v2220 = vpop.f32.mrb[0].mxu0
        %2221 = vmatprep.mubr.f32.mxu0 0.0
        %2222 = vmatmul.mubr.f32.gmra.mrb[0].mxu0 %v1206
        %v2223 = vpop.f32.mrb[0].mxu0
        %v2224 = vadd.f32 0.0, %v2223
        %v2225 = vpop.f32.mrb[0].mxu0
        %2226 = vmatprep.mubr.f32.mxu0 0.0
        %2227 = vmatmul.mubr.f32.gmra.mrb[0].mxu0 %v1209
        %v2228 = vpop.f32.mrb[0].mxu0
        %v2229 = vadd.f32 0.0, %v2228
        %v2230 = vpop.f32.mrb[0].mxu0
        %2231 = vmatprep.mubr.f32.mxu0 0.0
        %2232 = vmatmul.mubr.f32.gmra.mrb[0].mxu0 %v2092
        %v2233 = vpop.f32.mrb[0].mxu0
        %v2234 = vadd.f32 0.0, %v2233
        %v2235 = vpop.f32.mrb[0].mxu0
        %2236 = vmatprep.mubr.f32.mxu0 0.0
        %2237 = vmatmul.mubr.f32.gmra.mrb[0].mxu0 %v2095
        %v2238 = vpop.f32.mrb[0].mxu0
        %v2239 = vadd.f32 0.0, %v2238
        %v2240 = vpop.f32.mrb[0].mxu0
        %2241 = vdwg.mxu0
        %v2242 = vadd.f32 %v2073, %v2164
        %v2243 = vadd.f32 %v2074, %v2169
        %v2244 = vadd.f32 %v2075, %v2174
        %v2245 = vadd.f32 %v2076, %v2179
        %v2246 = vadd.f32 %v2077, %v2184
        %v2247 = vadd.f32 %v2078, %v2189
        %v2248 = vadd.f32 %v2079, %v2194
        %v2249 = vadd.f32 %v2080, %v2199
        %v2250 = vadd.f32 %v2081, %v2204
        %v2251 = vadd.f32 %v2082, %v2209
        %v2252 = vadd.f32 %v2083, %v2214
        %v2253 = vadd.f32 %v2084, %v2219
        %v2254 = vadd.f32 %v2085, %v2224
        %v2255 = vadd.f32 %v2086, %v2229
        %v2256 = vadd.f32 %v2087, %v2234
        %v2257 = vadd.f32 %v2088, %v2239
        %v2258 = vrot.slane %v849, 1
        %v2259 = vrot.slane %v850, 1
        %v2260 = vsel %vm1565, %v2258, %v2259
        %v2261 = vsel %vm1565, %v1564, %v2258
        %v2262 = vsel %vm1565, %v2259, %v1551
        %v2263 = vsel %vm1614, %v1578, 0.0
        %v2264 = vsel %vm1615, %v1577, 0.0
        %v2265 = vsel %vm1616, %v1576, 0.0
        %v2266 = vsel %vm1617, %v1575, 0.0
        %v2267 = vsel %vm1618, %v1574, 0.0
        %v2268 = vsel %vm1619, %v1573, 0.0
        %v2269 = vsel %vm1620, %v1572, 0.0
        %v2270 = vsel %vm1621, %v1571, 0.0
        %v2271 = vsel %vm1622, %v1570, 0.0
        %v2272 = vsel %vm1623, %v1569, 0.0
        %v2273 = vsel %vm1624, %v1568, 0.0
        %v2274 = vsel %vm1625, %v1567, 0.0
        %v2275 = vsel %vm1626, %v1566, 0.0
        %v2276 = vsel %vm1627, %v2261, 0.0
        %v2277 = vsel %vm1628, %v2260, 0.0
        %v2278 = vsel %vm1629, %v2262, 0.0
        %s2279 = scalar_lea.vmem %s5, 40
        %v2280 = vld [vmem:[%s2279] sm:$0xff]
        %v2282 = vsel %vm1162, %v2263, 0
        %v2285 = vsel %vm1162, %v2264, 0
        %v2288 = vsel %vm1162, %v2265, 0
        %v2291 = vsel %vm1162, %v2266, 0
        %v2294 = vsel %vm1162, %v2267, 0
        %v2297 = vsel %vm1162, %v2268, 0
        %v2300 = vsel %vm1162, %v2269, 0
        %v2303 = vsel %vm1162, %v2270, 0
        %v2306 = vsel %vm1162, %v2271, 0
        %v2309 = vsel %vm1162, %v2272, 0
        %v2312 = vsel %vm1162, %v2273, 0
        %v2315 = vsel %vm1162, %v2274, 0
        %v2318 = vsel %vm1162, %v2275, 0
        %v2321 = vsel %vm1162, %v2276, 0
        %v2324 = vsel %vm1162, %v2277, 0
        %v2327 = vsel %vm1162, %v2278, 0
        %2329 = vmatprep.subr.mxu0 0.0
        %2330 = vmatpush1.msra.mxu0 %v2280
        %2331 = vmatprep.subr.mxu0 0.0
        %2332 = vmatpush1.msra.mxu0 0.0
        %2333 = vmatprep.subr.mxu0 0.0
        %2334 = vmatpush1.msra.mxu0 0.0
        %2335 = vmatprep.subr.mxu0 0.0
        %2336 = vmatpush1.msra.mxu0 0.0
        %2337 = vmatprep.subr.mxu0 0.0
        %2338 = vmatpush1.msra.mxu0 0.0
        %2339 = vmatprep.subr.mxu0 0.0
        %2340 = vmatpush1.msra.mxu0 0.0
        %2341 = vmatprep.subr.mxu0 0.0
        %2342 = vmatpush1.msra.mxu0 0.0
        %2343 = vmatprep.subr.mxu0 0.0
        %2344 = vmatpush1.msra.mxu0 0.0
        %2345 = vmatprep.subr.mxu0 0.0
        %2346 = vmatpush1.msra.mxu0 0.0
        %2347 = vmatprep.subr.mxu0 0.0
        %2348 = vmatpush1.msra.mxu0 0.0
        %2349 = vmatprep.subr.mxu0 0.0
        %2350 = vmatpush1.msra.mxu0 0.0
        %2351 = vmatprep.subr.mxu0 0.0
        %2352 = vmatpush1.msra.mxu0 0.0
        %2353 = vmatprep.subr.mxu0 0.0
        %2354 = vmatpush1.msra.mxu0 0.0
        %2355 = vmatprep.subr.mxu0 0.0
        %2356 = vmatpush1.msra.mxu0 0.0
        %2357 = vmatprep.subr.mxu0 0.0
        %2358 = vmatpush1.msra.mxu0 0.0
        %2359 = vmatprep.subr.mxu0 0.0
        %2360 = vmatpush1.msra.mxu0 0.0
        %2361 = vmatprep.subr.mxu0 0.0
        %2362 = vmatpush1.msra.mxu0 0.0
        %2363 = vmatprep.subr.mxu0 0.0
        %2364 = vmatpush1.msra.mxu0 0.0
        %2365 = vmatprep.subr.mxu0 0.0
        %2366 = vmatpush1.msra.mxu0 0.0
        %2367 = vmatprep.subr.mxu0 0.0
        %2368 = vmatpush1.msra.mxu0 0.0
        %2369 = vmatprep.subr.mxu0 0.0
        %2370 = vmatpush1.msra.mxu0 0.0
        %2371 = vmatprep.subr.mxu0 0.0
        %2372 = vmatpush1.msra.mxu0 0.0
        %2373 = vmatprep.subr.mxu0 0.0
        %2374 = vmatpush1.msra.mxu0 0.0
        %2375 = vmatprep.subr.mxu0 0.0
        %2376 = vmatpush1.msra.mxu0 0.0
        %2377 = vmatprep.subr.mxu0 0.0
        %2378 = vmatpush1.msra.mxu0 0.0
        %2379 = vmatprep.subr.mxu0 0.0
        %2380 = vmatpush1.msra.mxu0 0.0
        %2381 = vmatprep.subr.mxu0 0.0
        %2382 = vmatpush1.msra.mxu0 0.0
        %2383 = vmatprep.subr.mxu0 0.0
        %2384 = vmatpush1.msra.mxu0 0.0
        %2385 = vmatprep.subr.mxu0 0.0
        %2386 = vmatpush1.msra.mxu0 0.0
        %2387 = vmatprep.subr.mxu0 0.0
        %2388 = vmatpush1.msra.mxu0 0.0
        %2389 = vmatprep.subr.mxu0 0.0
        %2390 = vmatpush1.msra.mxu0 0.0
        %2391 = vmatprep.subr.mxu0 0.0
        %2392 = vmatpush1.msra.mxu0 0.0
        %2393 = vmatprep.mubr.f32.mxu0 0.0
        %2394 = vmatmul.mubr.f32.gmra.mrb[0].mxu0 %v2282
        %v2395 = vpop.f32.mrb[0].mxu0
        %v2396 = vadd.f32 0.0, %v2395
        %v2397 = vpop.f32.mrb[0].mxu0
        %2398 = vmatprep.mubr.f32.mxu0 0.0
        %2399 = vmatmul.mubr.f32.gmra.mrb[0].mxu0 %v2285
        %v2400 = vpop.f32.mrb[0].mxu0
        %v2401 = vadd.f32 0.0, %v2400
        %v2402 = vpop.f32.mrb[0].mxu0
        %2403 = vmatprep.mubr.f32.mxu0 0.0
        %2404 = vmatmul.mubr.f32.gmra.mrb[0].mxu0 %v2288
        %v2405 = vpop.f32.mrb[0].mxu0
        %v2406 = vadd.f32 0.0, %v2405
        %v2407 = vpop.f32.mrb[0].mxu0
        %2408 = vmatprep.mubr.f32.mxu0 0.0
        %2409 = vmatmul.mubr.f32.gmra.mrb[0].mxu0 %v2291
        %v2410 = vpop.f32.mrb[0].mxu0
        %v2411 = vadd.f32 0.0, %v2410
        %v2412 = vpop.f32.mrb[0].mxu0
        %2413 = vmatprep.mubr.f32.mxu0 0.0
        %2414 = vmatmul.mubr.f32.gmra.mrb[0].mxu0 %v2294
        %v2415 = vpop.f32.mrb[0].mxu0
        %v2416 = vadd.f32 0.0, %v2415
        %v2417 = vpop.f32.mrb[0].mxu0
        %2418 = vmatprep.mubr.f32.mxu0 0.0
        %2419 = vmatmul.mubr.f32.gmra.mrb[0].mxu0 %v2297
        %v2420 = vpop.f32.mrb[0].mxu0
        %v2421 = vadd.f32 0.0, %v2420
        %v2422 = vpop.f32.mrb[0].mxu0
        %2423 = vmatprep.mubr.f32.mxu0 0.0
        %2424 = vmatmul.mubr.f32.gmra.mrb[0].mxu0 %v2300
        %v2425 = vpop.f32.mrb[0].mxu0
        %v2426 = vadd.f32 0.0, %v2425
        %v2427 = vpop.f32.mrb[0].mxu0
        %2428 = vmatprep.mubr.f32.mxu0 0.0
        %2429 = vmatmul.mubr.f32.gmra.mrb[0].mxu0 %v2303
        %v2430 = vpop.f32.mrb[0].mxu0
        %v2431 = vadd.f32 0.0, %v2430
        %v2432 = vpop.f32.mrb[0].mxu0
        %2433 = vmatprep.mubr.f32.mxu0 0.0
        %2434 = vmatmul.mubr.f32.gmra.mrb[0].mxu0 %v2306
        %v2435 = vpop.f32.mrb[0].mxu0
        %v2436 = vadd.f32 0.0, %v2435
        %v2437 = vpop.f32.mrb[0].mxu0
        %2438 = vmatprep.mubr.f32.mxu0 0.0
        %2439 = vmatmul.mubr.f32.gmra.mrb[0].mxu0 %v2309
        %v2440 = vpop.f32.mrb[0].mxu0
        %v2441 = vadd.f32 0.0, %v2440
        %v2442 = vpop.f32.mrb[0].mxu0
        %2443 = vmatprep.mubr.f32.mxu0 0.0
        %2444 = vmatmul.mubr.f32.gmra.mrb[0].mxu0 %v2312
        %v2445 = vpop.f32.mrb[0].mxu0
        %v2446 = vadd.f32 0.0, %v2445
        %v2447 = vpop.f32.mrb[0].mxu0
        %2448 = vmatprep.mubr.f32.mxu0 0.0
        %2449 = vmatmul.mubr.f32.gmra.mrb[0].mxu0 %v2315
        %v2450 = vpop.f32.mrb[0].mxu0
        %v2451 = vadd.f32 0.0, %v2450
        %v2452 = vpop.f32.mrb[0].mxu0
        %2453 = vmatprep.mubr.f32.mxu0 0.0
        %2454 = vmatmul.mubr.f32.gmra.mrb[0].mxu0 %v2318
        %v2455 = vpop.f32.mrb[0].mxu0
        %v2456 = vadd.f32 0.0, %v2455
        %v2457 = vpop.f32.mrb[0].mxu0
        %2458 = vmatprep.mubr.f32.mxu0 0.0
        %2459 = vmatmul.mubr.f32.gmra.mrb[0].mxu0 %v2321
        %v2460 = vpop.f32.mrb[0].mxu0
        %v2461 = vadd.f32 0.0, %v2460
        %v2462 = vpop.f32.mrb[0].mxu0
        %2463 = vmatprep.mubr.f32.mxu0 0.0
        %2464 = vmatmul.mubr.f32.gmra.mrb[0].mxu0 %v2324
        %v2465 = vpop.f32.mrb[0].mxu0
        %v2466 = vadd.f32 0.0, %v2465
        %v2467 = vpop.f32.mrb[0].mxu0
        %2468 = vmatprep.mubr.f32.mxu0 0.0
        %2469 = vmatmul.mubr.f32.gmra.mrb[0].mxu0 %v2327
        %v2470 = vpop.f32.mrb[0].mxu0
        %v2471 = vadd.f32 0.0, %v2470
        %v2472 = vpop.f32.mrb[0].mxu0
        %2473 = vdwg.mxu0
        %v2474 = vadd.f32 %v2242, %v2396
        %v2475 = vadd.f32 %v2243, %v2401
        %v2476 = vadd.f32 %v2244, %v2406
        %v2477 = vadd.f32 %v2245, %v2411
        %v2478 = vadd.f32 %v2246, %v2416
        %v2479 = vadd.f32 %v2247, %v2421
        %v2480 = vadd.f32 %v2248, %v2426
        %v2481 = vadd.f32 %v2249, %v2431
        %v2482 = vadd.f32 %v2250, %v2436
        %v2483 = vadd.f32 %v2251, %v2441
        %v2484 = vadd.f32 %v2252, %v2446
        %v2485 = vadd.f32 %v2253, %v2451
        %v2486 = vadd.f32 %v2254, %v2456
        %v2487 = vadd.f32 %v2255, %v2461
        %v2488 = vadd.f32 %v2256, %v2466
        %v2489 = vadd.f32 %v2257, %v2471
        %v2490 = vrot.slane %v851, 7
        %v2491 = vrot.slane %v852, 7
        %v2492 = vsel %vm1078, %v2490, %v2491
        %v2493 = vsel %vm1078, %v1858, %v2490
        %v2494 = vsel %vm1078, %v2491, %v1066
        %v2495 = vsel %vm1127, %v2494, 0.0
        %v2496 = vsel %vm1128, %v1089, 0.0
        %v2497 = vsel %vm1129, %v1088, 0.0
        %v2498 = vsel %vm1130, %v1087, 0.0
        %v2499 = vsel %vm1131, %v1086, 0.0
        %v2500 = vsel %vm1132, %v1085, 0.0
        %v2501 = vsel %vm1133, %v1084, 0.0
        %v2502 = vsel %vm1134, %v1083, 0.0
        %v2503 = vsel %vm1135, %v1082, 0.0
        %v2504 = vsel %vm1136, %v1081, 0.0
        %v2505 = vsel %vm1137, %v1080, 0.0
        %v2506 = vsel %vm1138, %v1079, 0.0
        %v2507 = vsel %vm1139, %v1860, 0.0
        %v2508 = vsel %vm1140, %v1859, 0.0
        %v2509 = vsel %vm1141, %v2493, 0.0
        %v2510 = vsel %vm1142, %v2492, 0.0
        %s2511 = scalar_lea.vmem %s5, 48
        %v2512 = vld [vmem:[%s2511] sm:$0xff]
        %v2514 = vsel %vm1162, %v2495, 0
        %v2517 = vsel %vm1162, %v2496, 0
        %v2520 = vsel %vm1162, %v2497, 0
        %v2523 = vsel %vm1162, %v2498, 0
        %v2526 = vsel %vm1162, %v2499, 0
        %v2529 = vsel %vm1162, %v2500, 0
        %v2532 = vsel %vm1162, %v2501, 0
        %v2535 = vsel %vm1162, %v2502, 0
        %v2538 = vsel %vm1162, %v2503, 0
        %v2541 = vsel %vm1162, %v2504, 0
        %v2544 = vsel %vm1162, %v2505, 0
        %v2547 = vsel %vm1162, %v2506, 0
        %v2550 = vsel %vm1162, %v2507, 0
        %v2553 = vsel %vm1162, %v2508, 0
        %v2556 = vsel %vm1162, %v2509, 0
        %v2559 = vsel %vm1162, %v2510, 0
        %2561 = vmatprep.subr.mxu0 0.0
        %2562 = vmatpush1.msra.mxu0 %v2512
        %2563 = vmatprep.subr.mxu0 0.0
        %2564 = vmatpush1.msra.mxu0 0.0
        %2565 = vmatprep.subr.mxu0 0.0
        %2566 = vmatpush1.msra.mxu0 0.0
        %2567 = vmatprep.subr.mxu0 0.0
        %2568 = vmatpush1.msra.mxu0 0.0
        %2569 = vmatprep.subr.mxu0 0.0
        %2570 = vmatpush1.msra.mxu0 0.0
        %2571 = vmatprep.subr.mxu0 0.0
        %2572 = vmatpush1.msra.mxu0 0.0
        %2573 = vmatprep.subr.mxu0 0.0
        %2574 = vmatpush1.msra.mxu0 0.0
        %2575 = vmatprep.subr.mxu0 0.0
        %2576 = vmatpush1.msra.mxu0 0.0
        %2577 = vmatprep.subr.mxu0 0.0
        %2578 = vmatpush1.msra.mxu0 0.0
        %2579 = vmatprep.subr.mxu0 0.0
        %2580 = vmatpush1.msra.mxu0 0.0
        %2581 = vmatprep.subr.mxu0 0.0
        %2582 = vmatpush1.msra.mxu0 0.0
        %2583 = vmatprep.subr.mxu0 0.0
        %2584 = vmatpush1.msra.mxu0 0.0
        %2585 = vmatprep.subr.mxu0 0.0
        %2586 = vmatpush1.msra.mxu0 0.0
        %2587 = vmatprep.subr.mxu0 0.0
        %2588 = vmatpush1.msra.mxu0 0.0
        %2589 = vmatprep.subr.mxu0 0.0
        %2590 = vmatpush1.msra.mxu0 0.0
        %2591 = vmatprep.subr.mxu0 0.0
        %2592 = vmatpush1.msra.mxu0 0.0
        %2593 = vmatprep.subr.mxu0 0.0
        %2594 = vmatpush1.msra.mxu0 0.0
        %2595 = vmatprep.subr.mxu0 0.0
        %2596 = vmatpush1.msra.mxu0 0.0
        %2597 = vmatprep.subr.mxu0 0.0
        %2598 = vmatpush1.msra.mxu0 0.0
        %2599 = vmatprep.subr.mxu0 0.0
        %2600 = vmatpush1.msra.mxu0 0.0
        %2601 = vmatprep.subr.mxu0 0.0
        %2602 = vmatpush1.msra.mxu0 0.0
        %2603 = vmatprep.subr.mxu0 0.0
        %2604 = vmatpush1.msra.mxu0 0.0
        %2605 = vmatprep.subr.mxu0 0.0
        %2606 = vmatpush1.msra.mxu0 0.0
        %2607 = vmatprep.subr.mxu0 0.0
        %2608 = vmatpush1.msra.mxu0 0.0
        %2609 = vmatprep.subr.mxu0 0.0
        %2610 = vmatpush1.msra.mxu0 0.0
        %2611 = vmatprep.subr.mxu0 0.0
        %2612 = vmatpush1.msra.mxu0 0.0
        %2613 = vmatprep.subr.mxu0 0.0
        %2614 = vmatpush1.msra.mxu0 0.0
        %2615 = vmatprep.subr.mxu0 0.0
        %2616 = vmatpush1.msra.mxu0 0.0
        %2617 = vmatprep.subr.mxu0 0.0
        %2618 = vmatpush1.msra.mxu0 0.0
        %2619 = vmatprep.subr.mxu0 0.0
        %2620 = vmatpush1.msra.mxu0 0.0
        %2621 = vmatprep.subr.mxu0 0.0
        %2622 = vmatpush1.msra.mxu0 0.0
        %2623 = vmatprep.subr.mxu0 0.0
        %2624 = vmatpush1.msra.mxu0 0.0
        %2625 = vmatprep.mubr.f32.mxu0 0.0
        %2626 = vmatmul.mubr.f32.gmra.mrb[0].mxu0 %v2514
        %v2627 = vpop.f32.mrb[0].mxu0
        %v2628 = vadd.f32 0.0, %v2627
        %v2629 = vpop.f32.mrb[0].mxu0
        %2630 = vmatprep.mubr.f32.mxu0 0.0
        %2631 = vmatmul.mubr.f32.gmra.mrb[0].mxu0 %v2517
        %v2632 = vpop.f32.mrb[0].mxu0
        %v2633 = vadd.f32 0.0, %v2632
        %v2634 = vpop.f32.mrb[0].mxu0
        %2635 = vmatprep.mubr.f32.mxu0 0.0
        %2636 = vmatmul.mubr.f32.gmra.mrb[0].mxu0 %v2520
        %v2637 = vpop.f32.mrb[0].mxu0
        %v2638 = vadd.f32 0.0, %v2637
        %v2639 = vpop.f32.mrb[0].mxu0
        %2640 = vmatprep.mubr.f32.mxu0 0.0
        %2641 = vmatmul.mubr.f32.gmra.mrb[0].mxu0 %v2523
        %v2642 = vpop.f32.mrb[0].mxu0
        %v2643 = vadd.f32 0.0, %v2642
        %v2644 = vpop.f32.mrb[0].mxu0
        %2645 = vmatprep.mubr.f32.mxu0 0.0
        %2646 = vmatmul.mubr.f32.gmra.mrb[0].mxu0 %v2526
        %v2647 = vpop.f32.mrb[0].mxu0
        %v2648 = vadd.f32 0.0, %v2647
        %v2649 = vpop.f32.mrb[0].mxu0
        %2650 = vmatprep.mubr.f32.mxu0 0.0
        %2651 = vmatmul.mubr.f32.gmra.mrb[0].mxu0 %v2529
        %v2652 = vpop.f32.mrb[0].mxu0
        %v2653 = vadd.f32 0.0, %v2652
        %v2654 = vpop.f32.mrb[0].mxu0
        %2655 = vmatprep.mubr.f32.mxu0 0.0
        %2656 = vmatmul.mubr.f32.gmra.mrb[0].mxu0 %v2532
        %v2657 = vpop.f32.mrb[0].mxu0
        %v2658 = vadd.f32 0.0, %v2657
        %v2659 = vpop.f32.mrb[0].mxu0
        %2660 = vmatprep.mubr.f32.mxu0 0.0
        %2661 = vmatmul.mubr.f32.gmra.mrb[0].mxu0 %v2535
        %v2662 = vpop.f32.mrb[0].mxu0
        %v2663 = vadd.f32 0.0, %v2662
        %v2664 = vpop.f32.mrb[0].mxu0
        %2665 = vmatprep.mubr.f32.mxu0 0.0
        %2666 = vmatmul.mubr.f32.gmra.mrb[0].mxu0 %v2538
        %v2667 = vpop.f32.mrb[0].mxu0
        %v2668 = vadd.f32 0.0, %v2667
        %v2669 = vpop.f32.mrb[0].mxu0
        %2670 = vmatprep.mubr.f32.mxu0 0.0
        %2671 = vmatmul.mubr.f32.gmra.mrb[0].mxu0 %v2541
        %v2672 = vpop.f32.mrb[0].mxu0
        %v2673 = vadd.f32 0.0, %v2672
        %v2674 = vpop.f32.mrb[0].mxu0
        %2675 = vmatprep.mubr.f32.mxu0 0.0
        %2676 = vmatmul.mubr.f32.gmra.mrb[0].mxu0 %v2544
        %v2677 = vpop.f32.mrb[0].mxu0
        %v2678 = vadd.f32 0.0, %v2677
        %v2679 = vpop.f32.mrb[0].mxu0
        %2680 = vmatprep.mubr.f32.mxu0 0.0
        %2681 = vmatmul.mubr.f32.gmra.mrb[0].mxu0 %v2547
        %v2682 = vpop.f32.mrb[0].mxu0
        %v2683 = vadd.f32 0.0, %v2682
        %v2684 = vpop.f32.mrb[0].mxu0
        %2685 = vmatprep.mubr.f32.mxu0 0.0
        %2686 = vmatmul.mubr.f32.gmra.mrb[0].mxu0 %v2550
        %v2687 = vpop.f32.mrb[0].mxu0
        %v2688 = vadd.f32 0.0, %v2687
        %v2689 = vpop.f32.mrb[0].mxu0
        %2690 = vmatprep.mubr.f32.mxu0 0.0
        %2691 = vmatmul.mubr.f32.gmra.mrb[0].mxu0 %v2553
        %v2692 = vpop.f32.mrb[0].mxu0
        %v2693 = vadd.f32 0.0, %v2692
        %v2694 = vpop.f32.mrb[0].mxu0
        %2695 = vmatprep.mubr.f32.mxu0 0.0
        %2696 = vmatmul.mubr.f32.gmra.mrb[0].mxu0 %v2556
        %v2697 = vpop.f32.mrb[0].mxu0
        %v2698 = vadd.f32 0.0, %v2697
        %v2699 = vpop.f32.mrb[0].mxu0
        %2700 = vmatprep.mubr.f32.mxu0 0.0
        %2701 = vmatmul.mubr.f32.gmra.mrb[0].mxu0 %v2559
        %v2702 = vpop.f32.mrb[0].mxu0
        %v2703 = vadd.f32 0.0, %v2702
        %v2704 = vpop.f32.mrb[0].mxu0
        %2705 = vdwg.mxu0
        %v2706 = vadd.f32 %v2474, %v2628
        %v2707 = vadd.f32 %v2475, %v2633
        %v2708 = vadd.f32 %v2476, %v2638
        %v2709 = vadd.f32 %v2477, %v2643
        %v2710 = vadd.f32 %v2478, %v2648
        %v2711 = vadd.f32 %v2479, %v2653
        %v2712 = vadd.f32 %v2480, %v2658
        %v2713 = vadd.f32 %v2481, %v2663
        %v2714 = vadd.f32 %v2482, %v2668
        %v2715 = vadd.f32 %v2483, %v2673
        %v2716 = vadd.f32 %v2484, %v2678
        %v2717 = vadd.f32 %v2485, %v2683
        %v2718 = vadd.f32 %v2486, %v2688
        %v2719 = vadd.f32 %v2487, %v2693
        %v2720 = vadd.f32 %v2488, %v2698
        %v2721 = vadd.f32 %v2489, %v2703
        %s2722 = scalar_lea.vmem %s5, 56
        %v2723 = vld [vmem:[%s2722] sm:$0xff]
        %v2725 = vsel %vm1162, %v851, 0
        %v2728 = vsel %vm1162, %v852, 0
        %2730 = vmatprep.subr.mxu0 0.0
        %2731 = vmatpush1.msra.mxu0 %v2723
        %2732 = vmatprep.subr.mxu0 0.0
        %2733 = vmatpush1.msra.mxu0 0.0
        %2734 = vmatprep.subr.mxu0 0.0
        %2735 = vmatpush1.msra.mxu0 0.0
        %2736 = vmatprep.subr.mxu0 0.0
        %2737 = vmatpush1.msra.mxu0 0.0
        %2738 = vmatprep.subr.mxu0 0.0
        %2739 = vmatpush1.msra.mxu0 0.0
        %2740 = vmatprep.subr.mxu0 0.0
        %2741 = vmatpush1.msra.mxu0 0.0
        %2742 = vmatprep.subr.mxu0 0.0
        %2743 = vmatpush1.msra.mxu0 0.0
        %2744 = vmatprep.subr.mxu0 0.0
        %2745 = vmatpush1.msra.mxu0 0.0
        %2746 = vmatprep.subr.mxu0 0.0
        %2747 = vmatpush1.msra.mxu0 0.0
        %2748 = vmatprep.subr.mxu0 0.0
        %2749 = vmatpush1.msra.mxu0 0.0
        %2750 = vmatprep.subr.mxu0 0.0
        %2751 = vmatpush1.msra.mxu0 0.0
        %2752 = vmatprep.subr.mxu0 0.0
        %2753 = vmatpush1.msra.mxu0 0.0
        %2754 = vmatprep.subr.mxu0 0.0
        %2755 = vmatpush1.msra.mxu0 0.0
        %2756 = vmatprep.subr.mxu0 0.0
        %2757 = vmatpush1.msra.mxu0 0.0
        %2758 = vmatprep.subr.mxu0 0.0
        %2759 = vmatpush1.msra.mxu0 0.0
        %2760 = vmatprep.subr.mxu0 0.0
        %2761 = vmatpush1.msra.mxu0 0.0
        %2762 = vmatprep.subr.mxu0 0.0
        %2763 = vmatpush1.msra.mxu0 0.0
        %2764 = vmatprep.subr.mxu0 0.0
        %2765 = vmatpush1.msra.mxu0 0.0
        %2766 = vmatprep.subr.mxu0 0.0
        %2767 = vmatpush1.msra.mxu0 0.0
        %2768 = vmatprep.subr.mxu0 0.0
        %2769 = vmatpush1.msra.mxu0 0.0
        %2770 = vmatprep.subr.mxu0 0.0
        %2771 = vmatpush1.msra.mxu0 0.0
        %2772 = vmatprep.subr.mxu0 0.0
        %2773 = vmatpush1.msra.mxu0 0.0
        %2774 = vmatprep.subr.mxu0 0.0
        %2775 = vmatpush1.msra.mxu0 0.0
        %2776 = vmatprep.subr.mxu0 0.0
        %2777 = vmatpush1.msra.mxu0 0.0
        %2778 = vmatprep.subr.mxu0 0.0
        %2779 = vmatpush1.msra.mxu0 0.0
        %2780 = vmatprep.subr.mxu0 0.0
        %2781 = vmatpush1.msra.mxu0 0.0
        %2782 = vmatprep.subr.mxu0 0.0
        %2783 = vmatpush1.msra.mxu0 0.0
        %2784 = vmatprep.subr.mxu0 0.0
        %2785 = vmatpush1.msra.mxu0 0.0
        %2786 = vmatprep.subr.mxu0 0.0
        %2787 = vmatpush1.msra.mxu0 0.0
        %2788 = vmatprep.subr.mxu0 0.0
        %2789 = vmatpush1.msra.mxu0 0.0
        %2790 = vmatprep.subr.mxu0 0.0
        %2791 = vmatpush1.msra.mxu0 0.0
        %2792 = vmatprep.subr.mxu0 0.0
        %2793 = vmatpush1.msra.mxu0 0.0
        %2794 = vmatprep.mubr.f32.mxu0 0.0
        %2795 = vmatmul.mubr.f32.gmra.mrb[0].mxu0 %v1176
        %v2796 = vpop.f32.mrb[0].mxu0
        %v2797 = vadd.f32 0.0, %v2796
        %v2798 = vpop.f32.mrb[0].mxu0
        %2799 = vmatprep.mubr.f32.mxu0 0.0
        %2800 = vmatmul.mubr.f32.gmra.mrb[0].mxu0 %v1179
        %v2801 = vpop.f32.mrb[0].mxu0
        %v2802 = vadd.f32 0.0, %v2801
        %v2803 = vpop.f32.mrb[0].mxu0
        %2804 = vmatprep.mubr.f32.mxu0 0.0
        %2805 = vmatmul.mubr.f32.gmra.mrb[0].mxu0 %v1182
        %v2806 = vpop.f32.mrb[0].mxu0
        %v2807 = vadd.f32 0.0, %v2806
        %v2808 = vpop.f32.mrb[0].mxu0
        %2809 = vmatprep.mubr.f32.mxu0 0.0
        %2810 = vmatmul.mubr.f32.gmra.mrb[0].mxu0 %v1185
        %v2811 = vpop.f32.mrb[0].mxu0
        %v2812 = vadd.f32 0.0, %v2811
        %v2813 = vpop.f32.mrb[0].mxu0
        %2814 = vmatprep.mubr.f32.mxu0 0.0
        %2815 = vmatmul.mubr.f32.gmra.mrb[0].mxu0 %v1188
        %v2816 = vpop.f32.mrb[0].mxu0
        %v2817 = vadd.f32 0.0, %v2816
        %v2818 = vpop.f32.mrb[0].mxu0
        %2819 = vmatprep.mubr.f32.mxu0 0.0
        %2820 = vmatmul.mubr.f32.gmra.mrb[0].mxu0 %v1191
        %v2821 = vpop.f32.mrb[0].mxu0
        %v2822 = vadd.f32 0.0, %v2821
        %v2823 = vpop.f32.mrb[0].mxu0
        %2824 = vmatprep.mubr.f32.mxu0 0.0
        %2825 = vmatmul.mubr.f32.gmra.mrb[0].mxu0 %v1194
        %v2826 = vpop.f32.mrb[0].mxu0
        %v2827 = vadd.f32 0.0, %v2826
        %v2828 = vpop.f32.mrb[0].mxu0
        %2829 = vmatprep.mubr.f32.mxu0 0.0
        %2830 = vmatmul.mubr.f32.gmra.mrb[0].mxu0 %v1197
        %v2831 = vpop.f32.mrb[0].mxu0
        %v2832 = vadd.f32 0.0, %v2831
        %v2833 = vpop.f32.mrb[0].mxu0
        %2834 = vmatprep.mubr.f32.mxu0 0.0
        %2835 = vmatmul.mubr.f32.gmra.mrb[0].mxu0 %v1200
        %v2836 = vpop.f32.mrb[0].mxu0
        %v2837 = vadd.f32 0.0, %v2836
        %v2838 = vpop.f32.mrb[0].mxu0
        %2839 = vmatprep.mubr.f32.mxu0 0.0
        %2840 = vmatmul.mubr.f32.gmra.mrb[0].mxu0 %v1203
        %v2841 = vpop.f32.mrb[0].mxu0
        %v2842 = vadd.f32 0.0, %v2841
        %v2843 = vpop.f32.mrb[0].mxu0
        %2844 = vmatprep.mubr.f32.mxu0 0.0
        %2845 = vmatmul.mubr.f32.gmra.mrb[0].mxu0 %v1206
        %v2846 = vpop.f32.mrb[0].mxu0
        %v2847 = vadd.f32 0.0, %v2846
        %v2848 = vpop.f32.mrb[0].mxu0
        %2849 = vmatprep.mubr.f32.mxu0 0.0
        %2850 = vmatmul.mubr.f32.gmra.mrb[0].mxu0 %v1209
        %v2851 = vpop.f32.mrb[0].mxu0
        %v2852 = vadd.f32 0.0, %v2851
        %v2853 = vpop.f32.mrb[0].mxu0
        %2854 = vmatprep.mubr.f32.mxu0 0.0
        %2855 = vmatmul.mubr.f32.gmra.mrb[0].mxu0 %v2092
        %v2856 = vpop.f32.mrb[0].mxu0
        %v2857 = vadd.f32 0.0, %v2856
        %v2858 = vpop.f32.mrb[0].mxu0
        %2859 = vmatprep.mubr.f32.mxu0 0.0
        %2860 = vmatmul.mubr.f32.gmra.mrb[0].mxu0 %v2095
        %v2861 = vpop.f32.mrb[0].mxu0
        %v2862 = vadd.f32 0.0, %v2861
        %v2863 = vpop.f32.mrb[0].mxu0
        %2864 = vmatprep.mubr.f32.mxu0 0.0
        %2865 = vmatmul.mubr.f32.gmra.mrb[0].mxu0 %v2725
        %v2866 = vpop.f32.mrb[0].mxu0
        %v2867 = vadd.f32 0.0, %v2866
        %v2868 = vpop.f32.mrb[0].mxu0
        %2869 = vmatprep.mubr.f32.mxu0 0.0
        %2870 = vmatmul.mubr.f32.gmra.mrb[0].mxu0 %v2728
        %v2871 = vpop.f32.mrb[0].mxu0
        %v2872 = vadd.f32 0.0, %v2871
        %v2873 = vpop.f32.mrb[0].mxu0
        %2874 = vdwg.mxu0
        %v2875 = vadd.f32 %v2706, %v2797
        %v2876 = vadd.f32 %v2707, %v2802
        %v2877 = vadd.f32 %v2708, %v2807
        %v2878 = vadd.f32 %v2709, %v2812
        %v2879 = vadd.f32 %v2710, %v2817
        %v2880 = vadd.f32 %v2711, %v2822
        %v2881 = vadd.f32 %v2712, %v2827
        %v2882 = vadd.f32 %v2713, %v2832
        %v2883 = vadd.f32 %v2714, %v2837
        %v2884 = vadd.f32 %v2715, %v2842
        %v2885 = vadd.f32 %v2716, %v2847
        %v2886 = vadd.f32 %v2717, %v2852
        %v2887 = vadd.f32 %v2718, %v2857
        %v2888 = vadd.f32 %v2719, %v2862
        %v2889 = vadd.f32 %v2720, %v2867
        %v2890 = vadd.f32 %v2721, %v2872
        %v2891 = vrot.slane %v851, 1
        %v2892 = vrot.slane %v852, 1
        %v2893 = vsel %vm1565, %v2891, %v2892
        %v2894 = vsel %vm1565, %v2259, %v2891
        %v2895 = vsel %vm1565, %v2892, %v1553
        %v2896 = vsel %vm1614, %v1576, 0.0
        %v2897 = vsel %vm1615, %v1575, 0.0
        %v2898 = vsel %vm1616, %v1574, 0.0
        %v2899 = vsel %vm1617, %v1573, 0.0
        %v2900 = vsel %vm1618, %v1572, 0.0
        %v2901 = vsel %vm1619, %v1571, 0.0
        %v2902 = vsel %vm1620, %v1570, 0.0
        %v2903 = vsel %vm1621, %v1569, 0.0
        %v2904 = vsel %vm1622, %v1568, 0.0
        %v2905 = vsel %vm1623, %v1567, 0.0
        %v2906 = vsel %vm1624, %v1566, 0.0
        %v2907 = vsel %vm1625, %v2261, 0.0
        %v2908 = vsel %vm1626, %v2260, 0.0
        %v2909 = vsel %vm1627, %v2894, 0.0
        %v2910 = vsel %vm1628, %v2893, 0.0
        %v2911 = vsel %vm1629, %v2895, 0.0
        %s2912 = scalar_lea.vmem %s5, 64
        %v2913 = vld [vmem:[%s2912] sm:$0xff]
        %v2915 = vsel %vm1162, %v2896, 0
        %v2918 = vsel %vm1162, %v2897, 0
        %v2921 = vsel %vm1162, %v2898, 0
        %v2924 = vsel %vm1162, %v2899, 0
        %v2927 = vsel %vm1162, %v2900, 0
        %v2930 = vsel %vm1162, %v2901, 0
        %v2933 = vsel %vm1162, %v2902, 0
        %v2936 = vsel %vm1162, %v2903, 0
        %v2939 = vsel %vm1162, %v2904, 0
        %v2942 = vsel %vm1162, %v2905, 0
        %v2945 = vsel %vm1162, %v2906, 0
        %v2948 = vsel %vm1162, %v2907, 0
        %v2951 = vsel %vm1162, %v2908, 0
        %v2954 = vsel %vm1162, %v2909, 0
        %v2957 = vsel %vm1162, %v2910, 0
        %v2960 = vsel %vm1162, %v2911, 0
        %2962 = vmatprep.subr.mxu0 0.0
        %2963 = vmatpush1.msra.mxu0 %v2913
        %2964 = vmatprep.subr.mxu0 0.0
        %2965 = vmatpush1.msra.mxu0 0.0
        %2966 = vmatprep.subr.mxu0 0.0
        %2967 = vmatpush1.msra.mxu0 0.0
        %2968 = vmatprep.subr.mxu0 0.0
        %2969 = vmatpush1.msra.mxu0 0.0
        %2970 = vmatprep.subr.mxu0 0.0
        %2971 = vmatpush1.msra.mxu0 0.0
        %2972 = vmatprep.subr.mxu0 0.0
        %2973 = vmatpush1.msra.mxu0 0.0
        %2974 = vmatprep.subr.mxu0 0.0
        %2975 = vmatpush1.msra.mxu0 0.0
        %2976 = vmatprep.subr.mxu0 0.0
        %2977 = vmatpush1.msra.mxu0 0.0
        %2978 = vmatprep.subr.mxu0 0.0
        %2979 = vmatpush1.msra.mxu0 0.0
        %2980 = vmatprep.subr.mxu0 0.0
        %2981 = vmatpush1.msra.mxu0 0.0
        %2982 = vmatprep.subr.mxu0 0.0
        %2983 = vmatpush1.msra.mxu0 0.0
        %2984 = vmatprep.subr.mxu0 0.0
        %2985 = vmatpush1.msra.mxu0 0.0
        %2986 = vmatprep.subr.mxu0 0.0
        %2987 = vmatpush1.msra.mxu0 0.0
        %2988 = vmatprep.subr.mxu0 0.0
        %2989 = vmatpush1.msra.mxu0 0.0
        %2990 = vmatprep.subr.mxu0 0.0
        %2991 = vmatpush1.msra.mxu0 0.0
        %2992 = vmatprep.subr.mxu0 0.0
        %2993 = vmatpush1.msra.mxu0 0.0
        %2994 = vmatprep.subr.mxu0 0.0
        %2995 = vmatpush1.msra.mxu0 0.0
        %2996 = vmatprep.subr.mxu0 0.0
        %2997 = vmatpush1.msra.mxu0 0.0
        %2998 = vmatprep.subr.mxu0 0.0
        %2999 = vmatpush1.msra.mxu0 0.0
        %3000 = vmatprep.subr.mxu0 0.0
        %3001 = vmatpush1.msra.mxu0 0.0
        %3002 = vmatprep.subr.mxu0 0.0
        %3003 = vmatpush1.msra.mxu0 0.0
        %3004 = vmatprep.subr.mxu0 0.0
        %3005 = vmatpush1.msra.mxu0 0.0
        %3006 = vmatprep.subr.mxu0 0.0
        %3007 = vmatpush1.msra.mxu0 0.0
        %3008 = vmatprep.subr.mxu0 0.0
        %3009 = vmatpush1.msra.mxu0 0.0
        %3010 = vmatprep.subr.mxu0 0.0
        %3011 = vmatpush1.msra.mxu0 0.0
        %3012 = vmatprep.subr.mxu0 0.0
        %3013 = vmatpush1.msra.mxu0 0.0
        %3014 = vmatprep.subr.mxu0 0.0
        %3015 = vmatpush1.msra.mxu0 0.0
        %3016 = vmatprep.subr.mxu0 0.0
        %3017 = vmatpush1.msra.mxu0 0.0
        %3018 = vmatprep.subr.mxu0 0.0
        %3019 = vmatpush1.msra.mxu0 0.0
        %3020 = vmatprep.subr.mxu0 0.0
        %3021 = vmatpush1.msra.mxu0 0.0
        %3022 = vmatprep.subr.mxu0 0.0
        %3023 = vmatpush1.msra.mxu0 0.0
        %3024 = vmatprep.subr.mxu0 0.0
        %3025 = vmatpush1.msra.mxu0 0.0
        %3026 = vmatprep.mubr.f32.mxu0 0.0
        %3027 = vmatmul.mubr.f32.gmra.mrb[0].mxu0 %v2915
        %v3028 = vpop.f32.mrb[0].mxu0
        %v3029 = vadd.f32 0.0, %v3028
        %v3030 = vpop.f32.mrb[0].mxu0
        %3031 = vmatprep.mubr.f32.mxu0 0.0
        %3032 = vmatmul.mubr.f32.gmra.mrb[0].mxu0 %v2918
        %v3033 = vpop.f32.mrb[0].mxu0
        %v3034 = vadd.f32 0.0, %v3033
        %v3035 = vpop.f32.mrb[0].mxu0
        %3036 = vmatprep.mubr.f32.mxu0 0.0
        %3037 = vmatmul.mubr.f32.gmra.mrb[0].mxu0 %v2921
        %v3038 = vpop.f32.mrb[0].mxu0
        %v3039 = vadd.f32 0.0, %v3038
        %v3040 = vpop.f32.mrb[0].mxu0
        %3041 = vmatprep.mubr.f32.mxu0 0.0
        %3042 = vmatmul.mubr.f32.gmra.mrb[0].mxu0 %v2924
        %v3043 = vpop.f32.mrb[0].mxu0
        %v3044 = vadd.f32 0.0, %v3043
        %v3045 = vpop.f32.mrb[0].mxu0
        %3046 = vmatprep.mubr.f32.mxu0 0.0
        %3047 = vmatmul.mubr.f32.gmra.mrb[0].mxu0 %v2927
        %v3048 = vpop.f32.mrb[0].mxu0
        %v3049 = vadd.f32 0.0, %v3048
        %v3050 = vpop.f32.mrb[0].mxu0
        %3051 = vmatprep.mubr.f32.mxu0 0.0
        %3052 = vmatmul.mubr.f32.gmra.mrb[0].mxu0 %v2930
        %v3053 = vpop.f32.mrb[0].mxu0
        %v3054 = vadd.f32 0.0, %v3053
        %v3055 = vpop.f32.mrb[0].mxu0
        %3056 = vmatprep.mubr.f32.mxu0 0.0
        %3057 = vmatmul.mubr.f32.gmra.mrb[0].mxu0 %v2933
        %v3058 = vpop.f32.mrb[0].mxu0
        %v3059 = vadd.f32 0.0, %v3058
        %v3060 = vpop.f32.mrb[0].mxu0
        %3061 = vmatprep.mubr.f32.mxu0 0.0
        %3062 = vmatmul.mubr.f32.gmra.mrb[0].mxu0 %v2936
        %v3063 = vpop.f32.mrb[0].mxu0
        %v3064 = vadd.f32 0.0, %v3063
        %v3065 = vpop.f32.mrb[0].mxu0
        %3066 = vmatprep.mubr.f32.mxu0 0.0
        %3067 = vmatmul.mubr.f32.gmra.mrb[0].mxu0 %v2939
        %v3068 = vpop.f32.mrb[0].mxu0
        %v3069 = vadd.f32 0.0, %v3068
        %v3070 = vpop.f32.mrb[0].mxu0
        %3071 = vmatprep.mubr.f32.mxu0 0.0
        %3072 = vmatmul.mubr.f32.gmra.mrb[0].mxu0 %v2942
        %v3073 = vpop.f32.mrb[0].mxu0
        %v3074 = vadd.f32 0.0, %v3073
        %v3075 = vpop.f32.mrb[0].mxu0
        %3076 = vmatprep.mubr.f32.mxu0 0.0
        %3077 = vmatmul.mubr.f32.gmra.mrb[0].mxu0 %v2945
        %v3078 = vpop.f32.mrb[0].mxu0
        %v3079 = vadd.f32 0.0, %v3078
        %v3080 = vpop.f32.mrb[0].mxu0
        %3081 = vmatprep.mubr.f32.mxu0 0.0
        %3082 = vmatmul.mubr.f32.gmra.mrb[0].mxu0 %v2948
        %v3083 = vpop.f32.mrb[0].mxu0
        %v3084 = vadd.f32 0.0, %v3083
        %v3085 = vpop.f32.mrb[0].mxu0
        %3086 = vmatprep.mubr.f32.mxu0 0.0
        %3087 = vmatmul.mubr.f32.gmra.mrb[0].mxu0 %v2951
        %v3088 = vpop.f32.mrb[0].mxu0
        %v3089 = vadd.f32 0.0, %v3088
        %v3090 = vpop.f32.mrb[0].mxu0
        %3091 = vmatprep.mubr.f32.mxu0 0.0
        %3092 = vmatmul.mubr.f32.gmra.mrb[0].mxu0 %v2954
        %v3093 = vpop.f32.mrb[0].mxu0
        %v3094 = vadd.f32 0.0, %v3093
        %v3095 = vpop.f32.mrb[0].mxu0
        %3096 = vmatprep.mubr.f32.mxu0 0.0
        %3097 = vmatmul.mubr.f32.gmra.mrb[0].mxu0 %v2957
        %v3098 = vpop.f32.mrb[0].mxu0
        %v3099 = vadd.f32 0.0, %v3098
        %v3100 = vpop.f32.mrb[0].mxu0
        %3101 = vmatprep.mubr.f32.mxu0 0.0
        %3102 = vmatmul.mubr.f32.gmra.mrb[0].mxu0 %v2960
        %v3103 = vpop.f32.mrb[0].mxu0
        %v3104 = vadd.f32 0.0, %v3103
        %v3105 = vpop.f32.mrb[0].mxu0
        %3106 = vdwg.mxu0
        %v3107 = vadd.f32 %v2875, %v3029
        %v3108 = vadd.f32 %v2876, %v3034
        %v3109 = vadd.f32 %v2877, %v3039
        %v3110 = vadd.f32 %v2878, %v3044
        %v3111 = vadd.f32 %v2879, %v3049
        %v3112 = vadd.f32 %v2880, %v3054
        %v3113 = vadd.f32 %v2881, %v3059
        %v3114 = vadd.f32 %v2882, %v3064
        %v3115 = vadd.f32 %v2883, %v3069
        %v3116 = vadd.f32 %v2884, %v3074
        %v3117 = vadd.f32 %v2885, %v3079
        %v3118 = vadd.f32 %v2886, %v3084
        %v3119 = vadd.f32 %v2887, %v3089
        %v3120 = vadd.f32 %v2888, %v3094
        %v3121 = vadd.f32 %v2889, %v3099
        %v3122 = vadd.f32 %v2890, %v3104
        %v3123 = vld [vmem:[%s6] sm:$0x1]
        %v3125 = vlaneseq
        %v3126 = vshrl.u32 %v3125, 7
        %v3127 = vsub.s32 0, %v3126
        %v3128 = vrot.slane %v3123, %v3127
        %v3130 = vadd.f32 %v3107, %v3128
        %v3131 = vadd.f32 %v3108, %v3128
        %v3132 = vadd.f32 %v3109, %v3128
        %v3133 = vadd.f32 %v3110, %v3128
        %v3134 = vadd.f32 %v3111, %v3128
        %v3135 = vadd.f32 %v3112, %v3128
        %v3136 = vadd.f32 %v3113, %v3128
        %v3137 = vadd.f32 %v3114, %v3128
        %v3138 = vadd.f32 %v3115, %v3128
        %v3139 = vadd.f32 %v3116, %v3128
        %v3140 = vadd.f32 %v3117, %v3128
        %v3141 = vadd.f32 %v3118, %v3128
        %v3142 = vadd.f32 %v3119, %v3128
        %v3143 = vadd.f32 %v3120, %v3128
        %v3144 = vadd.f32 %v3121, %v3128
        %v3145 = vadd.f32 %v3122, %v3128
        %v3146 = vmax.f32 %v3130, 0.0
        %v3147 = vmax.f32 %v3131, 0.0
        %v3148 = vmax.f32 %v3132, 0.0
        %v3149 = vmax.f32 %v3133, 0.0
        %v3150 = vmax.f32 %v3134, 0.0
        %v3151 = vmax.f32 %v3135, 0.0
        %v3152 = vmax.f32 %v3136, 0.0
        %v3153 = vmax.f32 %v3137, 0.0
        %v3154 = vmax.f32 %v3138, 0.0
        %v3155 = vmax.f32 %v3139, 0.0
        %v3156 = vmax.f32 %v3140, 0.0
        %v3157 = vmax.f32 %v3141, 0.0
        %v3158 = vmax.f32 %v3142, 0.0
        %v3159 = vmax.f32 %v3143, 0.0
        %v3160 = vmax.f32 %v3144, 0.0
        %v3161 = vmax.f32 %v3145, 0.0
        %v3162 = vld [vmem:[%s7] sm:$0xff]
        %v3163 = vld [vmem:[%s8] sm:$0x1]
        %v3165 = vlaneseq
        %v3166 = vshrl.u32 %v3165, 7
        %v3167 = vsub.s32 0, %v3166
        %v3168 = vrot.slane %v3163, %v3167
        %v3171 = vsel %vm1162, %v3146, 0
        %v3174 = vsel %vm1162, %v3147, 0
        %v3177 = vsel %vm1162, %v3148, 0
        %v3180 = vsel %vm1162, %v3149, 0
        %v3183 = vsel %vm1162, %v3150, 0
        %v3186 = vsel %vm1162, %v3151, 0
        %v3189 = vsel %vm1162, %v3152, 0
        %v3192 = vsel %vm1162, %v3153, 0
        %v3195 = vsel %vm1162, %v3154, 0
        %v3198 = vsel %vm1162, %v3155, 0
        %v3201 = vsel %vm1162, %v3156, 0
        %v3204 = vsel %vm1162, %v3157, 0
        %v3207 = vsel %vm1162, %v3158, 0
        %v3210 = vsel %vm1162, %v3159, 0
        %v3213 = vsel %vm1162, %v3160, 0
        %v3216 = vsel %vm1162, %v3161, 0
        %3218 = vmatprep.subr.mxu0 0.0
        %3219 = vmatpush1.msra.mxu0 %v3162
        %3220 = vmatprep.subr.mxu0 0.0
        %3221 = vmatpush1.msra.mxu0 0.0
        %3222 = vmatprep.subr.mxu0 0.0
        %3223 = vmatpush1.msra.mxu0 0.0
        %3224 = vmatprep.subr.mxu0 0.0
        %3225 = vmatpush1.msra.mxu0 0.0
        %3226 = vmatprep.subr.mxu0 0.0
        %3227 = vmatpush1.msra.mxu0 0.0
        %3228 = vmatprep.subr.mxu0 0.0
        %3229 = vmatpush1.msra.mxu0 0.0
        %3230 = vmatprep.subr.mxu0 0.0
        %3231 = vmatpush1.msra.mxu0 0.0
        %3232 = vmatprep.subr.mxu0 0.0
        %3233 = vmatpush1.msra.mxu0 0.0
        %3234 = vmatprep.subr.mxu0 0.0
        %3235 = vmatpush1.msra.mxu0 0.0
        %3236 = vmatprep.subr.mxu0 0.0
        %3237 = vmatpush1.msra.mxu0 0.0
        %3238 = vmatprep.subr.mxu0 0.0
        %3239 = vmatpush1.msra.mxu0 0.0
        %3240 = vmatprep.subr.mxu0 0.0
        %3241 = vmatpush1.msra.mxu0 0.0
        %3242 = vmatprep.subr.mxu0 0.0
        %3243 = vmatpush1.msra.mxu0 0.0
        %3244 = vmatprep.subr.mxu0 0.0
        %3245 = vmatpush1.msra.mxu0 0.0
        %3246 = vmatprep.subr.mxu0 0.0
        %3247 = vmatpush1.msra.mxu0 0.0
        %3248 = vmatprep.subr.mxu0 0.0
        %3249 = vmatpush1.msra.mxu0 0.0
        %3250 = vmatprep.subr.mxu0 0.0
        %3251 = vmatpush1.msra.mxu0 0.0
        %3252 = vmatprep.subr.mxu0 0.0
        %3253 = vmatpush1.msra.mxu0 0.0
        %3254 = vmatprep.subr.mxu0 0.0
        %3255 = vmatpush1.msra.mxu0 0.0
        %3256 = vmatprep.subr.mxu0 0.0
        %3257 = vmatpush1.msra.mxu0 0.0
        %3258 = vmatprep.subr.mxu0 0.0
        %3259 = vmatpush1.msra.mxu0 0.0
        %3260 = vmatprep.subr.mxu0 0.0
        %3261 = vmatpush1.msra.mxu0 0.0
        %3262 = vmatprep.subr.mxu0 0.0
        %3263 = vmatpush1.msra.mxu0 0.0
        %3264 = vmatprep.subr.mxu0 0.0
        %3265 = vmatpush1.msra.mxu0 0.0
        %3266 = vmatprep.subr.mxu0 0.0
        %3267 = vmatpush1.msra.mxu0 0.0
        %3268 = vmatprep.subr.mxu0 0.0
        %3269 = vmatpush1.msra.mxu0 0.0
        %3270 = vmatprep.subr.mxu0 0.0
        %3271 = vmatpush1.msra.mxu0 0.0
        %3272 = vmatprep.subr.mxu0 0.0
        %3273 = vmatpush1.msra.mxu0 0.0
        %3274 = vmatprep.subr.mxu0 0.0
        %3275 = vmatpush1.msra.mxu0 0.0
        %3276 = vmatprep.subr.mxu0 0.0
        %3277 = vmatpush1.msra.mxu0 0.0
        %3278 = vmatprep.subr.mxu0 0.0
        %3279 = vmatpush1.msra.mxu0 0.0
        %3280 = vmatprep.subr.mxu0 0.0
        %3281 = vmatpush1.msra.mxu0 0.0
        %3282 = vmatprep.mubr.f32.mxu0 0.0
        %3283 = vmatmul.mubr.f32.gmra.mrb[0].mxu0 %v3171
        %v3284 = vpop.f32.mrb[0].mxu0
        %v3285 = vadd.f32 %v3168, %v3284
        %v3286 = vpop.f32.mrb[0].mxu0
        %3287 = vmatprep.mubr.f32.mxu0 0.0
        %3288 = vmatmul.mubr.f32.gmra.mrb[0].mxu0 %v3174
        %v3289 = vpop.f32.mrb[0].mxu0
        %v3290 = vadd.f32 %v3168, %v3289
        %v3291 = vpop.f32.mrb[0].mxu0
        %3292 = vmatprep.mubr.f32.mxu0 0.0
        %3293 = vmatmul.mubr.f32.gmra.mrb[0].mxu0 %v3177
        %v3294 = vpop.f32.mrb[0].mxu0
        %v3295 = vadd.f32 %v3168, %v3294
        %v3296 = vpop.f32.mrb[0].mxu0
        %3297 = vmatprep.mubr.f32.mxu0 0.0
        %3298 = vmatmul.mubr.f32.gmra.mrb[0].mxu0 %v3180
        %v3299 = vpop.f32.mrb[0].mxu0
        %v3300 = vadd.f32 %v3168, %v3299
        %v3301 = vpop.f32.mrb[0].mxu0
        %3302 = vmatprep.mubr.f32.mxu0 0.0
        %3303 = vmatmul.mubr.f32.gmra.mrb[0].mxu0 %v3183
        %v3304 = vpop.f32.mrb[0].mxu0
        %v3305 = vadd.f32 %v3168, %v3304
        %v3306 = vpop.f32.mrb[0].mxu0
        %3307 = vmatprep.mubr.f32.mxu0 0.0
        %3308 = vmatmul.mubr.f32.gmra.mrb[0].mxu0 %v3186
        %v3309 = vpop.f32.mrb[0].mxu0
        %v3310 = vadd.f32 %v3168, %v3309
        %v3311 = vpop.f32.mrb[0].mxu0
        %3312 = vmatprep.mubr.f32.mxu0 0.0
        %3313 = vmatmul.mubr.f32.gmra.mrb[0].mxu0 %v3189
        %v3314 = vpop.f32.mrb[0].mxu0
        %v3315 = vadd.f32 %v3168, %v3314
        %v3316 = vpop.f32.mrb[0].mxu0
        %3317 = vmatprep.mubr.f32.mxu0 0.0
        %3318 = vmatmul.mubr.f32.gmra.mrb[0].mxu0 %v3192
        %v3319 = vpop.f32.mrb[0].mxu0
        %v3320 = vadd.f32 %v3168, %v3319
        %v3321 = vpop.f32.mrb[0].mxu0
        %3322 = vmatprep.mubr.f32.mxu0 0.0
        %3323 = vmatmul.mubr.f32.gmra.mrb[0].mxu0 %v3195
        %v3324 = vpop.f32.mrb[0].mxu0
        %v3325 = vadd.f32 %v3168, %v3324
        %v3326 = vpop.f32.mrb[0].mxu0
        %3327 = vmatprep.mubr.f32.mxu0 0.0
        %3328 = vmatmul.mubr.f32.gmra.mrb[0].mxu0 %v3198
        %v3329 = vpop.f32.mrb[0].mxu0
        %v3330 = vadd.f32 %v3168, %v3329
        %v3331 = vpop.f32.mrb[0].mxu0
        %3332 = vmatprep.mubr.f32.mxu0 0.0
        %3333 = vmatmul.mubr.f32.gmra.mrb[0].mxu0 %v3201
        %v3334 = vpop.f32.mrb[0].mxu0
        %v3335 = vadd.f32 %v3168, %v3334
        %v3336 = vpop.f32.mrb[0].mxu0
        %3337 = vmatprep.mubr.f32.mxu0 0.0
        %3338 = vmatmul.mubr.f32.gmra.mrb[0].mxu0 %v3204
        %v3339 = vpop.f32.mrb[0].mxu0
        %v3340 = vadd.f32 %v3168, %v3339
        %v3341 = vpop.f32.mrb[0].mxu0
        %3342 = vmatprep.mubr.f32.mxu0 0.0
        %3343 = vmatmul.mubr.f32.gmra.mrb[0].mxu0 %v3207
        %v3344 = vpop.f32.mrb[0].mxu0
        %v3345 = vadd.f32 %v3168, %v3344
        %v3346 = vpop.f32.mrb[0].mxu0
        %3347 = vmatprep.mubr.f32.mxu0 0.0
        %3348 = vmatmul.mubr.f32.gmra.mrb[0].mxu0 %v3210
        %v3349 = vpop.f32.mrb[0].mxu0
        %v3350 = vadd.f32 %v3168, %v3349
        %v3351 = vpop.f32.mrb[0].mxu0
        %3352 = vmatprep.mubr.f32.mxu0 0.0
        %3353 = vmatmul.mubr.f32.gmra.mrb[0].mxu0 %v3213
        %v3354 = vpop.f32.mrb[0].mxu0
        %v3355 = vadd.f32 %v3168, %v3354
        %v3356 = vpop.f32.mrb[0].mxu0
        %3357 = vmatprep.mubr.f32.mxu0 0.0
        %3358 = vmatmul.mubr.f32.gmra.mrb[0].mxu0 %v3216
        %v3359 = vpop.f32.mrb[0].mxu0
        %v3360 = vadd.f32 %v3168, %v3359
        %v3361 = vpop.f32.mrb[0].mxu0
        %3362 = vdwg.mxu0
        %v3363 = vld [vmem:[%s9] sm:$0xff]
        %v3364 = vld [vmem:[%s9 + $0x8] sm:$0xff]
        %3365 = vmatprep.subr.mxu0 0.0
        %3366 = vmatpush1.msra.mxu0 %v3363
        %3367 = vmatprep.subr.mxu0 0.0
        %3368 = vmatpush1.msra.mxu0 %v3364
        %3369 = vmatprep.subr.mxu0 0.0
        %3370 = vmatpush1.msra.mxu0 0.0
        %3371 = vmatprep.subr.mxu0 0.0
        %3372 = vmatpush1.msra.mxu0 0.0
        %3373 = vmatprep.subr.mxu0 0.0
        %3374 = vmatpush1.msra.mxu0 0.0
        %3375 = vmatprep.subr.mxu0 0.0
        %3376 = vmatpush1.msra.mxu0 0.0
        %3377 = vmatprep.subr.mxu0 0.0
        %3378 = vmatpush1.msra.mxu0 0.0
        %3379 = vmatprep.subr.mxu0 0.0
        %3380 = vmatpush1.msra.mxu0 0.0
        %3381 = vmatprep.subr.mxu0 0.0
        %3382 = vmatpush1.msra.mxu0 0.0
        %3383 = vmatprep.subr.mxu0 0.0
        %3384 = vmatpush1.msra.mxu0 0.0
        %3385 = vmatprep.subr.mxu0 0.0
        %3386 = vmatpush1.msra.mxu0 0.0
        %3387 = vmatprep.subr.mxu0 0.0
        %3388 = vmatpush1.msra.mxu0 0.0
        %3389 = vmatprep.subr.mxu0 0.0
        %3390 = vmatpush1.msra.mxu0 0.0
        %3391 = vmatprep.subr.mxu0 0.0
        %3392 = vmatpush1.msra.mxu0 0.0
        %3393 = vmatprep.subr.mxu0 0.0
        %3394 = vmatpush1.msra.mxu0 0.0
        %3395 = vmatprep.subr.mxu0 0.0
        %3396 = vmatpush1.msra.mxu0 0.0
        %3397 = vmatprep.subr.mxu0 0.0
        %3398 = vmatpush1.msra.mxu0 0.0
        %3399 = vmatprep.subr.mxu0 0.0
        %3400 = vmatpush1.msra.mxu0 0.0
        %3401 = vmatprep.subr.mxu0 0.0
        %3402 = vmatpush1.msra.mxu0 0.0
        %3403 = vmatprep.subr.mxu0 0.0
        %3404 = vmatpush1.msra.mxu0 0.0
        %3405 = vmatprep.subr.mxu0 0.0
        %3406 = vmatpush1.msra.mxu0 0.0
        %3407 = vmatprep.subr.mxu0 0.0
        %3408 = vmatpush1.msra.mxu0 0.0
        %3409 = vmatprep.subr.mxu0 0.0
        %3410 = vmatpush1.msra.mxu0 0.0
        %3411 = vmatprep.subr.mxu0 0.0
        %3412 = vmatpush1.msra.mxu0 0.0
        %3413 = vmatprep.subr.mxu0 0.0
        %3414 = vmatpush1.msra.mxu0 0.0
        %3415 = vmatprep.subr.mxu0 0.0
        %3416 = vmatpush1.msra.mxu0 0.0
        %3417 = vmatprep.subr.mxu0 0.0
        %3418 = vmatpush1.msra.mxu0 0.0
        %3419 = vmatprep.subr.mxu0 0.0
        %3420 = vmatpush1.msra.mxu0 0.0
        %3421 = vmatprep.subr.mxu0 0.0
        %3422 = vmatpush1.msra.mxu0 0.0
        %3423 = vmatprep.subr.mxu0 0.0
        %3424 = vmatpush1.msra.mxu0 0.0
        %3425 = vmatprep.subr.mxu0 0.0
        %3426 = vmatpush1.msra.mxu0 0.0
        %3427 = vmatprep.subr.mxu0 0.0
        %3428 = vmatpush1.msra.mxu0 0.0
        %3429 = vmatprep.mubr.f32.mxu0 0.0
        %3430 = vmatmul.mubr.f32.gmra.mrb[0].mxu0 %v580
        %v3431 = vpop.f32.mrb[0].mxu0
        %v3432 = vadd.f32 0.0, %v3431
        %v3433 = vpop.f32.mrb[0].mxu0
        %3434 = vmatprep.mubr.f32.mxu0 0.0
        %3435 = vmatmul.mubr.f32.gmra.mrb[0].mxu0 %v583
        %v3436 = vpop.f32.mrb[0].mxu0
        %v3437 = vadd.f32 0.0, %v3436
        %v3438 = vpop.f32.mrb[0].mxu0
        %3439 = vmatprep.mubr.f32.mxu0 0.0
        %3440 = vmatmul.mubr.f32.gmra.mrb[0].mxu0 %v586
        %v3441 = vpop.f32.mrb[0].mxu0
        %v3442 = vadd.f32 0.0, %v3441
        %v3443 = vpop.f32.mrb[0].mxu0
        %3444 = vmatprep.mubr.f32.mxu0 0.0
        %3445 = vmatmul.mubr.f32.gmra.mrb[0].mxu0 %v589
        %v3446 = vpop.f32.mrb[0].mxu0
        %v3447 = vadd.f32 0.0, %v3446
        %v3448 = vpop.f32.mrb[0].mxu0
        %3449 = vmatprep.mubr.f32.mxu0 0.0
        %3450 = vmatmul.mubr.f32.gmra.mrb[0].mxu0 %v592
        %v3451 = vpop.f32.mrb[0].mxu0
        %v3452 = vadd.f32 0.0, %v3451
        %v3453 = vpop.f32.mrb[0].mxu0
        %3454 = vmatprep.mubr.f32.mxu0 0.0
        %3455 = vmatmul.mubr.f32.gmra.mrb[0].mxu0 %v595
        %v3456 = vpop.f32.mrb[0].mxu0
        %v3457 = vadd.f32 0.0, %v3456
        %v3458 = vpop.f32.mrb[0].mxu0
        %3459 = vmatprep.mubr.f32.mxu0 0.0
        %3460 = vmatmul.mubr.f32.gmra.mrb[0].mxu0 %v598
        %v3461 = vpop.f32.mrb[0].mxu0
        %v3462 = vadd.f32 0.0, %v3461
        %v3463 = vpop.f32.mrb[0].mxu0
        %3464 = vmatprep.mubr.f32.mxu0 0.0
        %3465 = vmatmul.mubr.f32.gmra.mrb[0].mxu0 %v601
        %v3466 = vpop.f32.mrb[0].mxu0
        %v3467 = vadd.f32 0.0, %v3466
        %v3468 = vpop.f32.mrb[0].mxu0
        %3469 = vmatprep.mubr.f32.mxu0 0.0
        %3470 = vmatmul.mubr.f32.gmra.mrb[0].mxu0 %v604
        %v3471 = vpop.f32.mrb[0].mxu0
        %v3472 = vadd.f32 0.0, %v3471
        %v3473 = vpop.f32.mrb[0].mxu0
        %3474 = vmatprep.mubr.f32.mxu0 0.0
        %3475 = vmatmul.mubr.f32.gmra.mrb[0].mxu0 %v607
        %v3476 = vpop.f32.mrb[0].mxu0
        %v3477 = vadd.f32 0.0, %v3476
        %v3478 = vpop.f32.mrb[0].mxu0
        %3479 = vmatprep.mubr.f32.mxu0 0.0
        %3480 = vmatmul.mubr.f32.gmra.mrb[0].mxu0 %v610
        %v3481 = vpop.f32.mrb[0].mxu0
        %v3482 = vadd.f32 0.0, %v3481
        %v3483 = vpop.f32.mrb[0].mxu0
        %3484 = vmatprep.mubr.f32.mxu0 0.0
        %3485 = vmatmul.mubr.f32.gmra.mrb[0].mxu0 %v613
        %v3486 = vpop.f32.mrb[0].mxu0
        %v3487 = vadd.f32 0.0, %v3486
        %v3488 = vpop.f32.mrb[0].mxu0
        %3489 = vmatprep.mubr.f32.mxu0 0.0
        %3490 = vmatmul.mubr.f32.gmra.mrb[0].mxu0 %v616
        %v3491 = vpop.f32.mrb[0].mxu0
        %v3492 = vadd.f32 0.0, %v3491
        %v3493 = vpop.f32.mrb[0].mxu0
        %3494 = vmatprep.mubr.f32.mxu0 0.0
        %3495 = vmatmul.mubr.f32.gmra.mrb[0].mxu0 %v619
        %v3496 = vpop.f32.mrb[0].mxu0
        %v3497 = vadd.f32 0.0, %v3496
        %v3498 = vpop.f32.mrb[0].mxu0
        %3499 = vmatprep.mubr.f32.mxu0 0.0
        %3500 = vmatmul.mubr.f32.gmra.mrb[0].mxu0 %v622
        %v3501 = vpop.f32.mrb[0].mxu0
        %v3502 = vadd.f32 0.0, %v3501
        %v3503 = vpop.f32.mrb[0].mxu0
        %3504 = vmatprep.mubr.f32.mxu0 0.0
        %3505 = vmatmul.mubr.f32.gmra.mrb[0].mxu0 %v625
        %v3506 = vpop.f32.mrb[0].mxu0
        %v3507 = vadd.f32 0.0, %v3506
        %v3508 = vpop.f32.mrb[0].mxu0
        %3509 = vdwg.mxu0
        %v3510 = vadd.f32 %v3285, %v3432
        %v3511 = vadd.f32 %v3290, %v3437
        %v3512 = vadd.f32 %v3295, %v3442
        %v3513 = vadd.f32 %v3300, %v3447
        %v3514 = vadd.f32 %v3305, %v3452
        %v3515 = vadd.f32 %v3310, %v3457
        %v3516 = vadd.f32 %v3315, %v3462
        %v3517 = vadd.f32 %v3320, %v3467
        %v3518 = vadd.f32 %v3325, %v3472
        %v3519 = vadd.f32 %v3330, %v3477
        %v3520 = vadd.f32 %v3335, %v3482
        %v3521 = vadd.f32 %v3340, %v3487
        %v3522 = vadd.f32 %v3345, %v3492
        %v3523 = vadd.f32 %v3350, %v3497
        %v3524 = vadd.f32 %v3355, %v3502
        %v3525 = vadd.f32 %v3360, %v3507
        %v3526 = vld [vmem:[%s10] sm:$0x1]
        %v3528 = vlaneseq
        %v3529 = vshrl.u32 %v3528, 7
        %v3530 = vsub.s32 0, %v3529
        %v3531 = vrot.slane %v3526, %v3530
        %v3533 = vadd.f32 %v3510, %v3531
        %v3534 = vadd.f32 %v3511, %v3531
        %v3535 = vadd.f32 %v3512, %v3531
        %v3536 = vadd.f32 %v3513, %v3531
        %v3537 = vadd.f32 %v3514, %v3531
        %v3538 = vadd.f32 %v3515, %v3531
        %v3539 = vadd.f32 %v3516, %v3531
        %v3540 = vadd.f32 %v3517, %v3531
        %v3541 = vadd.f32 %v3518, %v3531
        %v3542 = vadd.f32 %v3519, %v3531
        %v3543 = vadd.f32 %v3520, %v3531
        %v3544 = vadd.f32 %v3521, %v3531
        %v3545 = vadd.f32 %v3522, %v3531
        %v3546 = vadd.f32 %v3523, %v3531
        %v3547 = vadd.f32 %v3524, %v3531
        %v3548 = vadd.f32 %v3525, %v3531
        %v3549 = vmax.f32 %v3533, 0.0
        %v3550 = vmax.f32 %v3534, 0.0
        %v3551 = vmax.f32 %v3535, 0.0
        %v3552 = vmax.f32 %v3536, 0.0
        %v3553 = vmax.f32 %v3537, 0.0
        %v3554 = vmax.f32 %v3538, 0.0
        %v3555 = vmax.f32 %v3539, 0.0
        %v3556 = vmax.f32 %v3540, 0.0
        %v3557 = vmax.f32 %v3541, 0.0
        %v3558 = vmax.f32 %v3542, 0.0
        %v3559 = vmax.f32 %v3543, 0.0
        %v3560 = vmax.f32 %v3544, 0.0
        %v3561 = vmax.f32 %v3545, 0.0
        %v3562 = vmax.f32 %v3546, 0.0
        %v3563 = vmax.f32 %v3547, 0.0
        %v3564 = vmax.f32 %v3548, 0.0
        %vm3565 = vcmask 261120
        %3566 = vst.msk [vmem:[%s532] sm:$0xff] %vm3565, %v3549
        %3567 = vst.msk [vmem:[%s532 + $0x8] sm:$0xff] %vm3565, %v3550
        %3568 = vst.msk [vmem:[%s532 + $0x10] sm:$0xff] %vm3565, %v3551
        %3569 = vst.msk [vmem:[%s532 + $0x18] sm:$0xff] %vm3565, %v3552
        %3570 = vst.msk [vmem:[%s532 + $0x20] sm:$0xff] %vm3565, %v3553
        %3571 = vst.msk [vmem:[%s532 + $0x28] sm:$0xff] %vm3565, %v3554
        %3572 = vst.msk [vmem:[%s532 + $0x30] sm:$0xff] %vm3565, %v3555
        %3573 = vst.msk [vmem:[%s532 + $0x38] sm:$0xff] %vm3565, %v3556
        %3574 = vst.msk [vmem:[%s532 + $0x40] sm:$0xff] %vm3565, %v3557
        %3575 = vst.msk [vmem:[%s532 + $0x48] sm:$0xff] %vm3565, %v3558
        %3576 = vst.msk [vmem:[%s532 + $0x50] sm:$0xff] %vm3565, %v3559
        %3577 = vst.msk [vmem:[%s532 + $0x58] sm:$0xff] %vm3565, %v3560
        %3578 = vst.msk [vmem:[%s532 + $0x60] sm:$0xff] %vm3565, %v3561
        %3579 = vst.msk [vmem:[%s532 + $0x68] sm:$0xff] %vm3565, %v3562
        %3580 = vst.msk [vmem:[%s532 + $0x70] sm:$0xff] %vm3565, %v3563
        %3581 = vst.msk [vmem:[%s532 + $0x78] sm:$0xff] %vm3565, %v3564
        %s3582 = sand.u32 %s321, 1
        %s3583 = scalar_lea.sflag [#allocation4], %s3582
        %s3584 = sand.u32 %s321, 1
        %s3585 = smul.addr %s3584, 128
        %s3586 = scalar_lea.vmem [#allocation8], %s3585
        // Predicated region
        $region77: #{tpu_custom_call.1} parent=63 // pred_check
          %p3587 = pneg %p331
        $region78: #{tpu_custom_call.1} parent=63 // pred_check_branch
          %3589 = sbr.rel (%p3587) target = $region80
        $region79: #{tpu_custom_call.1} parent=63 // pred_region
          %s3590 = smul.u32 8, %s36
          %s3592 = ssub.s32 2048, 2048
          %3593 = vsyncadd %s3583, %s3592
          %s3594 = smul.addr %s3590, 2
          %s3595 = smul.addr %s35, 32
          %s3596 = sadd.s32 %s3594, %s3595
          %s3597 = smul.addr %s3596, 128
          %s3598 = scalar_lea.hbm %s11, %s3597
          %s3599 = sshll.u32 %s3586, 4
          %s3600 = int_to_ptr.vmem [resolvable:$true] %s3599
          %3605 = dma.vmem_to_hbm [thread:$0]  %s3600, 2048, %s3598, %s3583, 128, 128, 8
        $region80: #{tpu_custom_call.1} parent=63 // pred_fallthru
          _
      $region64: #{tpu_custom_call.1} parent=5 // pred_fallthru
        _
      %p3606 = scmp.le.s32.totalorder 2, %s26
      // Predicated region
      $region81: #{tpu_custom_call.1} parent=5 // pred_check
        %p3607 = pneg %p3606
      $region82: #{tpu_custom_call.1} parent=5 // pred_check_branch
        %3609 = sbr.rel (%p3607) target = $region84
      $region83: #{tpu_custom_call.1} parent=5 // pred_region
        %s3610 = ssub.s32 %s26, 2
        // Predicated region
        $region85: #{tpu_custom_call.1} parent=83 // pred_check
          %p3611 = pneg %p337
        $region86: #{tpu_custom_call.1} parent=83 // pred_check_branch
          %3613 = sbr.rel (%p3611) target = $region88
        $region87: #{tpu_custom_call.1} parent=83 // pred_region
          %s3614 = sand.u32 %s322, 1
          %s3615 = scalar_lea.sflag [#allocation4], %s3614
          %s3616 = sand.u32 %s322, 1
          %s3617 = smul.addr %s3616, 128
          %s3618 = scalar_lea.vmem [#allocation8], %s3617
          %3619 = dma.done %s3615, 2048
        $region88: #{tpu_custom_call.1} parent=83 // pred_fallthru
          _
      $region84: #{tpu_custom_call.1} parent=5 // pred_fallthru
        _
    $region6: #{tpu_custom_call.1} parent=1 // loop_footer
      %s30 = sadd.s32 1, %s26
    $region7: #{tpu_custom_call.1} parent=1 // loop_footer_branch
      %25 = sbr.rel target = $region3
    $region8: #{tpu_custom_call.1} parent=1 // loop_exit
      _
    %3620 = vsyncpa [#allocation3], 1
    %s3621 = scalar_lea.sflag [#allocation3], 1
    %3622 = vsyncpa %s3621, 1
    %3623 = vsyncpa [#allocation6], 1
    %s3624 = scalar_lea.sflag [#allocation6], 1
    %3625 = vsyncpa %s3624, 1
    %3626 = vsyncpa [#allocation4], 1
    %s3627 = scalar_lea.sflag [#allocation4], 1
    %3628 = vsyncpa %s3627, 1

</llo_original>
